<compile_context>
chip_gen: v7x
topology: tpu7x:2x2x1
jax: 0.10.0
libtpu: 0.0.40
codegen_flags: <defaults>
</compile_context>

<pallas_src>
import functools

import jax
import jax.numpy as jnp
from jax import lax
from jax.experimental import pallas as pl
from jax.experimental.pallas import tpu as pltpu


# ------------------------------------------------------------------ tiling helpers

def _round_up(x, m):
    return (x + m - 1) // m * m


def _pad_to(x, shape):
    pads = [(0, s - d) for d, s in zip(x.shape, shape)]
    if all(p == (0, 0) for p in pads):
        return x
    return jnp.pad(x, pads)


@functools.lru_cache(maxsize=None)
def _vmem_ceiling():
    """Per-generation scoped-VMEM ceiling (~75% of physical VMEM)."""
    try:
        cap = int(pltpu.get_tpu_info().vmem_capacity_bytes)
    except Exception:
        cap = 64 << 20                      # conservative (v7x-sized) fallback
    return max(32 << 20, min(cap * 3 // 4, 96 << 20))


def _vmem_limit(in_blocks, out_blocks, scratch_blocks=()):
    """vmem_limit_bytes derived from the actual (double-buffered) block footprints."""
    def nb(shape, itemsize):
        n = 1
        for s in shape:
            n *= s
        return n * itemsize
    total = sum(2 * nb(s, i) for s, i in in_blocks)
    total += sum(2 * nb(s, i) for s, i in out_blocks)
    total += sum(nb(s, i) for s, i in scratch_blocks)
    return int(min(max(2 * total, 32 << 20), _vmem_ceiling()))


def _m_tile(M):
    """M (row) tile: multiple of 16 (bf16 sublane packing); larger on 128 MiB parts."""
    pref = 1024 if _vmem_ceiling() >= (96 << 20) else 512
    tm = min(pref, _round_up(M, 16))
    return tm, _round_up(M, tm)


def _pick_tile(dim, max_full=2048):
    """N/K tile: the whole padded dim when small enough, else the largest
    256-multiple (no 384: the v6e/v7x MXU is 256 wide) that divides it."""
    d = _round_up(dim, 128)
    if d <= max_full:
        return d, d
    for c in (2048, 1024, 512, 256, 128):
        if d % c == 0:
            return c, d
    return d, d


# ------------------------------------------------------------------ matmul kernels

def _linear_kernel(x_ref, w_ref, b_ref, o_ref, acc_ref, *, nk):
    """o = x @ w + b, accumulated over the K grid axis (f32 VMEM accumulator)."""
    k = pl.program_id(2)

    @pl.when(k == 0)
    def _init():
        acc_ref[...] = jnp.zeros(acc_ref.shape, jnp.float32)

    acc_ref[...] += jnp.dot(x_ref[...], w_ref[...],
                            preferred_element_type=jnp.float32)

    @pl.when(k == nk - 1)
    def _epilogue():
        o_ref[...] = (acc_ref[...] + b_ref[...]).astype(o_ref.dtype)


def _moe_linear_kernel(x_ref, w_ref, b_ref, la_ref, bb_ref, o_ref, acc_ref, *, nk):
    """o = x @ W + b + la @ B_all   (la = route-scaled LoRA activation, precomputed)."""
    k = pl.program_id(2)

    @pl.when(k == 0)
    def _init():
        acc_ref[...] = jnp.zeros(acc_ref.shape, jnp.float32)

    acc_ref[...] += jnp.dot(x_ref[...], w_ref[...],
                            preferred_element_type=jnp.float32)

    @pl.when(k == nk - 1)
    def _epilogue():
        lora = jnp.dot(la_ref[...], bb_ref[...], preferred_element_type=jnp.float32)
        o_ref[...] = (acc_ref[...] + b_ref[...] + lora).astype(o_ref.dtype)


def linear_pallas(x2d, w_t, b):
    """y = x @ w_t + b ; x:(M,K) bf16, w_t:(K,N) bf16, b:(N,) f32 -> (M,N) in x.dtype."""
    M, K = x2d.shape
    N = w_t.shape[1]
    tm, Mp = _m_tile(M)
    tn, Np = _pick_tile(N)
    tk, Kp = _pick_tile(K)
    grid = (Mp // tm, Np // tn, Kp // tk)
    itm = x2d.dtype.itemsize

    out = pl.pallas_call(
        functools.partial(_linear_kernel, nk=grid[2]),
        grid=grid,
        out_shape=jax.ShapeDtypeStruct((Mp, Np), x2d.dtype),
        in_specs=[pl.BlockSpec((tm, tk), lambda i, j, k: (i, k)),
                  pl.BlockSpec((tk, tn), lambda i, j, k: (k, j)),
                  pl.BlockSpec((1, tn), lambda i, j, k: (0, j))],
        out_specs=pl.BlockSpec((tm, tn), lambda i, j, k: (i, j)),
        scratch_shapes=[pltpu.VMEM((tm, tn), jnp.float32)],
        compiler_params=pltpu.CompilerParams(
            dimension_semantics=("parallel", "parallel", "arbitrary"),
            vmem_limit_bytes=_vmem_limit(
                [((tm, tk), itm), ((tk, tn), itm), ((1, tn), 4)],
                [((tm, tn), itm)],
                [((tm, tn), 4)])),
    )(_pad_to(x2d, (Mp, Kp)),
      _pad_to(w_t, (Kp, Np)),
      _pad_to(b.astype(jnp.float32).reshape(1, N), (1, Np)))
    return out[:M, :N] if (Mp, Np) != (M, N) else out


def moe_linear_pallas(x2d, p, route_r, B, T):
    """MoE-LoRA linear: y = x @ W + b + ((x @ A_all^T) * route) @ B_all."""
    M, K = x2d.shape
    N = p['w_t'].shape[1]
    Rp = p['a_t'].shape[1]                 # E*r padded to a lane-dense 128-multiple

    # Hoisted LoRA "down" projection: one tiny (M, Rp) matmul instead of a
    # per-(N-tile, K-step) contraction inside the big kernel; routing prob * alpha/r
    # folded in by a broadcast multiply (no (B*T, E*r) route tensor materialized).
    la = linear_pallas(x2d, p['a_t'], jnp.zeros((Rp,), jnp.float32))        # (M, Rp)
    la = (la.reshape(B, T, Rp) * route_r[:, None, :]).astype(x2d.dtype).reshape(M, Rp)

    tm, Mp = _m_tile(M)
    tn, Np = _pick_tile(N)
    tk, Kp = _pick_tile(K)
    grid = (Mp // tm, Np // tn, Kp // tk)
    itm = x2d.dtype.itemsize

    out = pl.pallas_call(
        functools.partial(_moe_linear_kernel, nk=grid[2]),
        grid=grid,
        out_shape=jax.ShapeDtypeStruct((Mp, Np), x2d.dtype),
        in_specs=[pl.BlockSpec((tm, tk), lambda i, j, k: (i, k)),
                  pl.BlockSpec((tk, tn), lambda i, j, k: (k, j)),
                  pl.BlockSpec((1, tn), lambda i, j, k: (0, j)),
                  pl.BlockSpec((tm, Rp), lambda i, j, k: (i, 0)),
                  pl.BlockSpec((Rp, tn), lambda i, j, k: (0, j))],
        out_specs=pl.BlockSpec((tm, tn), lambda i, j, k: (i, j)),
        scratch_shapes=[pltpu.VMEM((tm, tn), jnp.float32)],
        compiler_params=pltpu.CompilerParams(
            dimension_semantics=("parallel", "parallel", "arbitrary"),
            vmem_limit_bytes=_vmem_limit(
                [((tm, tk), itm), ((tk, tn), itm), ((1, tn), 4),
                 ((tm, Rp), itm), ((Rp, tn), itm)],
                [((tm, tn), itm)],
                [((tm, tn), 4)])),
    )(_pad_to(x2d, (Mp, Kp)),
      _pad_to(p['w_t'], (Kp, Np)),
      _pad_to(p['b'].astype(jnp.float32).reshape(1, N), (1, Np)),
      _pad_to(la, (Mp, Rp)),
      _pad_to(p['bb'], (Rp, Np)))
    return out[:M, :N] if (Mp, Np) != (M, N) else out


# ------------------------------------------------------------------ attention kernels

def _flash_mha_kernel(q_ref, k_ref, v_ref, o_ref, qk_ref, m_sc, l_sc, acc_sc, *,
                      n_head, dh, scale, kv_len, tkv):
    ki = pl.program_id(2)

    @pl.when(ki == 0)
    def _init():
        m_sc[...] = jnp.full(m_sc.shape, -jnp.inf, jnp.float32)
        l_sc[...] = jnp.zeros(l_sc.shape, jnp.float32)
        acc_sc[...] = jnp.zeros(acc_sc.shape, jnp.float32)

    if kv_len is not None:
        col = ki * tkv + lax.broadcasted_iota(jnp.int32, (1, tkv), 1)

    for h in range(n_head):                          # static unroll over heads
        lo, hi = h * dh, (h + 1) * dh
        q_h = q_ref[0, :, lo:hi]                     # (tq, dh)  bf16, lane slice
        k_h = k_ref[0, :, lo:hi]                     # (tkv, dh) bf16
        v_h = v_ref[0, :, lo:hi]                     # (tkv, dh) bf16
        # native-dtype MXU matmul, f32 scores; Dh**-0.5 applied to the f32 result
        s = lax.dot_general(q_h, k_h, (((1,), (1,)), ((), ())),
                            preferred_element_type=jnp.float32) * scale
        qk_ref[0, h] = s                             # raw (scaled) logits, like PyTorch
        if kv_len is not None:
            s = jnp.where(col < kv_len, s, -1e30)    # finite mask: no exp(-inf - -inf)
        m_prev = m_sc[h]
        m_new = jnp.maximum(m_prev, jnp.max(s, axis=-1, keepdims=True))
        alpha = jnp.exp(m_prev - m_new)
        p = jnp.exp(s - m_new)
        l_sc[h] = alpha * l_sc[h] + jnp.sum(p, axis=-1, keepdims=True)
        acc_sc[h] = alpha * acc_sc[h] + jnp.dot(p.astype(v_h.dtype), v_h,
                                                preferred_element_type=jnp.float32)
        m_sc[h] = m_new

    @pl.when(ki == pl.num_programs(2) - 1)
    def _finalize():
        for h in range(n_head):
            inv = pl.reciprocal(l_sc[h], approx=False)          # exact normalization
            o_ref[0, :, h * dh:(h + 1) * dh] = (acc_sc[h] * inv).astype(o_ref.dtype)


def mha_attention_pallas(q, k, v, n_head, *, tq_pref=512, tkv_pref=1024):
    """(B,T,C) q/k/v -> (wv:(B,T,C), qk:(B,H,T,T) f32).  Heads are split in-kernel via
    lane slices of lane-dense full-C blocks: no HBM transposes, no 64-lane HBM stores."""
    B, T, C = q.shape
    dh = C // n_head
    scale = float(dh) ** (-0.5)    # Whisper's Dh**-0.25 on q and k, folded into the scores

    tq = min(tq_pref, _round_up(T, 16))
    tkv = min(tkv_pref, _round_up(T, 128))
    # keep the per-step (1, H, tq, tkv) f32 qk output block modest (v7x: 64 MiB VMEM)
    while n_head * tq * tkv * 4 * 2 > (24 << 20) and tkv > 128:
        tkv //= 2
    Tq, Tk = _round_up(T, tq), _round_up(T, tkv)
    qp = _pad_to(q, (B, Tq, C))
    kp = _pad_to(k, (B, Tk, C))
    vp = _pad_to(v, (B, Tk, C))
    grid = (B, Tq // tq, Tk // tkv)
    kv_len = T if Tk != T else None
    itm = q.dtype.itemsize

    wv, qk = pl.pallas_call(
        functools.partial(_flash_mha_kernel, n_head=n_head, dh=dh, scale=scale,
                          kv_len=kv_len, tkv=tkv),
        grid=grid,
        out_shape=(jax.ShapeDtypeStruct((B, Tq, C), q.dtype),
                   jax.ShapeDtypeStruct((B, n_head, Tq, Tk), jnp.float32)),
        in_specs=[pl.BlockSpec((1, tq, C), lambda b, qi, ki: (b, qi, 0)),
                  pl.BlockSpec((1, tkv, C), lambda b, qi, ki: (b, ki, 0)),
                  pl.BlockSpec((1, tkv, C), lambda b, qi, ki: (b, ki, 0))],
        out_specs=(pl.BlockSpec((1, tq, C), lambda b, qi, ki: (b, qi, 0)),
                   pl.BlockSpec((1, n_head, tq, tkv), lambda b, qi, ki: (b, 0, qi, ki))),
        scratch_shapes=[pltpu.VMEM((n_head, tq, 1), jnp.float32),
                        pltpu.VMEM((n_head, tq, 1), jnp.float32),
                        pltpu.VMEM((n_head, tq, dh), jnp.float32)],
        compiler_params=pltpu.CompilerParams(
            dimension_semantics=("parallel", "parallel", "arbitrary"),
            vmem_limit_bytes=_vmem_limit(
                [((1, tq, C), itm), ((1, tkv, C), itm), ((1, tkv, C), itm)],
                [((1, tq, C), itm), ((1, n_head, tq, tkv), 4)],
                [((n_head, tq, 128), 4), ((n_head, tq, 128), 4),
                 ((n_head, tq, max(dh, 128)), 4)])),
    )(qp, kp, vp)
    wv = wv[:, :T, :] if Tq != T else wv
    if Tq != T or Tk != T:
        qk = qk[:, :, :T, :T]
    return wv, qk


def _attn_pool_kernel(x_ref, w_ref, b_ref, o_ref):
    # AttentionPooling: scores = x @ w + b ; softmax over time ; weighted sum over time
    x = x_ref[0].astype(jnp.float32)                                        # (T, C)
    scores = jnp.dot(x, w_ref[...].astype(jnp.float32),
                     preferred_element_type=jnp.float32) + b_ref[...]       # (T, 1)
    m = jnp.max(scores, axis=0, keepdims=True)
    p = jnp.exp(scores - m)
    wgt = p / jnp.sum(p, axis=0, keepdims=True)
    o_ref[0] = jnp.sum(wgt * x, axis=0, keepdims=True).astype(o_ref.dtype)  # (1, C)


def attention_pooling_pallas(x_btc, w, b):
    B, T, C = x_btc.shape
    itm = x_btc.dtype.itemsize
    out = pl.pallas_call(
        _attn_pool_kernel,
        grid=(B,),
        out_shape=jax.ShapeDtypeStruct((B, 1, C), x_btc.dtype),
        in_specs=[pl.BlockSpec((1, T, C), lambda i: (i, 0, 0)),
                  pl.BlockSpec((C, 1), lambda i: (0, 0)),
                  pl.BlockSpec((1, 1), lambda i: (0, 0))],
        out_specs=pl.BlockSpec((1, 1, C), lambda i: (i, 0, 0)),
        compiler_params=pltpu.CompilerParams(
            dimension_semantics=("parallel",),
            vmem_limit_bytes=_vmem_limit(
                [((1, T, C), itm), ((C, 1), itm), ((1, 1), 4)],
                [((1, 1, C), itm)])),
    )(x_btc, w, b.astype(jnp.float32).reshape(1, 1))
    return out.reshape(B, C)


# ------------------------------------------------------------------ router / glue

def conv1d_pallas(x_btc, w_col, bias):
    """Conv1d(kernel=3, stride=1, padding=1) on channel-last (B, T, C_in) input,
    lowered to 3 tap-shifted bf16 slices + one tiled Pallas matmul (bias fused).
    w_col: (3*C_in, C_out) pre-transposed column weight."""
    # TODO(synk): fold the 3 taps into the matmul's K grid axis (tap-offset index_map
    # on the padded input) to avoid materializing the (B*T, 3*C_in) patch matrix.
    B, T, C_in = x_btc.shape
    C_out = w_col.shape[1]
    xp = jnp.pad(x_btc, ((0, 0), (1, 1), (0, 0)))
    patches = jnp.concatenate([xp[:, j:j + T, :] for j in range(3)],
                              axis=-1).reshape(B * T, 3 * C_in)
    out = linear_pallas(patches, w_col, bias)
    return out.reshape(B, T, C_out)


def router_forward(x_btc, rp, temperature):
    # Router: Conv1d(k=3, p=1) -> AttentionPooling -> Linear -> softmax(/temperature)
    h = conv1d_pallas(x_btc, rp['conv_w_col'], rp['conv_b'])          # (B, T, C)
    pooled = attention_pooling_pallas(h, rp['pool_w'], rp['pool_b'])  # (B, C)
    logits = linear_pallas(pooled, rp['lin_w_t'], rp['lin_b'])        # (B, E)
    return jax.nn.softmax(logits.astype(jnp.float32) / temperature, axis=-1)


def mha_forward(x, params, *, n_head, temperature, scaling, r):
    """MultiHeadAttention.forward (self-attention: xa=None, mask=None, kv_cache=None).
    Returns (out, qk) like the PyTorch module."""
    B, T, C = x.shape
    x2 = x.reshape(B * T, C)

    route = router_forward(x, params['router'], temperature)          # (B, E) f32
    # per-expert routing prob * lora_alpha/r, repeated r times to line up with the
    # stacked LoRA factors; padded once to the lane-dense Rp used by the kernels.
    Rp = params['q']['a_t'].shape[1]
    route_r = _pad_to(scaling * jnp.repeat(route, r, axis=1), (B, Rp))

    q = moe_linear_pallas(x2, params['q'], route_r, B, T)
    k = moe_linear_pallas(x2, params['k'], route_r, B, T)
    v = moe_linear_pallas(x2, params['v'], route_r, B, T)

    wv, qk = mha_attention_pallas(q.reshape(B, T, C), k.reshape(B, T, C),
                                  v.reshape(B, T, C), n_head)
    out = moe_linear_pallas(wv.reshape(B * T, C), params['o'], route_r, B, T)
    return out.reshape(B, T, C), qk


# ------------------------------------------------------------------ params

def init_params(key, *, n_state, n_expert, r):
    keys = iter(jax.random.split(key, 64))
    Rp = _round_up(n_expert * r, 128)

    def bf(shape, scale=0.02):
        return (jax.random.normal(next(keys), shape, jnp.float32) * scale).astype(jnp.bfloat16)

    def f32(shape, scale=0.02):
        return jax.random.normal(next(keys), shape, jnp.float32) * scale

    def moe_lin(in_f, out_f, bias=True):
        # TODO(synk): lora.MoELinear source not provided; assuming the standard MoE-LoRA
        # form (base Linear + route-prob-weighted per-expert A/B adapters scaled by
        # lora_alpha/r; dropout is identity at eval).
        a = bf((n_expert * r, in_f))           # stacked per-expert A_e (r rows each)
        bm = bf((n_expert * r, out_f))         # stacked per-expert B_e^T
        return {
            'w_t': bf((in_f, out_f)),
            'b': f32((out_f,)) if bias else jnp.zeros((out_f,), jnp.float32),
            'a_t': _pad_to(jnp.transpose(a), (in_f, Rp)),     # (K, Rp) lane-dense
            'bb': _pad_to(bm, (Rp, out_f)),                   # (Rp, N)
        }

    conv_w = bf((n_state, n_state, 3))         # PyTorch Conv1d weight (C_out, C_in, 3)
    conv_w_col = jnp.concatenate([jnp.transpose(conv_w[:, :, j]) for j in range(3)],
                                 axis=0)       # (3*C_in, C_out)
    return {
        'router': {
            'conv_w_col': conv_w_col,
            'conv_b': f32((n_state,)),
            'pool_w': bf((n_state, 1)),
            'pool_b': f32((1,)),
            'lin_w_t': bf((n_state, n_expert)),
            'lin_b': f32((n_expert,)),
        },
        'q': moe_lin(n_state, n_state, bias=True),
        'k': moe_lin(n_state, n_state, bias=False),
        'v': moe_lin(n_state, n_state, bias=True),
        'o': moe_lin(n_state, n_state, bias=True),
    }


# ------------------------------------------------------------------ main

if __name__ == "__main__":
    B, T, n_state, n_head = 2, 8, 64, 4
    n_expert, r, lora_alpha, temperature = 2, 4, 8, 1.0

    key = jax.random.PRNGKey(0)
    kx, kp = jax.random.split(key)
    x = jax.random.normal(kx, (B, T, n_state), jnp.float32).astype(jnp.bfloat16)
    params = init_params(kp, n_state=n_state, n_expert=n_expert, r=r)

    fwd = jax.jit(functools.partial(mha_forward, n_head=n_head,
                                    temperature=temperature,
                                    scaling=lora_alpha / r, r=r))
    out, qk = fwd(x, params)
    out, qk = jax.block_until_ready((out, qk))

    assert out.shape == (B, T, n_state), out.shape
    assert qk.shape == (B, n_head, T, T), qk.shape
    assert bool(jnp.all(jnp.isfinite(out.astype(jnp.float32))))
    assert bool(jnp.all(jnp.isfinite(qk)))
    print("KERNEL_OK")
</pallas_src>

<mosaic_0001>
module attributes {stable_mosaic.version = 11 : i64} {
  func.func @_attn_pool_kernel(%arg0: i32, %arg1: memref<1x8x64xbf16, #tpu.memory_space<vmem>>, %arg2: memref<64x1xbf16, #tpu.memory_space<vmem>>, %arg3: memref<1x1xf32, #tpu.memory_space<vmem>>, %arg4: memref<1x1x64xbf16, #tpu.memory_space<vmem>>) attributes {dimension_semantics = [#tpu.dimension_semantics<parallel>], iteration_bounds = array<i64: 2>, scalar_prefetch = 0 : i64, scratch_operands = 0 : i64, tpu.core_type = #tpu.core_type<tc>, window_params = [{transform_indices = @transform_0, window_bounds = array<i64: 1, 8, 64>}, {pipeline_mode = #tpu.pipeline_mode<synchronous>, transform_indices = @transform_1, window_bounds = array<i64: 64, 1>}, {pipeline_mode = #tpu.pipeline_mode<synchronous>, transform_indices = @transform_2, window_bounds = array<i64: 1, 1>}, {transform_indices = @transform_3, window_bounds = array<i64: 1, 1, 64>}]} {
    %c0 = arith.constant 0 : index
    %c0_0 = arith.constant 0 : index
    %c0_1 = arith.constant 0 : index
    %0 = vector.load %arg1[%c0, %c0_0, %c0_1] : memref<1x8x64xbf16, #tpu.memory_space<vmem>>, vector<1x8x64xbf16>
    %1 = vector.shape_cast %0 : vector<1x8x64xbf16> to vector<8x64xbf16>
    %2 = arith.extf %1 : vector<8x64xbf16> to vector<8x64xf32>
    %c0_2 = arith.constant 0 : index
    %c0_3 = arith.constant 0 : index
    %3 = vector.load %arg2[%c0_2, %c0_3] : memref<64x1xbf16, #tpu.memory_space<vmem>>, vector<64x1xbf16>
    %4 = arith.extf %3 : vector<64x1xbf16> to vector<64x1xf32>
    %cst = arith.constant dense<0.000000e+00> : vector<8x1xf32>
    %5 = tpu.matmul %2, %4, %cst {dimension_numbers = #tpu.dot_dimension_numbers<[1], [0], [0], [1], [0, 0, 1, 1], [], []>} : vector<8x64xf32>, vector<64x1xf32>, vector<8x1xf32> -> vector<8x1xf32>
    %c0_4 = arith.constant 0 : index
    %c0_5 = arith.constant 0 : index
    %6 = vector.load %arg3[%c0_4, %c0_5] : memref<1x1xf32, #tpu.memory_space<vmem>>, vector<1x1xf32>
    %7 = vector.broadcast %6 : vector<1x1xf32> to vector<8x1xf32>
    %8 = arith.addf %5, %7 : vector<8x1xf32>
    %cst_6 = arith.constant dense<0xFF800000> : vector<1xf32>
    %9 = vector.multi_reduction <maximumf>, %8, %cst_6 [0] : vector<8x1xf32> to vector<1xf32>
    %10 = vector.shape_cast %9 : vector<1xf32> to vector<1x1xf32>
    %11 = vector.broadcast %10 : vector<1x1xf32> to vector<8x1xf32>
    %12 = arith.subf %8, %11 : vector<8x1xf32>
    %13 = math.exp %12 : vector<8x1xf32>
    %cst_7 = arith.constant dense<0.000000e+00> : vector<1xf32>
    %14 = vector.multi_reduction <add>, %13, %cst_7 [0] : vector<8x1xf32> to vector<1xf32>
    %15 = vector.shape_cast %14 : vector<1xf32> to vector<1x1xf32>
    %16 = vector.broadcast %15 : vector<1x1xf32> to vector<8x1xf32>
    %17 = arith.divf %13, %16 : vector<8x1xf32>
    %18 = vector.broadcast %17 : vector<8x1xf32> to vector<8x64xf32>
    %19 = arith.mulf %18, %2 : vector<8x64xf32>
    %cst_8 = arith.constant dense<0.000000e+00> : vector<64xf32>
    %20 = vector.multi_reduction <add>, %19, %cst_8 [0] : vector<8x64xf32> to vector<64xf32>
    %21 = vector.shape_cast %20 : vector<64xf32> to vector<1x64xf32>
    %22 = arith.truncf %21 : vector<1x64xf32> to vector<1x64xbf16>
    %c0_9 = arith.constant 0 : index
    %c0_10 = arith.constant 0 : index
    %c0_11 = arith.constant 0 : index
    %23 = vector.load %arg4[%c0_9, %c0_10, %c0_11] : memref<1x1x64xbf16, #tpu.memory_space<vmem>>, vector<1x1x64xbf16>
    %24 = vector.shape_cast %23 : vector<1x1x64xbf16> to vector<1x64xbf16>
    %25 = vector.shape_cast %22 : vector<1x64xbf16> to vector<1x1x64xbf16>
    tpu.vector_store %arg4[%c0_9, %c0_10, %c0_11], %25 {strides = array<i32>} : memref<1x1x64xbf16, #tpu.memory_space<vmem>>, vector<1x1x64xbf16>,
    return
  }
  func.func @transform_0(%arg0: i32) -> (i32, i32, i32) {
    %c0_i32 = arith.constant 0 : i32
    %c0_i32_0 = arith.constant 0 : i32
    %c0_i32_1 = arith.constant 0 : i32
    return %arg0, %c0_i32, %c0_i32_0 : i32, i32, i32
  }
  func.func @transform_1(%arg0: i32) -> (i32, i32) {
    %c0_i32 = arith.constant 0 : i32
    %c0_i32_0 = arith.constant 0 : i32
    %c0_i32_1 = arith.constant 0 : i32
    return %c0_i32, %c0_i32_0 : i32, i32
  }
  func.func @transform_2(%arg0: i32) -> (i32, i32) {
    %c0_i32 = arith.constant 0 : i32
    %c0_i32_0 = arith.constant 0 : i32
    %c0_i32_1 = arith.constant 0 : i32
    return %c0_i32, %c0_i32_0 : i32, i32
  }
  func.func @transform_3(%arg0: i32) -> (i32, i32, i32) {
    %c0_i32 = arith.constant 0 : i32
    %c0_i32_0 = arith.constant 0 : i32
    %c0_i32_1 = arith.constant 0 : i32
    return %arg0, %c0_i32, %c0_i32_0 : i32, i32, i32
  }
}

module attributes {stable_mosaic.version = 11 : i64} {
  func.func @_linear_kernel(%arg0: i32, %arg1: i32, %arg2: i32, %arg3: memref<16x256xbf16, #tpu.memory_space<vmem>>, %arg4: memref<256x128xbf16, #tpu.memory_space<vmem>>, %arg5: memref<1x128xf32, #tpu.memory_space<vmem>>, %arg6: memref<16x128xbf16, #tpu.memory_space<vmem>>, %arg7: memref<16x128xf32, #tpu.memory_space<vmem>>) attributes {dimension_semantics = [#tpu.dimension_semantics<parallel>, #tpu.dimension_semantics<parallel>, #tpu.dimension_semantics<arbitrary>], iteration_bounds = array<i64: 1, 1, 1>, scalar_prefetch = 0 : i64, scratch_operands = 1 : i64, tpu.core_type = #tpu.core_type<tc>, window_params = [{transform_indices = @transform_0, window_bounds = array<i64: 16, 256>}, {transform_indices = @transform_1, window_bounds = array<i64: 256, 128>}, {transform_indices = @transform_2, window_bounds = array<i64: 1, 128>}, {transform_indices = @transform_3, window_bounds = array<i64: 16, 128>}]} {
    %c0_i32 = arith.constant 0 : i32
    %0 = arith.cmpi eq, %arg2, %c0_i32 : i32
    %1 = arith.extui %0 : i1 to i32
    %c0_i32_0 = arith.constant 0 : i32
    %2 = arith.cmpi ne, %1, %c0_i32_0 : i32
    scf.if %2 {
      %cst_10 = arith.constant 0.000000e+00 : f32
      %12 = vector.broadcast %cst_10 : f32 to vector<16x128xf32>
      %c0_11 = arith.constant 0 : index
      %c0_12 = arith.constant 0 : index
      %13 = vector.load %arg7[%c0_11, %c0_12] : memref<16x128xf32, #tpu.memory_space<vmem>>, vector<16x128xf32>
      tpu.vector_store %arg7[%c0_11, %c0_12], %12 {strides = array<i32>} : memref<16x128xf32, #tpu.memory_space<vmem>>, vector<16x128xf32>,
    } else {
    }
    %c0 = arith.constant 0 : index
    %c0_1 = arith.constant 0 : index
    %3 = vector.load %arg7[%c0, %c0_1] : memref<16x128xf32, #tpu.memory_space<vmem>>, vector<16x128xf32>
    %c0_2 = arith.constant 0 : index
    %c0_3 = arith.constant 0 : index
    %4 = vector.load %arg3[%c0_2, %c0_3] : memref<16x256xbf16, #tpu.memory_space<vmem>>, vector<16x256xbf16>
    %c0_4 = arith.constant 0 : index
    %c0_5 = arith.constant 0 : index
    %5 = vector.load %arg4[%c0_4, %c0_5] : memref<256x128xbf16, #tpu.memory_space<vmem>>, vector<256x128xbf16>
    %cst = arith.constant dense<0.000000e+00> : vector<16x128xf32>
    %6 = tpu.matmul %4, %5, %cst {dimension_numbers = #tpu.dot_dimension_numbers<[1], [0], [0], [1], [0, 0, 1, 1], [], []>} : vector<16x256xbf16>, vector<256x128xbf16>, vector<16x128xf32> -> vector<16x128xf32>
    %7 = arith.addf %3, %6 : vector<16x128xf32>
    %c0_6 = arith.constant 0 : index
    %c0_7 = arith.constant 0 : index
    %8 = vector.load %arg7[%c0_6, %c0_7] : memref<16x128xf32, #tpu.memory_space<vmem>>, vector<16x128xf32>
    tpu.vector_store %arg7[%c0_6, %c0_7], %7 {strides = array<i32>} : memref<16x128xf32, #tpu.memory_space<vmem>>, vector<16x128xf32>,
    %c0_i32_8 = arith.constant 0 : i32
    %9 = arith.cmpi eq, %arg2, %c0_i32_8 : i32
    %10 = arith.extui %9 : i1 to i32
    %c0_i32_9 = arith.constant 0 : i32
    %11 = arith.cmpi ne, %10, %c0_i32_9 : i32
    scf.if %11 {
      %c0_10 = arith.constant 0 : index
      %c0_11 = arith.constant 0 : index
      %12 = vector.load %arg7[%c0_10, %c0_11] : memref<16x128xf32, #tpu.memory_space<vmem>>, vector<16x128xf32>
      %c0_12 = arith.constant 0 : index
      %c0_13 = arith.constant 0 : index
      %13 = vector.load %arg5[%c0_12, %c0_13] : memref<1x128xf32, #tpu.memory_space<vmem>>, vector<1x128xf32>
      %14 = vector.broadcast %13 : vector<1x128xf32> to vector<16x128xf32>
      %15 = arith.addf %12, %14 : vector<16x128xf32>
      %16 = arith.truncf %15 : vector<16x128xf32> to vector<16x128xbf16>
      %c0_14 = arith.constant 0 : index
      %c0_15 = arith.constant 0 : index
      %17 = vector.load %arg6[%c0_14, %c0_15] : memref<16x128xbf16, #tpu.memory_space<vmem>>, vector<16x128xbf16>
      tpu.vector_store %arg6[%c0_14, %c0_15], %16 {strides = array<i32>} : memref<16x128xbf16, #tpu.memory_space<vmem>>, vector<16x128xbf16>,
    } else {
    }
    return
  }
  func.func @transform_0(%arg0: i32, %arg1: i32, %arg2: i32) -> (i32, i32) {
    %c0_i32 = arith.constant 0 : i32
    return %arg0, %arg2 : i32, i32
  }
  func.func @transform_1(%arg0: i32, %arg1: i32, %arg2: i32) -> (i32, i32) {
    %c0_i32 = arith.constant 0 : i32
    return %arg2, %arg1 : i32, i32
  }
  func.func @transform_2(%arg0: i32, %arg1: i32, %arg2: i32) -> (i32, i32) {
    %c0_i32 = arith.constant 0 : i32
    %c0_i32_0 = arith.constant 0 : i32
    return %c0_i32, %arg1 : i32, i32
  }
  func.func @transform_3(%arg0: i32, %arg1: i32, %arg2: i32) -> (i32, i32) {
    %c0_i32 = arith.constant 0 : i32
    return %arg0, %arg1 : i32, i32
  }
}

module attributes {stable_mosaic.version = 11 : i64} {
  func.func @_linear_kernel(%arg0: i32, %arg1: i32, %arg2: i32, %arg3: memref<16x128xbf16, #tpu.memory_space<vmem>>, %arg4: memref<128x128xbf16, #tpu.memory_space<vmem>>, %arg5: memref<1x128xf32, #tpu.memory_space<vmem>>, %arg6: memref<16x128xbf16, #tpu.memory_space<vmem>>, %arg7: memref<16x128xf32, #tpu.memory_space<vmem>>) attributes {dimension_semantics = [#tpu.dimension_semantics<parallel>, #tpu.dimension_semantics<parallel>, #tpu.dimension_semantics<arbitrary>], iteration_bounds = array<i64: 1, 1, 1>, scalar_prefetch = 0 : i64, scratch_operands = 1 : i64, tpu.core_type = #tpu.core_type<tc>, window_params = [{transform_indices = @transform_0, window_bounds = array<i64: 16, 128>}, {transform_indices = @transform_1, window_bounds = array<i64: 128, 128>}, {transform_indices = @transform_2, window_bounds = array<i64: 1, 128>}, {transform_indices = @transform_3, window_bounds = array<i64: 16, 128>}]} {
    %c0_i32 = arith.constant 0 : i32
    %0 = arith.cmpi eq, %arg2, %c0_i32 : i32
    %1 = arith.extui %0 : i1 to i32
    %c0_i32_0 = arith.constant 0 : i32
    %2 = arith.cmpi ne, %1, %c0_i32_0 : i32
    scf.if %2 {
      %cst_10 = arith.constant 0.000000e+00 : f32
      %12 = vector.broadcast %cst_10 : f32 to vector<16x128xf32>
      %c0_11 = arith.constant 0 : index
      %c0_12 = arith.constant 0 : index
      %13 = vector.load %arg7[%c0_11, %c0_12] : memref<16x128xf32, #tpu.memory_space<vmem>>, vector<16x128xf32>
      tpu.vector_store %arg7[%c0_11, %c0_12], %12 {strides = array<i32>} : memref<16x128xf32, #tpu.memory_space<vmem>>, vector<16x128xf32>,
    } else {
    }
    %c0 = arith.constant 0 : index
    %c0_1 = arith.constant 0 : index
    %3 = vector.load %arg7[%c0, %c0_1] : memref<16x128xf32, #tpu.memory_space<vmem>>, vector<16x128xf32>
    %c0_2 = arith.constant 0 : index
    %c0_3 = arith.constant 0 : index
    %4 = vector.load %arg3[%c0_2, %c0_3] : memref<16x128xbf16, #tpu.memory_space<vmem>>, vector<16x128xbf16>
    %c0_4 = arith.constant 0 : index
    %c0_5 = arith.constant 0 : index
    %5 = vector.load %arg4[%c0_4, %c0_5] : memref<128x128xbf16, #tpu.memory_space<vmem>>, vector<128x128xbf16>
    %cst = arith.constant dense<0.000000e+00> : vector<16x128xf32>
    %6 = tpu.matmul %4, %5, %cst {dimension_numbers = #tpu.dot_dimension_numbers<[1], [0], [0], [1], [0, 0, 1, 1], [], []>} : vector<16x128xbf16>, vector<128x128xbf16>, vector<16x128xf32> -> vector<16x128xf32>
    %7 = arith.addf %3, %6 : vector<16x128xf32>
    %c0_6 = arith.constant 0 : index
    %c0_7 = arith.constant 0 : index
    %8 = vector.load %arg7[%c0_6, %c0_7] : memref<16x128xf32, #tpu.memory_space<vmem>>, vector<16x128xf32>
    tpu.vector_store %arg7[%c0_6, %c0_7], %7 {strides = array<i32>} : memref<16x128xf32, #tpu.memory_space<vmem>>, vector<16x128xf32>,
    %c0_i32_8 = arith.constant 0 : i32
    %9 = arith.cmpi eq, %arg2, %c0_i32_8 : i32
    %10 = arith.extui %9 : i1 to i32
    %c0_i32_9 = arith.constant 0 : i32
    %11 = arith.cmpi ne, %10, %c0_i32_9 : i32
    scf.if %11 {
      %c0_10 = arith.constant 0 : index
      %c0_11 = arith.constant 0 : index
      %12 = vector.load %arg7[%c0_10, %c0_11] : memref<16x128xf32, #tpu.memory_space<vmem>>, vector<16x128xf32>
      %c0_12 = arith.constant 0 : index
      %c0_13 = arith.constant 0 : index
      %13 = vector.load %arg5[%c0_12, %c0_13] : memref<1x128xf32, #tpu.memory_space<vmem>>, vector<1x128xf32>
      %14 = vector.broadcast %13 : vector<1x128xf32> to vector<16x128xf32>
      %15 = arith.addf %12, %14 : vector<16x128xf32>
      %16 = arith.truncf %15 : vector<16x128xf32> to vector<16x128xbf16>
      %c0_14 = arith.constant 0 : index
      %c0_15 = arith.constant 0 : index
      %17 = vector.load %arg6[%c0_14, %c0_15] : memref<16x128xbf16, #tpu.memory_space<vmem>>, vector<16x128xbf16>
      tpu.vector_store %arg6[%c0_14, %c0_15], %16 {strides = array<i32>} : memref<16x128xbf16, #tpu.memory_space<vmem>>, vector<16x128xbf16>,
    } else {
    }
    return
  }
  func.func @transform_0(%arg0: i32, %arg1: i32, %arg2: i32) -> (i32, i32) {
    %c0_i32 = arith.constant 0 : i32
    return %arg0, %arg2 : i32, i32
  }
  func.func @transform_1(%arg0: i32, %arg1: i32, %arg2: i32) -> (i32, i32) {
    %c0_i32 = arith.constant 0 : i32
    return %arg2, %arg1 : i32, i32
  }
  func.func @transform_2(%arg0: i32, %arg1: i32, %arg2: i32) -> (i32, i32) {
    %c0_i32 = arith.constant 0 : i32
    %c0_i32_0 = arith.constant 0 : i32
    return %c0_i32, %arg1 : i32, i32
  }
  func.func @transform_3(%arg0: i32, %arg1: i32, %arg2: i32) -> (i32, i32) {
    %c0_i32 = arith.constant 0 : i32
    return %arg0, %arg1 : i32, i32
  }
}

module attributes {stable_mosaic.version = 11 : i64} {
  func.func @_flash_mha_kernel(%arg0: i32, %arg1: i32, %arg2: i32, %arg3: memref<1x16x64xbf16, #tpu.memory_space<vmem>>, %arg4: memref<1x128x64xbf16, #tpu.memory_space<vmem>>, %arg5: memref<1x128x64xbf16, #tpu.memory_space<vmem>>, %arg6: memref<1x16x64xbf16, #tpu.memory_space<vmem>>, %arg7: memref<1x4x16x128xf32, #tpu.memory_space<vmem>>, %arg8: memref<4x16x1xf32, #tpu.memory_space<vmem>>, %arg9: memref<4x16x1xf32, #tpu.memory_space<vmem>>, %arg10: memref<4x16x16xf32, #tpu.memory_space<vmem>>) attributes {dimension_semantics = [#tpu.dimension_semantics<parallel>, #tpu.dimension_semantics<parallel>, #tpu.dimension_semantics<arbitrary>], iteration_bounds = array<i64: 2, 1, 1>, scalar_prefetch = 0 : i64, scratch_operands = 3 : i64, tpu.core_type = #tpu.core_type<tc>, window_params = [{transform_indices = @transform_0, window_bounds = array<i64: 1, 16, 64>}, {transform_indices = @transform_1, window_bounds = array<i64: 1, 128, 64>}, {transform_indices = @transform_2, window_bounds = array<i64: 1, 128, 64>}, {transform_indices = @transform_3, window_bounds = array<i64: 1, 16, 64>}, {transform_indices = @transform_4, window_bounds = array<i64: 1, 4, 16, 128>}]} {
    %c0_i32 = arith.constant 0 : i32
    %0 = arith.cmpi eq, %arg2, %c0_i32 : i32
    %1 = arith.extui %0 : i1 to i32
    %c0_i32_0 = arith.constant 0 : i32
    %2 = arith.cmpi ne, %1, %c0_i32_0 : i32
    scf.if %2 {
      %cst_146 = arith.constant 0xFF800000 : f32
      %210 = vector.broadcast %cst_146 : f32 to vector<4x16x1xf32>
      %c0_147 = arith.constant 0 : index
      %c0_148 = arith.constant 0 : index
      %c0_149 = arith.constant 0 : index
      %211 = vector.load %arg8[%c0_147, %c0_148, %c0_149] : memref<4x16x1xf32, #tpu.memory_space<vmem>>, vector<4x16x1xf32>
      tpu.vector_store %arg8[%c0_147, %c0_148, %c0_149], %210 {strides = array<i32>} : memref<4x16x1xf32, #tpu.memory_space<vmem>>, vector<4x16x1xf32>,
      %cst_150 = arith.constant 0.000000e+00 : f32
      %212 = vector.broadcast %cst_150 : f32 to vector<4x16x1xf32>
      %c0_151 = arith.constant 0 : index
      %c0_152 = arith.constant 0 : index
      %c0_153 = arith.constant 0 : index
      %213 = vector.load %arg9[%c0_151, %c0_152, %c0_153] : memref<4x16x1xf32, #tpu.memory_space<vmem>>, vector<4x16x1xf32>
      tpu.vector_store %arg9[%c0_151, %c0_152, %c0_153], %212 {strides = array<i32>} : memref<4x16x1xf32, #tpu.memory_space<vmem>>, vector<4x16x1xf32>,
      %cst_154 = arith.constant 0.000000e+00 : f32
      %214 = vector.broadcast %cst_154 : f32 to vector<4x16x16xf32>
      %c0_155 = arith.constant 0 : index
      %c0_156 = arith.constant 0 : index
      %c0_157 = arith.constant 0 : index
      %215 = vector.load %arg10[%c0_155, %c0_156, %c0_157] : memref<4x16x16xf32, #tpu.memory_space<vmem>>, vector<4x16x16xf32>
      tpu.vector_store %arg10[%c0_155, %c0_156, %c0_157], %214 {strides = array<i32>} : memref<4x16x16xf32, #tpu.memory_space<vmem>>, vector<4x16x16xf32>,
    } else {
    }
    %c128_i32 = arith.constant 128 : i32
    %3 = arith.muli %arg2, %c128_i32 : i32
    %4 = tpu.iota {dimensions = array<i32: 1>} : vector<1x128xi32>
    %5 = vector.broadcast %3 : i32 to vector<1x128xi32>
    %6 = arith.addi %5, %4 : vector<1x128xi32>
    %c0 = arith.constant 0 : index
    %c0_1 = arith.constant 0 : index
    %c0_2 = arith.constant 0 : index
    %7 = vector.load %arg3[%c0, %c0_1, %c0_2] : memref<1x16x64xbf16, #tpu.memory_space<vmem>>, vector<1x16x16xbf16>
    %8 = vector.shape_cast %7 : vector<1x16x16xbf16> to vector<16x16xbf16>
    %c0_3 = arith.constant 0 : index
    %c0_4 = arith.constant 0 : index
    %c0_5 = arith.constant 0 : index
    %9 = vector.load %arg4[%c0_3, %c0_4, %c0_5] : memref<1x128x64xbf16, #tpu.memory_space<vmem>>, vector<1x128x16xbf16>
    %10 = vector.shape_cast %9 : vector<1x128x16xbf16> to vector<128x16xbf16>
    %c0_6 = arith.constant 0 : index
    %c0_7 = arith.constant 0 : index
    %c0_8 = arith.constant 0 : index
    %11 = vector.load %arg5[%c0_6, %c0_7, %c0_8] : memref<1x128x64xbf16, #tpu.memory_space<vmem>>, vector<1x128x16xbf16>
    %12 = vector.shape_cast %11 : vector<1x128x16xbf16> to vector<128x16xbf16>
    %cst = arith.constant dense<0.000000e+00> : vector<16x128xf32>
    %13 = tpu.matmul %8, %10, %cst {dimension_numbers = #tpu.dot_dimension_numbers<[1], [1], [0], [0], [0, 0, 1, 0], [], []>} : vector<16x16xbf16>, vector<128x16xbf16>, vector<16x128xf32> -> vector<16x128xf32>
    %cst_9 = arith.constant 2.500000e-01 : f32
    %14 = vector.broadcast %cst_9 : f32 to vector<16x128xf32>
    %15 = arith.mulf %13, %14 : vector<16x128xf32>
    %c0_10 = arith.constant 0 : index
    %c0_11 = arith.constant 0 : index
    %c0_12 = arith.constant 0 : index
    %c0_13 = arith.constant 0 : index
    %16 = vector.load %arg7[%c0_10, %c0_11, %c0_12, %c0_13] : memref<1x4x16x128xf32, #tpu.memory_space<vmem>>, vector<1x1x16x128xf32>
    %17 = vector.shape_cast %16 : vector<1x1x16x128xf32> to vector<16x128xf32>
    %18 = vector.shape_cast %15 : vector<16x128xf32> to vector<1x1x16x128xf32>
    tpu.vector_store %arg7[%c0_10, %c0_11, %c0_12, %c0_13], %18 {strides = array<i32>} : memref<1x4x16x128xf32, #tpu.memory_space<vmem>>, vector<1x1x16x128xf32>,
    %c8_i32 = arith.constant 8 : i32
    %19 = vector.broadcast %c8_i32 : i32 to vector<1x128xi32>
    %20 = arith.cmpi slt, %6, %19 : vector<1x128xi32>
    %cst_14 = arith.constant -1.000000e+30 : f32
    %21 = vector.shape_cast %20 : vector<1x128xi1> to vector<1x128xi1>
    %22 = vector.broadcast %21 : vector<1x128xi1> to vector<16x128xi1>
    %23 = vector.broadcast %cst_14 : f32 to vector<16x128xf32>
    %24 = arith.select %22, %15, %23 : vector<16x128xi1>, vector<16x128xf32>
    %c0_15 = arith.constant 0 : index
    %c0_16 = arith.constant 0 : index
    %c0_17 = arith.constant 0 : index
    %25 = vector.load %arg8[%c0_15, %c0_16, %c0_17] : memref<4x16x1xf32, #tpu.memory_space<vmem>>, vector<1x16x1xf32>
    %26 = vector.shape_cast %25 : vector<1x16x1xf32> to vector<16x1xf32>
    %cst_18 = arith.constant dense<0xFF800000> : vector<16xf32>
    %27 = vector.multi_reduction <maximumf>, %24, %cst_18 [1] : vector<16x128xf32> to vector<16xf32>
    %28 = vector.shape_cast %27 : vector<16xf32> to vector<16x1xf32>
    %29 = arith.maximumf %26, %28 : vector<16x1xf32>
    %30 = arith.subf %26, %29 : vector<16x1xf32>
    %31 = math.exp %30 : vector<16x1xf32>
    %32 = vector.broadcast %29 : vector<16x1xf32> to vector<16x128xf32>
    %33 = arith.subf %24, %32 : vector<16x128xf32>
    %34 = math.exp %33 : vector<16x128xf32>
    %c0_19 = arith.constant 0 : index
    %c0_20 = arith.constant 0 : index
    %c0_21 = arith.constant 0 : index
    %35 = vector.load %arg9[%c0_19, %c0_20, %c0_21] : memref<4x16x1xf32, #tpu.memory_space<vmem>>, vector<1x16x1xf32>
    %36 = vector.shape_cast %35 : vector<1x16x1xf32> to vector<16x1xf32>
    %37 = arith.mulf %31, %36 : vector<16x1xf32>
    %cst_22 = arith.constant dense<0.000000e+00> : vector<16xf32>
    %38 = vector.multi_reduction <add>, %34, %cst_22 [1] : vector<16x128xf32> to vector<16xf32>
    %39 = vector.shape_cast %38 : vector<16xf32> to vector<16x1xf32>
    %40 = arith.addf %37, %39 : vector<16x1xf32>
    %c0_23 = arith.constant 0 : index
    %c0_24 = arith.constant 0 : index
    %c0_25 = arith.constant 0 : index
    %41 = vector.load %arg9[%c0_23, %c0_24, %c0_25] : memref<4x16x1xf32, #tpu.memory_space<vmem>>, vector<1x16x1xf32>
    %42 = vector.shape_cast %41 : vector<1x16x1xf32> to vector<16x1xf32>
    %43 = vector.shape_cast %40 : vector<16x1xf32> to vector<1x16x1xf32>
    tpu.vector_store %arg9[%c0_23, %c0_24, %c0_25], %43 {strides = array<i32>} : memref<4x16x1xf32, #tpu.memory_space<vmem>>, vector<1x16x1xf32>,
    %c0_26 = arith.constant 0 : index
    %c0_27 = arith.constant 0 : index
    %c0_28 = arith.constant 0 : index
    %44 = vector.load %arg10[%c0_26, %c0_27, %c0_28] : memref<4x16x16xf32, #tpu.memory_space<vmem>>, vector<1x16x16xf32>
    %45 = vector.shape_cast %44 : vector<1x16x16xf32> to vector<16x16xf32>
    %46 = vector.broadcast %31 : vector<16x1xf32> to vector<16x16xf32>
    %47 = arith.mulf %46, %45 : vector<16x16xf32>
    %48 = arith.truncf %34 : vector<16x128xf32> to vector<16x128xbf16>
    %cst_29 = arith.constant dense<0.000000e+00> : vector<16x16xf32>
    %49 = tpu.matmul %48, %12, %cst_29 {dimension_numbers = #tpu.dot_dimension_numbers<[1], [0], [0], [1], [0, 0, 1, 1], [], []>} : vector<16x128xbf16>, vector<128x16xbf16>, vector<16x16xf32> -> vector<16x16xf32>
    %50 = arith.addf %47, %49 : vector<16x16xf32>
    %c0_30 = arith.constant 0 : index
    %c0_31 = arith.constant 0 : index
    %c0_32 = arith.constant 0 : index
    %51 = vector.load %arg10[%c0_30, %c0_31, %c0_32] : memref<4x16x16xf32, #tpu.memory_space<vmem>>, vector<1x16x16xf32>
    %52 = vector.shape_cast %51 : vector<1x16x16xf32> to vector<16x16xf32>
    %53 = vector.shape_cast %50 : vector<16x16xf32> to vector<1x16x16xf32>
    tpu.vector_store %arg10[%c0_30, %c0_31, %c0_32], %53 {strides = array<i32>} : memref<4x16x16xf32, #tpu.memory_space<vmem>>, vector<1x16x16xf32>,
    %c0_33 = arith.constant 0 : index
    %c0_34 = arith.constant 0 : index
    %c0_35 = arith.constant 0 : index
    %54 = vector.load %arg8[%c0_33, %c0_34, %c0_35] : memref<4x16x1xf32, #tpu.memory_space<vmem>>, vector<1x16x1xf32>
    %55 = vector.shape_cast %54 : vector<1x16x1xf32> to vector<16x1xf32>
    %56 = vector.shape_cast %29 : vector<16x1xf32> to vector<1x16x1xf32>
    tpu.vector_store %arg8[%c0_33, %c0_34, %c0_35], %56 {strides = array<i32>} : memref<4x16x1xf32, #tpu.memory_space<vmem>>, vector<1x16x1xf32>,
    %c0_36 = arith.constant 0 : index
    %c0_37 = arith.constant 0 : index
    %c16 = arith.constant 16 : index
    %57 = vector.load %arg3[%c0_36, %c0_37, %c16] : memref<1x16x64xbf16, #tpu.memory_space<vmem>>, vector<1x16x16xbf16>
    %58 = vector.shape_cast %57 : vector<1x16x16xbf16> to vector<16x16xbf16>
    %c0_38 = arith.constant 0 : index
    %c0_39 = arith.constant 0 : index
    %c16_40 = arith.constant 16 : index
    %59 = vector.load %arg4[%c0_38, %c0_39, %c16_40] : memref<1x128x64xbf16, #tpu.memory_space<vmem>>, vector<1x128x16xbf16>
    %60 = vector.shape_cast %59 : vector<1x128x16xbf16> to vector<128x16xbf16>
    %c0_41 = arith.constant 0 : index
    %c0_42 = arith.constant 0 : index
    %c16_43 = arith.constant 16 : index
    %61 = vector.load %arg5[%c0_41, %c0_42, %c16_43] : memref<1x128x64xbf16, #tpu.memory_space<vmem>>, vector<1x128x16xbf16>
    %62 = vector.shape_cast %61 : vector<1x128x16xbf16> to vector<128x16xbf16>
    %cst_44 = arith.constant dense<0.000000e+00> : vector<16x128xf32>
    %63 = tpu.matmul %58, %60, %cst_44 {dimension_numbers = #tpu.dot_dimension_numbers<[1], [1], [0], [0], [0, 0, 1, 0], [], []>} : vector<16x16xbf16>, vector<128x16xbf16>, vector<16x128xf32> -> vector<16x128xf32>
    %cst_45 = arith.constant 2.500000e-01 : f32
    %64 = vector.broadcast %cst_45 : f32 to vector<16x128xf32>
    %65 = arith.mulf %63, %64 : vector<16x128xf32>
    %c0_46 = arith.constant 0 : index
    %c1 = arith.constant 1 : index
    %c0_47 = arith.constant 0 : index
    %c0_48 = arith.constant 0 : index
    %66 = vector.load %arg7[%c0_46, %c1, %c0_47, %c0_48] : memref<1x4x16x128xf32, #tpu.memory_space<vmem>>, vector<1x1x16x128xf32>
    %67 = vector.shape_cast %66 : vector<1x1x16x128xf32> to vector<16x128xf32>
    %68 = vector.shape_cast %65 : vector<16x128xf32> to vector<1x1x16x128xf32>
    tpu.vector_store %arg7[%c0_46, %c1, %c0_47, %c0_48], %68 {strides = array<i32>} : memref<1x4x16x128xf32, #tpu.memory_space<vmem>>, vector<1x1x16x128xf32>,
    %c8_i32_49 = arith.constant 8 : i32
    %69 = vector.broadcast %c8_i32_49 : i32 to vector<1x128xi32>
    %70 = arith.cmpi slt, %6, %69 : vector<1x128xi32>
    %cst_50 = arith.constant -1.000000e+30 : f32
    %71 = vector.shape_cast %70 : vector<1x128xi1> to vector<1x128xi1>
    %72 = vector.broadcast %71 : vector<1x128xi1> to vector<16x128xi1>
    %73 = vector.broadcast %cst_50 : f32 to vector<16x128xf32>
    %74 = arith.select %72, %65, %73 : vector<16x128xi1>, vector<16x128xf32>
    %c1_51 = arith.constant 1 : index
    %c0_52 = arith.constant 0 : index
    %c0_53 = arith.constant 0 : index
    %75 = vector.load %arg8[%c1_51, %c0_52, %c0_53] : memref<4x16x1xf32, #tpu.memory_space<vmem>>, vector<1x16x1xf32>
    %76 = vector.shape_cast %75 : vector<1x16x1xf32> to vector<16x1xf32>
    %cst_54 = arith.constant dense<0xFF800000> : vector<16xf32>
    %77 = vector.multi_reduction <maximumf>, %74, %cst_54 [1] : vector<16x128xf32> to vector<16xf32>
    %78 = vector.shape_cast %77 : vector<16xf32> to vector<16x1xf32>
    %79 = arith.maximumf %76, %78 : vector<16x1xf32>
    %80 = arith.subf %76, %79 : vector<16x1xf32>
    %81 = math.exp %80 : vector<16x1xf32>
    %82 = vector.broadcast %79 : vector<16x1xf32> to vector<16x128xf32>
    %83 = arith.subf %74, %82 : vector<16x128xf32>
    %84 = math.exp %83 : vector<16x128xf32>
    %c1_55 = arith.constant 1 : index
    %c0_56 = arith.constant 0 : index
    %c0_57 = arith.constant 0 : index
    %85 = vector.load %arg9[%c1_55, %c0_56, %c0_57] : memref<4x16x1xf32, #tpu.memory_space<vmem>>, vector<1x16x1xf32>
    %86 = vector.shape_cast %85 : vector<1x16x1xf32> to vector<16x1xf32>
    %87 = arith.mulf %81, %86 : vector<16x1xf32>
    %cst_58 = arith.constant dense<0.000000e+00> : vector<16xf32>
    %88 = vector.multi_reduction <add>, %84, %cst_58 [1] : vector<16x128xf32> to vector<16xf32>
    %89 = vector.shape_cast %88 : vector<16xf32> to vector<16x1xf32>
    %90 = arith.addf %87, %89 : vector<16x1xf32>
    %c1_59 = arith.constant 1 : index
    %c0_60 = arith.constant 0 : index
    %c0_61 = arith.constant 0 : index
    %91 = vector.load %arg9[%c1_59, %c0_60, %c0_61] : memref<4x16x1xf32, #tpu.memory_space<vmem>>, vector<1x16x1xf32>
    %92 = vector.shape_cast %91 : vector<1x16x1xf32> to vector<16x1xf32>
    %93 = vector.shape_cast %90 : vector<16x1xf32> to vector<1x16x1xf32>
    tpu.vector_store %arg9[%c1_59, %c0_60, %c0_61], %93 {strides = array<i32>} : memref<4x16x1xf32, #tpu.memory_space<vmem>>, vector<1x16x1xf32>,
    %c1_62 = arith.constant 1 : index
    %c0_63 = arith.constant 0 : index
    %c0_64 = arith.constant 0 : index
    %94 = vector.load %arg10[%c1_62, %c0_63, %c0_64] : memref<4x16x16xf32, #tpu.memory_space<vmem>>, vector<1x16x16xf32>
    %95 = vector.shape_cast %94 : vector<1x16x16xf32> to vector<16x16xf32>
    %96 = vector.broadcast %81 : vector<16x1xf32> to vector<16x16xf32>
    %97 = arith.mulf %96, %95 : vector<16x16xf32>
    %98 = arith.truncf %84 : vector<16x128xf32> to vector<16x128xbf16>
    %cst_65 = arith.constant dense<0.000000e+00> : vector<16x16xf32>
    %99 = tpu.matmul %98, %62, %cst_65 {dimension_numbers = #tpu.dot_dimension_numbers<[1], [0], [0], [1], [0, 0, 1, 1], [], []>} : vector<16x128xbf16>, vector<128x16xbf16>, vector<16x16xf32> -> vector<16x16xf32>
    %100 = arith.addf %97, %99 : vector<16x16xf32>
    %c1_66 = arith.constant 1 : index
    %c0_67 = arith.constant 0 : index
    %c0_68 = arith.constant 0 : index
    %101 = vector.load %arg10[%c1_66, %c0_67, %c0_68] : memref<4x16x16xf32, #tpu.memory_space<vmem>>, vector<1x16x16xf32>
    %102 = vector.shape_cast %101 : vector<1x16x16xf32> to vector<16x16xf32>
    %103 = vector.shape_cast %100 : vector<16x16xf32> to vector<1x16x16xf32>
    tpu.vector_store %arg10[%c1_66, %c0_67, %c0_68], %103 {strides = array<i32>} : memref<4x16x16xf32, #tpu.memory_space<vmem>>, vector<1x16x16xf32>,
    %c1_69 = arith.constant 1 : index
    %c0_70 = arith.constant 0 : index
    %c0_71 = arith.constant 0 : index
    %104 = vector.load %arg8[%c1_69, %c0_70, %c0_71] : memref<4x16x1xf32, #tpu.memory_space<vmem>>, vector<1x16x1xf32>
    %105 = vector.shape_cast %104 : vector<1x16x1xf32> to vector<16x1xf32>
    %106 = vector.shape_cast %79 : vector<16x1xf32> to vector<1x16x1xf32>
    tpu.vector_store %arg8[%c1_69, %c0_70, %c0_71], %106 {strides = array<i32>} : memref<4x16x1xf32, #tpu.memory_space<vmem>>, vector<1x16x1xf32>,
    %c0_72 = arith.constant 0 : index
    %c0_73 = arith.constant 0 : index
    %c32 = arith.constant 32 : index
    %107 = vector.load %arg3[%c0_72, %c0_73, %c32] : memref<1x16x64xbf16, #tpu.memory_space<vmem>>, vector<1x16x16xbf16>
    %108 = vector.shape_cast %107 : vector<1x16x16xbf16> to vector<16x16xbf16>
    %c0_74 = arith.constant 0 : index
    %c0_75 = arith.constant 0 : index
    %c32_76 = arith.constant 32 : index
    %109 = vector.load %arg4[%c0_74, %c0_75, %c32_76] : memref<1x128x64xbf16, #tpu.memory_space<vmem>>, vector<1x128x16xbf16>
    %110 = vector.shape_cast %109 : vector<1x128x16xbf16> to vector<128x16xbf16>
    %c0_77 = arith.constant 0 : index
    %c0_78 = arith.constant 0 : index
    %c32_79 = arith.constant 32 : index
    %111 = vector.load %arg5[%c0_77, %c0_78, %c32_79] : memref<1x128x64xbf16, #tpu.memory_space<vmem>>, vector<1x128x16xbf16>
    %112 = vector.shape_cast %111 : vector<1x128x16xbf16> to vector<128x16xbf16>
    %cst_80 = arith.constant dense<0.000000e+00> : vector<16x128xf32>
    %113 = tpu.matmul %108, %110, %cst_80 {dimension_numbers = #tpu.dot_dimension_numbers<[1], [1], [0], [0], [0, 0, 1, 0], [], []>} : vector<16x16xbf16>, vector<128x16xbf16>, vector<16x128xf32> -> vector<16x128xf32>
    %cst_81 = arith.constant 2.500000e-01 : f32
    %114 = vector.broadcast %cst_81 : f32 to vector<16x128xf32>
    %115 = arith.mulf %113, %114 : vector<16x128xf32>
    %c0_82 = arith.constant 0 : index
    %c2 = arith.constant 2 : index
    %c0_83 = arith.constant 0 : index
    %c0_84 = arith.constant 0 : index
    %116 = vector.load %arg7[%c0_82, %c2, %c0_83, %c0_84] : memref<1x4x16x128xf32, #tpu.memory_space<vmem>>, vector<1x1x16x128xf32>
    %117 = vector.shape_cast %116 : vector<1x1x16x128xf32> to vector<16x128xf32>
    %118 = vector.shape_cast %115 : vector<16x128xf32> to vector<1x1x16x128xf32>
    tpu.vector_store %arg7[%c0_82, %c2, %c0_83, %c0_84], %118 {strides = array<i32>} : memref<1x4x16x128xf32, #tpu.memory_space<vmem>>, vector<1x1x16x128xf32>,
    %c8_i32_85 = arith.constant 8 : i32
    %119 = vector.broadcast %c8_i32_85 : i32 to vector<1x128xi32>
    %120 = arith.cmpi slt, %6, %119 : vector<1x128xi32>
    %cst_86 = arith.constant -1.000000e+30 : f32
    %121 = vector.shape_cast %120 : vector<1x128xi1> to vector<1x128xi1>
    %122 = vector.broadcast %121 : vector<1x128xi1> to vector<16x128xi1>
    %123 = vector.broadcast %cst_86 : f32 to vector<16x128xf32>
    %124 = arith.select %122, %115, %123 : vector<16x128xi1>, vector<16x128xf32>
    %c2_87 = arith.constant 2 : index
    %c0_88 = arith.constant 0 : index
    %c0_89 = arith.constant 0 : index
    %125 = vector.load %arg8[%c2_87, %c0_88, %c0_89] : memref<4x16x1xf32, #tpu.memory_space<vmem>>, vector<1x16x1xf32>
    %126 = vector.shape_cast %125 : vector<1x16x1xf32> to vector<16x1xf32>
    %cst_90 = arith.constant dense<0xFF800000> : vector<16xf32>
    %127 = vector.multi_reduction <maximumf>, %124, %cst_90 [1] : vector<16x128xf32> to vector<16xf32>
    %128 = vector.shape_cast %127 : vector<16xf32> to vector<16x1xf32>
    %129 = arith.maximumf %126, %128 : vector<16x1xf32>
    %130 = arith.subf %126, %129 : vector<16x1xf32>
    %131 = math.exp %130 : vector<16x1xf32>
    %132 = vector.broadcast %129 : vector<16x1xf32> to vector<16x128xf32>
    %133 = arith.subf %124, %132 : vector<16x128xf32>
    %134 = math.exp %133 : vector<16x128xf32>
    %c2_91 = arith.constant 2 : index
    %c0_92 = arith.constant 0 : index
    %c0_93 = arith.constant 0 : index
    %135 = vector.load %arg9[%c2_91, %c0_92, %c0_93] : memref<4x16x1xf32, #tpu.memory_space<vmem>>, vector<1x16x1xf32>
    %136 = vector.shape_cast %135 : vector<1x16x1xf32> to vector<16x1xf32>
    %137 = arith.mulf %131, %136 : vector<16x1xf32>
    %cst_94 = arith.constant dense<0.000000e+00> : vector<16xf32>
    %138 = vector.multi_reduction <add>, %134, %cst_94 [1] : vector<16x128xf32> to vector<16xf32>
    %139 = vector.shape_cast %138 : vector<16xf32> to vector<16x1xf32>
    %140 = arith.addf %137, %139 : vector<16x1xf32>
    %c2_95 = arith.constant 2 : index
    %c0_96 = arith.constant 0 : index
    %c0_97 = arith.constant 0 : index
    %141 = vector.load %arg9[%c2_95, %c0_96, %c0_97] : memref<4x16x1xf32, #tpu.memory_space<vmem>>, vector<1x16x1xf32>
    %142 = vector.shape_cast %141 : vector<1x16x1xf32> to vector<16x1xf32>
    %143 = vector.shape_cast %140 : vector<16x1xf32> to vector<1x16x1xf32>
    tpu.vector_store %arg9[%c2_95, %c0_96, %c0_97], %143 {strides = array<i32>} : memref<4x16x1xf32, #tpu.memory_space<vmem>>, vector<1x16x1xf32>,
    %c2_98 = arith.constant 2 : index
    %c0_99 = arith.constant 0 : index
    %c0_100 = arith.constant 0 : index
    %144 = vector.load %arg10[%c2_98, %c0_99, %c0_100] : memref<4x16x16xf32, #tpu.memory_space<vmem>>, vector<1x16x16xf32>
    %145 = vector.shape_cast %144 : vector<1x16x16xf32> to vector<16x16xf32>
    %146 = vector.broadcast %131 : vector<16x1xf32> to vector<16x16xf32>
    %147 = arith.mulf %146, %145 : vector<16x16xf32>
    %148 = arith.truncf %134 : vector<16x128xf32> to vector<16x128xbf16>
    %cst_101 = arith.constant dense<0.000000e+00> : vector<16x16xf32>
    %149 = tpu.matmul %148, %112, %cst_101 {dimension_numbers = #tpu.dot_dimension_numbers<[1], [0], [0], [1], [0, 0, 1, 1], [], []>} : vector<16x128xbf16>, vector<128x16xbf16>, vector<16x16xf32> -> vector<16x16xf32>
    %150 = arith.addf %147, %149 : vector<16x16xf32>
    %c2_102 = arith.constant 2 : index
    %c0_103 = arith.constant 0 : index
    %c0_104 = arith.constant 0 : index
    %151 = vector.load %arg10[%c2_102, %c0_103, %c0_104] : memref<4x16x16xf32, #tpu.memory_space<vmem>>, vector<1x16x16xf32>
    %152 = vector.shape_cast %151 : vector<1x16x16xf32> to vector<16x16xf32>
    %153 = vector.shape_cast %150 : vector<16x16xf32> to vector<1x16x16xf32>
    tpu.vector_store %arg10[%c2_102, %c0_103, %c0_104], %153 {strides = array<i32>} : memref<4x16x16xf32, #tpu.memory_space<vmem>>, vector<1x16x16xf32>,
    %c2_105 = arith.constant 2 : index
    %c0_106 = arith.constant 0 : index
    %c0_107 = arith.constant 0 : index
    %154 = vector.load %arg8[%c2_105, %c0_106, %c0_107] : memref<4x16x1xf32, #tpu.memory_space<vmem>>, vector<1x16x1xf32>
    %155 = vector.shape_cast %154 : vector<1x16x1xf32> to vector<16x1xf32>
    %156 = vector.shape_cast %129 : vector<16x1xf32> to vector<1x16x1xf32>
    tpu.vector_store %arg8[%c2_105, %c0_106, %c0_107], %156 {strides = array<i32>} : memref<4x16x1xf32, #tpu.memory_space<vmem>>, vector<1x16x1xf32>,
    %c0_108 = arith.constant 0 : index
    %c0_109 = arith.constant 0 : index
    %c48 = arith.constant 48 : index
    %157 = vector.load %arg3[%c0_108, %c0_109, %c48] : memref<1x16x64xbf16, #tpu.memory_space<vmem>>, vector<1x16x16xbf16>
    %158 = vector.shape_cast %157 : vector<1x16x16xbf16> to vector<16x16xbf16>
    %c0_110 = arith.constant 0 : index
    %c0_111 = arith.constant 0 : index
    %c48_112 = arith.constant 48 : index
    %159 = vector.load %arg4[%c0_110, %c0_111, %c48_112] : memref<1x128x64xbf16, #tpu.memory_space<vmem>>, vector<1x128x16xbf16>
    %160 = vector.shape_cast %159 : vector<1x128x16xbf16> to vector<128x16xbf16>
    %c0_113 = arith.constant 0 : index
    %c0_114 = arith.constant 0 : index
    %c48_115 = arith.constant 48 : index
    %161 = vector.load %arg5[%c0_113, %c0_114, %c48_115] : memref<1x128x64xbf16, #tpu.memory_space<vmem>>, vector<1x128x16xbf16>
    %162 = vector.shape_cast %161 : vector<1x128x16xbf16> to vector<128x16xbf16>
    %cst_116 = arith.constant dense<0.000000e+00> : vector<16x128xf32>
    %163 = tpu.matmul %158, %160, %cst_116 {dimension_numbers = #tpu.dot_dimension_numbers<[1], [1], [0], [0], [0, 0, 1, 0], [], []>} : vector<16x16xbf16>, vector<128x16xbf16>, vector<16x128xf32> -> vector<16x128xf32>
    %cst_117 = arith.constant 2.500000e-01 : f32
    %164 = vector.broadcast %cst_117 : f32 to vector<16x128xf32>
    %165 = arith.mulf %163, %164 : vector<16x128xf32>
    %c0_118 = arith.constant 0 : index
    %c3 = arith.constant 3 : index
    %c0_119 = arith.constant 0 : index
    %c0_120 = arith.constant 0 : index
    %166 = vector.load %arg7[%c0_118, %c3, %c0_119, %c0_120] : memref<1x4x16x128xf32, #tpu.memory_space<vmem>>, vector<1x1x16x128xf32>
    %167 = vector.shape_cast %166 : vector<1x1x16x128xf32> to vector<16x128xf32>
    %168 = vector.shape_cast %165 : vector<16x128xf32> to vector<1x1x16x128xf32>
    tpu.vector_store %arg7[%c0_118, %c3, %c0_119, %c0_120], %168 {strides = array<i32>} : memref<1x4x16x128xf32, #tpu.memory_space<vmem>>, vector<1x1x16x128xf32>,
    %c8_i32_121 = arith.constant 8 : i32
    %169 = vector.broadcast %c8_i32_121 : i32 to vector<1x128xi32>
    %170 = arith.cmpi slt, %6, %169 : vector<1x128xi32>
    %cst_122 = arith.constant -1.000000e+30 : f32
    %171 = vector.shape_cast %170 : vector<1x128xi1> to vector<1x128xi1>
    %172 = vector.broadcast %171 : vector<1x128xi1> to vector<16x128xi1>
    %173 = vector.broadcast %cst_122 : f32 to vector<16x128xf32>
    %174 = arith.select %172, %165, %173 : vector<16x128xi1>, vector<16x128xf32>
    %c3_123 = arith.constant 3 : index
    %c0_124 = arith.constant 0 : index
    %c0_125 = arith.constant 0 : index
    %175 = vector.load %arg8[%c3_123, %c0_124, %c0_125] : memref<4x16x1xf32, #tpu.memory_space<vmem>>, vector<1x16x1xf32>
    %176 = vector.shape_cast %175 : vector<1x16x1xf32> to vector<16x1xf32>
    %cst_126 = arith.constant dense<0xFF800000> : vector<16xf32>
    %177 = vector.multi_reduction <maximumf>, %174, %cst_126 [1] : vector<16x128xf32> to vector<16xf32>
    %178 = vector.shape_cast %177 : vector<16xf32> to vector<16x1xf32>
    %179 = arith.maximumf %176, %178 : vector<16x1xf32>
    %180 = arith.subf %176, %179 : vector<16x1xf32>
    %181 = math.exp %180 : vector<16x1xf32>
    %182 = vector.broadcast %179 : vector<16x1xf32> to vector<16x128xf32>
    %183 = arith.subf %174, %182 : vector<16x128xf32>
    %184 = math.exp %183 : vector<16x128xf32>
    %c3_127 = arith.constant 3 : index
    %c0_128 = arith.constant 0 : index
    %c0_129 = arith.constant 0 : index
    %185 = vector.load %arg9[%c3_127, %c0_128, %c0_129] : memref<4x16x1xf32, #tpu.memory_space<vmem>>, vector<1x16x1xf32>
    %186 = vector.shape_cast %185 : vector<1x16x1xf32> to vector<16x1xf32>
    %187 = arith.mulf %181, %186 : vector<16x1xf32>
    %cst_130 = arith.constant dense<0.000000e+00> : vector<16xf32>
    %188 = vector.multi_reduction <add>, %184, %cst_130 [1] : vector<16x128xf32> to vector<16xf32>
    %189 = vector.shape_cast %188 : vector<16xf32> to vector<16x1xf32>
    %190 = arith.addf %187, %189 : vector<16x1xf32>
    %c3_131 = arith.constant 3 : index
    %c0_132 = arith.constant 0 : index
    %c0_133 = arith.constant 0 : index
    %191 = vector.load %arg9[%c3_131, %c0_132, %c0_133] : memref<4x16x1xf32, #tpu.memory_space<vmem>>, vector<1x16x1xf32>
    %192 = vector.shape_cast %191 : vector<1x16x1xf32> to vector<16x1xf32>
    %193 = vector.shape_cast %190 : vector<16x1xf32> to vector<1x16x1xf32>
    tpu.vector_store %arg9[%c3_131, %c0_132, %c0_133], %193 {strides = array<i32>} : memref<4x16x1xf32, #tpu.memory_space<vmem>>, vector<1x16x1xf32>,
    %c3_134 = arith.constant 3 : index
    %c0_135 = arith.constant 0 : index
    %c0_136 = arith.constant 0 : index
    %194 = vector.load %arg10[%c3_134, %c0_135, %c0_136] : memref<4x16x16xf32, #tpu.memory_space<vmem>>, vector<1x16x16xf32>
    %195 = vector.shape_cast %194 : vector<1x16x16xf32> to vector<16x16xf32>
    %196 = vector.broadcast %181 : vector<16x1xf32> to vector<16x16xf32>
    %197 = arith.mulf %196, %195 : vector<16x16xf32>
    %198 = arith.truncf %184 : vector<16x128xf32> to vector<16x128xbf16>
    %cst_137 = arith.constant dense<0.000000e+00> : vector<16x16xf32>
    %199 = tpu.matmul %198, %162, %cst_137 {dimension_numbers = #tpu.dot_dimension_numbers<[1], [0], [0], [1], [0, 0, 1, 1], [], []>} : vector<16x128xbf16>, vector<128x16xbf16>, vector<16x16xf32> -> vector<16x16xf32>
    %200 = arith.addf %197, %199 : vector<16x16xf32>
    %c3_138 = arith.constant 3 : index
    %c0_139 = arith.constant 0 : index
    %c0_140 = arith.constant 0 : index
    %201 = vector.load %arg10[%c3_138, %c0_139, %c0_140] : memref<4x16x16xf32, #tpu.memory_space<vmem>>, vector<1x16x16xf32>
    %202 = vector.shape_cast %201 : vector<1x16x16xf32> to vector<16x16xf32>
    %203 = vector.shape_cast %200 : vector<16x16xf32> to vector<1x16x16xf32>
    tpu.vector_store %arg10[%c3_138, %c0_139, %c0_140], %203 {strides = array<i32>} : memref<4x16x16xf32, #tpu.memory_space<vmem>>, vector<1x16x16xf32>,
    %c3_141 = arith.constant 3 : index
    %c0_142 = arith.constant 0 : index
    %c0_143 = arith.constant 0 : index
    %204 = vector.load %arg8[%c3_141, %c0_142, %c0_143] : memref<4x16x1xf32, #tpu.memory_space<vmem>>, vector<1x16x1xf32>
    %205 = vector.shape_cast %204 : vector<1x16x1xf32> to vector<16x1xf32>
    %206 = vector.shape_cast %179 : vector<16x1xf32> to vector<1x16x1xf32>
    tpu.vector_store %arg8[%c3_141, %c0_142, %c0_143], %206 {strides = array<i32>} : memref<4x16x1xf32, #tpu.memory_space<vmem>>, vector<1x16x1xf32>,
    %c0_i32_144 = arith.constant 0 : i32
    %207 = arith.cmpi eq, %arg2, %c0_i32_144 : i32
    %208 = arith.extui %207 : i1 to i32
    %c0_i32_145 = arith.constant 0 : i32
    %209 = arith.cmpi ne, %208, %c0_i32_145 : i32
    scf.if %209 {
      %c0_146 = arith.constant 0 : index
      %c0_147 = arith.constant 0 : index
      %c0_148 = arith.constant 0 : index
      %210 = vector.load %arg9[%c0_146, %c0_147, %c0_148] : memref<4x16x1xf32, #tpu.memory_space<vmem>>, vector<1x16x1xf32>
      %211 = vector.shape_cast %210 : vector<1x16x1xf32> to vector<16x1xf32>
      %212 = tpu.reciprocal %211 : vector<16x1xf32> -> vector<16x1xf32>
      %c0_149 = arith.constant 0 : index
      %c0_150 = arith.constant 0 : index
      %c0_151 = arith.constant 0 : index
      %213 = vector.load %arg10[%c0_149, %c0_150, %c0_151] : memref<4x16x16xf32, #tpu.memory_space<vmem>>, vector<1x16x16xf32>
      %214 = vector.shape_cast %213 : vector<1x16x16xf32> to vector<16x16xf32>
      %215 = vector.broadcast %212 : vector<16x1xf32> to vector<16x16xf32>
      %216 = arith.mulf %214, %215 : vector<16x16xf32>
      %217 = arith.truncf %216 : vector<16x16xf32> to vector<16x16xbf16>
      %c0_152 = arith.constant 0 : index
      %c0_153 = arith.constant 0 : index
      %c0_154 = arith.constant 0 : index
      %218 = vector.load %arg6[%c0_152, %c0_153, %c0_154] : memref<1x16x64xbf16, #tpu.memory_space<vmem>>, vector<1x16x16xbf16>
      %219 = vector.shape_cast %218 : vector<1x16x16xbf16> to vector<16x16xbf16>
      %220 = vector.shape_cast %217 : vector<16x16xbf16> to vector<1x16x16xbf16>
      tpu.vector_store %arg6[%c0_152, %c0_153, %c0_154], %220 {strides = array<i32>} : memref<1x16x64xbf16, #tpu.memory_space<vmem>>, vector<1x16x16xbf16>,
      %c1_155 = arith.constant 1 : index
      %c0_156 = arith.constant 0 : index
      %c0_157 = arith.constant 0 : index
      %221 = vector.load %arg9[%c1_155, %c0_156, %c0_157] : memref<4x16x1xf32, #tpu.memory_space<vmem>>, vector<1x16x1xf32>
      %222 = vector.shape_cast %221 : vector<1x16x1xf32> to vector<16x1xf32>
      %223 = tpu.reciprocal %222 : vector<16x1xf32> -> vector<16x1xf32>
      %c1_158 = arith.constant 1 : index
      %c0_159 = arith.constant 0 : index
      %c0_160 = arith.constant 0 : index
      %224 = vector.load %arg10[%c1_158, %c0_159, %c0_160] : memref<4x16x16xf32, #tpu.memory_space<vmem>>, vector<1x16x16xf32>
      %225 = vector.shape_cast %224 : vector<1x16x16xf32> to vector<16x16xf32>
      %226 = vector.broadcast %223 : vector<16x1xf32> to vector<16x16xf32>
      %227 = arith.mulf %225, %226 : vector<16x16xf32>
      %228 = arith.truncf %227 : vector<16x16xf32> to vector<16x16xbf16>
      %c0_161 = arith.constant 0 : index
      %c0_162 = arith.constant 0 : index
      %c16_163 = arith.constant 16 : index
      %229 = vector.load %arg6[%c0_161, %c0_162, %c16_163] : memref<1x16x64xbf16, #tpu.memory_space<vmem>>, vector<1x16x16xbf16>
      %230 = vector.shape_cast %229 : vector<1x16x16xbf16> to vector<16x16xbf16>
      %231 = vector.shape_cast %228 : vector<16x16xbf16> to vector<1x16x16xbf16>
      tpu.vector_store %arg6[%c0_161, %c0_162, %c16_163], %231 {strides = array<i32>} : memref<1x16x64xbf16, #tpu.memory_space<vmem>>, vector<1x16x16xbf16>,
      %c2_164 = arith.constant 2 : index
      %c0_165 = arith.constant 0 : index
      %c0_166 = arith.constant 0 : index
      %232 = vector.load %arg9[%c2_164, %c0_165, %c0_166] : memref<4x16x1xf32, #tpu.memory_space<vmem>>, vector<1x16x1xf32>
      %233 = vector.shape_cast %232 : vector<1x16x1xf32> to vector<16x1xf32>
      %234 = tpu.reciprocal %233 : vector<16x1xf32> -> vector<16x1xf32>
      %c2_167 = arith.constant 2 : index
      %c0_168 = arith.constant 0 : index
      %c0_169 = arith.constant 0 : index
      %235 = vector.load %arg10[%c2_167, %c0_168, %c0_169] : memref<4x16x16xf32, #tpu.memory_space<vmem>>, vector<1x16x16xf32>
      %236 = vector.shape_cast %235 : vector<1x16x16xf32> to vector<16x16xf32>
      %237 = vector.broadcast %234 : vector<16x1xf32> to vector<16x16xf32>
      %238 = arith.mulf %236, %237 : vector<16x16xf32>
      %239 = arith.truncf %238 : vector<16x16xf32> to vector<16x16xbf16>
      %c0_170 = arith.constant 0 : index
      %c0_171 = arith.constant 0 : index
      %c32_172 = arith.constant 32 : index
      %240 = vector.load %arg6[%c0_170, %c0_171, %c32_172] : memref<1x16x64xbf16, #tpu.memory_space<vmem>>, vector<1x16x16xbf16>
      %241 = vector.shape_cast %240 : vector<1x16x16xbf16> to vector<16x16xbf16>
      %242 = vector.shape_cast %239 : vector<16x16xbf16> to vector<1x16x16xbf16>
      tpu.vector_store %arg6[%c0_170, %c0_171, %c32_172], %242 {strides = array<i32>} : memref<1x16x64xbf16, #tpu.memory_space<vmem>>, vector<1x16x16xbf16>,
      %c3_173 = arith.constant 3 : index
      %c0_174 = arith.constant 0 : index
      %c0_175 = arith.constant 0 : index
      %243 = vector.load %arg9[%c3_173, %c0_174, %c0_175] : memref<4x16x1xf32, #tpu.memory_space<vmem>>, vector<1x16x1xf32>
      %244 = vector.shape_cast %243 : vector<1x16x1xf32> to vector<16x1xf32>
      %245 = tpu.reciprocal %244 : vector<16x1xf32> -> vector<16x1xf32>
      %c3_176 = arith.constant 3 : index
      %c0_177 = arith.constant 0 : index
      %c0_178 = arith.constant 0 : index
      %246 = vector.load %arg10[%c3_176, %c0_177, %c0_178] : memref<4x16x16xf32, #tpu.memory_space<vmem>>, vector<1x16x16xf32>
      %247 = vector.shape_cast %246 : vector<1x16x16xf32> to vector<16x16xf32>
      %248 = vector.broadcast %245 : vector<16x1xf32> to vector<16x16xf32>
      %249 = arith.mulf %247, %248 : vector<16x16xf32>
      %250 = arith.truncf %249 : vector<16x16xf32> to vector<16x16xbf16>
      %c0_179 = arith.constant 0 : index
      %c0_180 = arith.constant 0 : index
      %c48_181 = arith.constant 48 : index
      %251 = vector.load %arg6[%c0_179, %c0_180, %c48_181] : memref<1x16x64xbf16, #tpu.memory_space<vmem>>, vector<1x16x16xbf16>
      %252 = vector.shape_cast %251 : vector<1x16x16xbf16> to vector<16x16xbf16>
      %253 = vector.shape_cast %250 : vector<16x16xbf16> to vector<1x16x16xbf16>
      tpu.vector_store %arg6[%c0_179, %c0_180, %c48_181], %253 {strides = array<i32>} : memref<1x16x64xbf16, #tpu.memory_space<vmem>>, vector<1x16x16xbf16>,
    } else {
    }
    return
  }
  func.func @transform_0(%arg0: i32, %arg1: i32, %arg2: i32) -> (i32, i32, i32) {
    %c0_i32 = arith.constant 0 : i32
    %c0_i32_0 = arith.constant 0 : i32
    return %arg0, %arg1, %c0_i32 : i32, i32, i32
  }
  func.func @transform_1(%arg0: i32, %arg1: i32, %arg2: i32) -> (i32, i32, i32) {
    %c0_i32 = arith.constant 0 : i32
    %c0_i32_0 = arith.constant 0 : i32
    return %arg0, %arg2, %c0_i32 : i32, i32, i32
  }
  func.func @transform_2(%arg0: i32, %arg1: i32, %arg2: i32) -> (i32, i32, i32) {
    %c0_i32 = arith.constant 0 : i32
    %c0_i32_0 = arith.constant 0 : i32
    return %arg0, %arg2, %c0_i32 : i32, i32, i32
  }
  func.func @transform_3(%arg0: i32, %arg1: i32, %arg2: i32) -> (i32, i32, i32) {
    %c0_i32 = arith.constant 0 : i32
    %c0_i32_0 = arith.constant 0 : i32
    return %arg0, %arg1, %c0_i32 : i32, i32, i32
  }
  func.func @transform_4(%arg0: i32, %arg1: i32, %arg2: i32) -> (i32, i32, i32, i32) {
    %c0_i32 = arith.constant 0 : i32
    %c0_i32_0 = arith.constant 0 : i32
    return %arg0, %c0_i32, %arg1, %arg2 : i32, i32, i32, i32
  }
}

module attributes {stable_mosaic.version = 11 : i64} {
  func.func @_moe_linear_kernel(%arg0: i32, %arg1: i32, %arg2: i32, %arg3: memref<16x128xbf16, #tpu.memory_space<vmem>>, %arg4: memref<128x128xbf16, #tpu.memory_space<vmem>>, %arg5: memref<1x128xf32, #tpu.memory_space<vmem>>, %arg6: memref<16x128xbf16, #tpu.memory_space<vmem>>, %arg7: memref<128x128xbf16, #tpu.memory_space<vmem>>, %arg8: memref<16x128xbf16, #tpu.memory_space<vmem>>, %arg9: memref<16x128xf32, #tpu.memory_space<vmem>>) attributes {dimension_semantics = [#tpu.dimension_semantics<parallel>, #tpu.dimension_semantics<parallel>, #tpu.dimension_semantics<arbitrary>], iteration_bounds = array<i64: 1, 1, 1>, scalar_prefetch = 0 : i64, scratch_operands = 1 : i64, tpu.core_type = #tpu.core_type<tc>, window_params = [{transform_indices = @transform_0, window_bounds = array<i64: 16, 128>}, {transform_indices = @transform_1, window_bounds = array<i64: 128, 128>}, {transform_indices = @transform_2, window_bounds = array<i64: 1, 128>}, {transform_indices = @transform_3, window_bounds = array<i64: 16, 128>}, {transform_indices = @transform_4, window_bounds = array<i64: 128, 128>}, {transform_indices = @transform_5, window_bounds = array<i64: 16, 128>}]} {
    %c0_i32 = arith.constant 0 : i32
    %0 = arith.cmpi eq, %arg2, %c0_i32 : i32
    %1 = arith.extui %0 : i1 to i32
    %c0_i32_0 = arith.constant 0 : i32
    %2 = arith.cmpi ne, %1, %c0_i32_0 : i32
    scf.if %2 {
      %cst_10 = arith.constant 0.000000e+00 : f32
      %12 = vector.broadcast %cst_10 : f32 to vector<16x128xf32>
      %c0_11 = arith.constant 0 : index
      %c0_12 = arith.constant 0 : index
      %13 = vector.load %arg9[%c0_11, %c0_12] : memref<16x128xf32, #tpu.memory_space<vmem>>, vector<16x128xf32>
      tpu.vector_store %arg9[%c0_11, %c0_12], %12 {strides = array<i32>} : memref<16x128xf32, #tpu.memory_space<vmem>>, vector<16x128xf32>,
    } else {
    }
    %c0 = arith.constant 0 : index
    %c0_1 = arith.constant 0 : index
    %3 = vector.load %arg9[%c0, %c0_1] : memref<16x128xf32, #tpu.memory_space<vmem>>, vector<16x128xf32>
    %c0_2 = arith.constant 0 : index
    %c0_3 = arith.constant 0 : index
    %4 = vector.load %arg3[%c0_2, %c0_3] : memref<16x128xbf16, #tpu.memory_space<vmem>>, vector<16x128xbf16>
    %c0_4 = arith.constant 0 : index
    %c0_5 = arith.constant 0 : index
    %5 = vector.load %arg4[%c0_4, %c0_5] : memref<128x128xbf16, #tpu.memory_space<vmem>>, vector<128x128xbf16>
    %cst = arith.constant dense<0.000000e+00> : vector<16x128xf32>
    %6 = tpu.matmul %4, %5, %cst {dimension_numbers = #tpu.dot_dimension_numbers<[1], [0], [0], [1], [0, 0, 1, 1], [], []>} : vector<16x128xbf16>, vector<128x128xbf16>, vector<16x128xf32> -> vector<16x128xf32>
    %7 = arith.addf %3, %6 : vector<16x128xf32>
    %c0_6 = arith.constant 0 : index
    %c0_7 = arith.constant 0 : index
    %8 = vector.load %arg9[%c0_6, %c0_7] : memref<16x128xf32, #tpu.memory_space<vmem>>, vector<16x128xf32>
    tpu.vector_store %arg9[%c0_6, %c0_7], %7 {strides = array<i32>} : memref<16x128xf32, #tpu.memory_space<vmem>>, vector<16x128xf32>,
    %c0_i32_8 = arith.constant 0 : i32
    %9 = arith.cmpi eq, %arg2, %c0_i32_8 : i32
    %10 = arith.extui %9 : i1 to i32
    %c0_i32_9 = arith.constant 0 : i32
    %11 = arith.cmpi ne, %10, %c0_i32_9 : i32
    scf.if %11 {
      %c0_10 = arith.constant 0 : index
      %c0_11 = arith.constant 0 : index
      %12 = vector.load %arg6[%c0_10, %c0_11] : memref<16x128xbf16, #tpu.memory_space<vmem>>, vector<16x128xbf16>
      %c0_12 = arith.constant 0 : index
      %c0_13 = arith.constant 0 : index
      %13 = vector.load %arg7[%c0_12, %c0_13] : memref<128x128xbf16, #tpu.memory_space<vmem>>, vector<128x128xbf16>
      %cst_14 = arith.constant dense<0.000000e+00> : vector<16x128xf32>
      %14 = tpu.matmul %12, %13, %cst_14 {dimension_numbers = #tpu.dot_dimension_numbers<[1], [0], [0], [1], [0, 0, 1, 1], [], []>} : vector<16x128xbf16>, vector<128x128xbf16>, vector<16x128xf32> -> vector<16x128xf32>
      %c0_15 = arith.constant 0 : index
      %c0_16 = arith.constant 0 : index
      %15 = vector.load %arg9[%c0_15, %c0_16] : memref<16x128xf32, #tpu.memory_space<vmem>>, vector<16x128xf32>
      %c0_17 = arith.constant 0 : index
      %c0_18 = arith.constant 0 : index
      %16 = vector.load %arg5[%c0_17, %c0_18] : memref<1x128xf32, #tpu.memory_space<vmem>>, vector<1x128xf32>
      %17 = vector.broadcast %16 : vector<1x128xf32> to vector<16x128xf32>
      %18 = arith.addf %15, %17 : vector<16x128xf32>
      %19 = arith.addf %18, %14 : vector<16x128xf32>
      %20 = arith.truncf %19 : vector<16x128xf32> to vector<16x128xbf16>
      %c0_19 = arith.constant 0 : index
      %c0_20 = arith.constant 0 : index
      %21 = vector.load %arg8[%c0_19, %c0_20] : memref<16x128xbf16, #tpu.memory_space<vmem>>, vector<16x128xbf16>
      tpu.vector_store %arg8[%c0_19, %c0_20], %20 {strides = array<i32>} : memref<16x128xbf16, #tpu.memory_space<vmem>>, vector<16x128xbf16>,
    } else {
    }
    return
  }
  func.func @transform_0(%arg0: i32, %arg1: i32, %arg2: i32) -> (i32, i32) {
    %c0_i32 = arith.constant 0 : i32
    return %arg0, %arg2 : i32, i32
  }
  func.func @transform_1(%arg0: i32, %arg1: i32, %arg2: i32) -> (i32, i32) {
    %c0_i32 = arith.constant 0 : i32
    return %arg2, %arg1 : i32, i32
  }
  func.func @transform_2(%arg0: i32, %arg1: i32, %arg2: i32) -> (i32, i32) {
    %c0_i32 = arith.constant 0 : i32
    %c0_i32_0 = arith.constant 0 : i32
    return %c0_i32, %arg1 : i32, i32
  }
  func.func @transform_3(%arg0: i32, %arg1: i32, %arg2: i32) -> (i32, i32) {
    %c0_i32 = arith.constant 0 : i32
    %c0_i32_0 = arith.constant 0 : i32
    return %arg0, %c0_i32 : i32, i32
  }
  func.func @transform_4(%arg0: i32, %arg1: i32, %arg2: i32) -> (i32, i32) {
    %c0_i32 = arith.constant 0 : i32
    %c0_i32_0 = arith.constant 0 : i32
    return %c0_i32, %arg1 : i32, i32
  }
  func.func @transform_5(%arg0: i32, %arg1: i32, %arg2: i32) -> (i32, i32) {
    %c0_i32 = arith.constant 0 : i32
    return %arg0, %arg1 : i32, i32
  }
}

</mosaic_0001>

<llo_original>
// kernel: mha_forward.12
$region0: #{mha_forward.12}
  #allocation0 [shape = 'u32[]', space=smem, size = 0x4, offset = 0x4, fixed_abs, tag = 'smem constant byte address 0x4 - core index']
  #allocation1 [shape = 'u32[144,128]{1,0:T(1,128)}', space=vmem, size = 0x12000, scoped, tag = 'internal scratch']
  #allocation2 [shape = 'f32[16,128]{1,0:T(8,128)}', space=vmem, size = 0x2000, scoped, tag = 'scratch operand']
  %s0 = inlined_call_operand.vmem [shape: bf16[16,256], index: 0, kind: input, shape index: {}]
  %s1 = inlined_call_operand.vmem [shape: bf16[256,128], index: 1, kind: input, shape index: {}]
  %s2 = inlined_call_operand.vmem [shape: f32[1,128], index: 2, kind: input, shape index: {}]
  %s3 = inlined_call_operand.vmem [shape: bf16[16,128], index: 3, kind: output, shape index: {}]
  %s4 = sld [smem:[#allocation0]]
  $region30: #{mha_forward.12} parent=0
    _
  %s6 = ssub.s32 1, %s4
  %s7 = scalar_select 0, %s6, %s4
  // Predicated region
  $region2: #{mha_forward.12} parent=0 // pred_check
    _
  $region3: #{mha_forward.12} parent=0 // pred_check_branch
    %9 = sbr.rel (0) target = $region5
  $region4: #{mha_forward.12} parent=0 // pred_region
    _
  $region5: #{mha_forward.12} parent=0 // pred_fallthru
    _
  // Predicated region
  $region6: #{mha_forward.12} parent=0 // pred_check
    _
  $region7: #{mha_forward.12} parent=0 // pred_check_branch
    %11 = sbr.rel (0) target = $region9
  $region8: #{mha_forward.12} parent=0 // pred_region
    _
  $region9: #{mha_forward.12} parent=0 // pred_fallthru
    _
  // Predicated region
  $region10: #{mha_forward.12} parent=0 // pred_check
    _
  $region11: #{mha_forward.12} parent=0 // pred_check_branch
    %13 = sbr.rel (0) target = $region13
  $region12: #{mha_forward.12} parent=0 // pred_region
    _
  $region13: #{mha_forward.12} parent=0 // pred_fallthru
    _
  %p15 = scmp.eq.s32.totalorder 0, 0
  // Predicated region
  $region14: #{mha_forward.12} parent=0 // pred_check
    %p16 = pneg %p15
  $region15: #{mha_forward.12} parent=0 // pred_check_branch
    %18 = sbr.rel (%p16) target = $region17
  $region16: #{mha_forward.12} parent=0 // pred_region
    %19 = vst [vmem:[#allocation2] sm:$0xff] 0.0
    %20 = vst [vmem:[#allocation2 + $0x8] sm:$0xff] 0.0
  $region17: #{mha_forward.12} parent=0 // pred_fallthru
    _
  %v21 = vld [vmem:[#allocation2] sm:$0xff]
  %v22 = vld [vmem:[#allocation2 + $0x8] sm:$0xff]
  %v23 = vld [vmem:[%s0] sm:$0xff]
  %v24 = vld [vmem:[%s0 + $0x8] sm:$0xff]
  %v25 = vld [vmem:[%s1] sm:$0xf]
  %v26 = vld [vmem:[%s1 + $0x4] sm:$0xf]
  %v27 = vld [vmem:[%s1 + $0x8] sm:$0xf]
  %v28 = vld [vmem:[%s1 + $0xc] sm:$0xf]
  %v29 = vld [vmem:[%s1 + $0x10] sm:$0xf]
  %v30 = vld [vmem:[%s1 + $0x14] sm:$0xf]
  %v31 = vld [vmem:[%s1 + $0x18] sm:$0xf]
  %v32 = vld [vmem:[%s1 + $0x1c] sm:$0xf]
  %v33 = vld [vmem:[%s1 + $0x20] sm:$0xf]
  %v34 = vld [vmem:[%s1 + $0x24] sm:$0xf]
  %v35 = vld [vmem:[%s1 + $0x28] sm:$0xf]
  %v36 = vld [vmem:[%s1 + $0x2c] sm:$0xf]
  %v37 = vld [vmem:[%s1 + $0x30] sm:$0xf]
  %v38 = vld [vmem:[%s1 + $0x34] sm:$0xf]
  %v39 = vld [vmem:[%s1 + $0x38] sm:$0xf]
  %v40 = vld [vmem:[%s1 + $0x3c] sm:$0xf]
  %v41 = vld [vmem:[%s1 + $0x40] sm:$0xf]
  %v42 = vld [vmem:[%s1 + $0x44] sm:$0xf]
  %v43 = vld [vmem:[%s1 + $0x48] sm:$0xf]
  %v44 = vld [vmem:[%s1 + $0x4c] sm:$0xf]
  %v45 = vld [vmem:[%s1 + $0x50] sm:$0xf]
  %v46 = vld [vmem:[%s1 + $0x54] sm:$0xf]
  %v47 = vld [vmem:[%s1 + $0x58] sm:$0xf]
  %v48 = vld [vmem:[%s1 + $0x5c] sm:$0xf]
  %v49 = vld [vmem:[%s1 + $0x60] sm:$0xf]
  %v50 = vld [vmem:[%s1 + $0x64] sm:$0xf]
  %v51 = vld [vmem:[%s1 + $0x68] sm:$0xf]
  %v52 = vld [vmem:[%s1 + $0x6c] sm:$0xf]
  %v53 = vld [vmem:[%s1 + $0x70] sm:$0xf]
  %v54 = vld [vmem:[%s1 + $0x74] sm:$0xf]
  %v55 = vld [vmem:[%s1 + $0x78] sm:$0xf]
  %v56 = vld [vmem:[%s1 + $0x7c] sm:$0xf]
  %v59 = vunpack.c.l.b16 %v23
  %v60 = vunpack.c.h.b16 %v23
  %v61 = vunpack.c.l.b16 %v24
  %v62 = vunpack.c.h.b16 %v24
  %v63 = vpack.c.b16 %v61, %v59
  %v64 = vpack.c.b16 %v62, %v60
  %v99 = vunpack.c.l.b16 %v25
  %v100 = vunpack.c.l.b16 %v26
  %v101 = vunpack.c.l.b16 %v27
  %v102 = vunpack.c.l.b16 %v28
  %v103 = vunpack.c.l.b16 %v29
  %v104 = vunpack.c.l.b16 %v30
  %v105 = vunpack.c.l.b16 %v31
  %v106 = vunpack.c.l.b16 %v32
  %v107 = vunpack.c.l.b16 %v33
  %v108 = vunpack.c.l.b16 %v34
  %v109 = vunpack.c.l.b16 %v35
  %v110 = vunpack.c.l.b16 %v36
  %v111 = vunpack.c.l.b16 %v37
  %v112 = vunpack.c.l.b16 %v38
  %v113 = vunpack.c.l.b16 %v39
  %v114 = vunpack.c.l.b16 %v40
  %v115 = vunpack.c.l.b16 %v41
  %v116 = vunpack.c.l.b16 %v42
  %v117 = vunpack.c.l.b16 %v43
  %v118 = vunpack.c.l.b16 %v44
  %v119 = vunpack.c.l.b16 %v45
  %v120 = vunpack.c.l.b16 %v46
  %v121 = vunpack.c.l.b16 %v47
  %v122 = vunpack.c.l.b16 %v48
  %v123 = vunpack.c.l.b16 %v49
  %v124 = vunpack.c.l.b16 %v50
  %v125 = vunpack.c.l.b16 %v51
  %v126 = vunpack.c.l.b16 %v52
  %v127 = vunpack.c.l.b16 %v53
  %v128 = vunpack.c.l.b16 %v54
  %v129 = vunpack.c.l.b16 %v55
  %v130 = vunpack.c.l.b16 %v56
  %v131 = vpack.c.b16 %v100, %v99
  %v132 = vpack.c.b16 %v102, %v101
  %v133 = vpack.c.b16 %v104, %v103
  %v134 = vpack.c.b16 %v106, %v105
  %v135 = vpack.c.b16 %v108, %v107
  %v136 = vpack.c.b16 %v110, %v109
  %v137 = vpack.c.b16 %v112, %v111
  %v138 = vpack.c.b16 %v114, %v113
  %v139 = vpack.c.b16 %v116, %v115
  %v140 = vpack.c.b16 %v118, %v117
  %v141 = vpack.c.b16 %v120, %v119
  %v142 = vpack.c.b16 %v122, %v121
  %v143 = vpack.c.b16 %v124, %v123
  %v144 = vpack.c.b16 %v126, %v125
  %v145 = vpack.c.b16 %v128, %v127
  %v146 = vpack.c.b16 %v130, %v129
  %163 = vmatprep.subr.bf16.mxu0 0
  %164 = vmatpush1.bf16.msra.mxu0 %v131
  %165 = vmatprep.subr.bf16.mxu0 0
  %166 = vmatpush1.bf16.msra.mxu0 %v132
  %167 = vmatprep.subr.bf16.mxu0 0
  %168 = vmatpush1.bf16.msra.mxu0 %v133
  %169 = vmatprep.subr.bf16.mxu0 0
  %170 = vmatpush1.bf16.msra.mxu0 %v134
  %171 = vmatprep.subr.bf16.mxu0 0
  %172 = vmatpush1.bf16.msra.mxu0 %v135
  %173 = vmatprep.subr.bf16.mxu0 0
  %174 = vmatpush1.bf16.msra.mxu0 %v136
  %175 = vmatprep.subr.bf16.mxu0 0
  %176 = vmatpush1.bf16.msra.mxu0 %v137
  %177 = vmatprep.subr.bf16.mxu0 0
  %178 = vmatpush1.bf16.msra.mxu0 %v138
  %179 = vmatprep.subr.bf16.mxu0 0
  %180 = vmatpush1.bf16.msra.mxu0 %v139
  %181 = vmatprep.subr.bf16.mxu0 0
  %182 = vmatpush1.bf16.msra.mxu0 %v140
  %183 = vmatprep.subr.bf16.mxu0 0
  %184 = vmatpush1.bf16.msra.mxu0 %v141
  %185 = vmatprep.subr.bf16.mxu0 0
  %186 = vmatpush1.bf16.msra.mxu0 %v142
  %187 = vmatprep.subr.bf16.mxu0 0
  %188 = vmatpush1.bf16.msra.mxu0 %v143
  %189 = vmatprep.subr.bf16.mxu0 0
  %190 = vmatpush1.bf16.msra.mxu0 %v144
  %191 = vmatprep.subr.bf16.mxu0 0
  %192 = vmatpush1.bf16.msra.mxu0 %v145
  %193 = vmatprep.subr.bf16.mxu0 0
  %194 = vmatpush1.bf16.msra.mxu0 %v146
  %195 = vmatprep.mubr.bf16.mxu0 %v64
  %196 = vmatmul.mubr.bf16.gmra.mrb[0].mxu0 %v63
  %v197 = vpop.f32.mrb[0].mxu0
  %v198 = vadd.f32 0.0, %v197
  %v199 = vpop.f32.mrb[0].mxu0
  %v200 = vpop.f32.mrb[0].mxu0
  %v201 = vadd.f32 0.0, %v200
  %v202 = vpop.f32.mrb[0].mxu0
  %203 = vdwg.mxu0
  %v204 = vadd.f32 %v21, %v198
  %v205 = vadd.f32 %v22, %v201
  %206 = vst [vmem:[#allocation2] sm:$0xff] %v204
  %207 = vst [vmem:[#allocation2 + $0x8] sm:$0xff] %v205
  // Predicated region
  $region18: #{mha_forward.12} parent=0 // pred_check
    %p208 = pneg %p15
  $region19: #{mha_forward.12} parent=0 // pred_check_branch
    %210 = sbr.rel (%p208) target = $region21
  $region20: #{mha_forward.12} parent=0 // pred_region
    %v211 = vld [vmem:[#allocation2] sm:$0xff]
    %v212 = vld [vmem:[#allocation2 + $0x8] sm:$0xff]
    %v213 = vld [vmem:[%s2] sm:$0x1]
    %v215 = vlaneseq
    %v216 = vshrl.u32 %v215, 7
    %v217 = vsub.s32 0, %v216
    %v218 = vrot.slane %v213, %v217
    %v220 = vadd.f32 %v211, %v218
    %v221 = vadd.f32 %v212, %v218
    %v222 = vpack.c.bf16 %v221, %v220
    %v224 = vunpack.c.l.b16 %v222
    %v225 = vunpack.c.h.b16 %v222
    %v226 = vpack.c.b16 %v224, %v224
    %v227 = vpack.c.b16 %v225, %v225
    %230 = vst [vmem:[%s3] sm:$0xf] %v226
    %231 = vst [vmem:[%s3 + $0x4] sm:$0xf] %v227
  $region21: #{mha_forward.12} parent=0 // pred_fallthru
    _
  // Predicated region
  $region22: #{mha_forward.12} parent=0 // pred_check
    _
  $region23: #{mha_forward.12} parent=0 // pred_check_branch
    %233 = sbr.rel (0) target = $region25
  $region24: #{mha_forward.12} parent=0 // pred_region
    _
  $region25: #{mha_forward.12} parent=0 // pred_fallthru
    _
  // Predicated region
  $region26: #{mha_forward.12} parent=0 // pred_check
    _
  $region27: #{mha_forward.12} parent=0 // pred_check_branch
    %235 = sbr.rel (0) target = $region29
  $region28: #{mha_forward.12} parent=0 // pred_region
    _
  $region29: #{mha_forward.12} parent=0 // pred_fallthru
    _

// kernel: mha_forward.13
$region0: #{mha_forward.13}
  #allocation0 [shape = 'u32[]', space=smem, size = 0x4, offset = 0x4, fixed_abs, tag = 'smem constant byte address 0x4 - core index']
  #allocation1 [shape = 'u32[144,128]{1,0:T(1,128)}', space=vmem, size = 0x12000, scoped, tag = 'internal scratch']
  #allocation2 [shape = 'f32[1,1]{1,0:T(1,128)S(1)}', space=vmem, size = 0x200, scoped, tag = 'scoped memory for mha_forward.13']
  %s0 = inlined_call_operand.vmem [shape: bf16[2,8,64], index: 0, kind: input, shape index: {}]
  %s1 = inlined_call_operand.vmem [shape: bf16[64,1], index: 1, kind: input, shape index: {}]
  %s2 = inlined_call_operand.<no memory space> [shape: f32[1,1], index: 2, kind: input, shape index: {}]
  %s3 = inlined_call_operand.vmem [shape: bf16[2,1,64], index: 3, kind: output, shape index: {}]
  %s4 = sld [smem:[#allocation0]]
  $region45: #{mha_forward.13} parent=0
    _
  %s6 = ssub.s32 1, %s4
  %s7 = scalar_select 0, %s6, %s4
  %v8 = vstv %s2
  %9 = vst [vmem:[#allocation2] sm:$0x1] %v8
  loop: start=0, step=1, limit=4
  $region2: #{mha_forward.13} parent=0 // loop_pre_header
    _
  $region3: #{mha_forward.13} parent=0 // loop_header
    %s11 = sphi 0, %s15
    %p12 = scmp.ge.s32.totalorder %s11, 4
    %s21 = sphi 0, %s23
    %s24 = sphi 0, %s21
    %s25 = sphi 0, %s24
    %s41 = sphi 0, %s25
    %s45 = sphi 0, %s45
    %s47 = sphi 0, %s45
    %s48 = sphi 0, %s47
    %s62 = sphi 0, %s48
    %s66 = sphi 0, %s66
    %s68 = sphi 0, %s66
    %s69 = sphi 0, %s68
    %s83 = sphi 0, %s69
    %s89 = sphi 0, %s91
    %s92 = sphi 0, %s89
    %s93 = sphi 0, %s92
    %s109 = sphi 0, %s93
  $region4: #{mha_forward.13} parent=0 // loop_header_branch
    %14 = sbr.rel (%p12) target = $region8
  $region5: #{mha_forward.13} parent=0 // loop_body
    %s16 = ssub.s32 %s11, 1
    %s17 = ssub.s32 %s11, 2
    %s18 = sadd.s32 %s11, 1
    %s19 = ssub.s32 %s11, %s18
    %p20 = scmp.eq.s32.totalorder %s19, 0
    %s22 = sadd.s32 %s21, 1
    %s23 = scalar_select %p20, %s21, %s22
    %p26 = pneg %p20
    %p27 = scmp.eq.s32.totalorder %s11, 1
    %p28 = por %p26, %p27
    %p29 = scmp.ne.s32.totalorder %s21, %s24
    %p30 = scmp.eq.s32.totalorder %s11, 0
    %p31 = por %p29, %p30
    %p32 = scmp.ne.s32.totalorder %s21, %s24
    %p33 = scmp.eq.s32.totalorder %s16, 1
    %p34 = por %p32, %p33
    %p35 = scmp.ne.s32.totalorder %s24, %s25
    %p36 = scmp.eq.s32.totalorder %s16, 0
    %p37 = por %p35, %p36
    %p38 = scmp.ne.s32.totalorder %s24, %s25
    %p39 = scmp.eq.s32.totalorder %s17, 1
    %p40 = por %p38, %p39
    %p42 = scmp.ne.s32.totalorder %s25, %s41
    %p43 = scmp.eq.s32.totalorder %s17, 0
    %p44 = por %p42, %p43
    %s46 = sadd.s32 %s45, 1
    %p49 = scmp.eq.s32.totalorder %s11, 1
    %p50 = scmp.ne.s32.totalorder %s45, %s47
    %p51 = scmp.eq.s32.totalorder %s11, 0
    %p52 = por %p50, %p51
    %p53 = scmp.ne.s32.totalorder %s45, %s47
    %p54 = scmp.eq.s32.totalorder %s16, 1
    %p55 = por %p53, %p54
    %p56 = scmp.ne.s32.totalorder %s47, %s48
    %p57 = scmp.eq.s32.totalorder %s16, 0
    %p58 = por %p56, %p57
    %p59 = scmp.ne.s32.totalorder %s47, %s48
    %p60 = scmp.eq.s32.totalorder %s17, 1
    %p61 = por %p59, %p60
    %p63 = scmp.ne.s32.totalorder %s48, %s62
    %p64 = scmp.eq.s32.totalorder %s17, 0
    %p65 = por %p63, %p64
    %s67 = sadd.s32 %s66, 1
    %p70 = scmp.eq.s32.totalorder %s11, 1
    %p71 = scmp.ne.s32.totalorder %s66, %s68
    %p72 = scmp.eq.s32.totalorder %s11, 0
    %p73 = por %p71, %p72
    %p74 = scmp.ne.s32.totalorder %s66, %s68
    %p75 = scmp.eq.s32.totalorder %s16, 1
    %p76 = por %p74, %p75
    %p77 = scmp.ne.s32.totalorder %s68, %s69
    %p78 = scmp.eq.s32.totalorder %s16, 0
    %p79 = por %p77, %p78
    %p80 = scmp.ne.s32.totalorder %s68, %s69
    %p81 = scmp.eq.s32.totalorder %s17, 1
    %p82 = por %p80, %p81
    %p84 = scmp.ne.s32.totalorder %s69, %s83
    %p85 = scmp.eq.s32.totalorder %s17, 0
    %p86 = por %p84, %p85
    %s87 = ssub.s32 %s11, %s18
    %p88 = scmp.eq.s32.totalorder %s87, 0
    %s90 = sadd.s32 %s89, 1
    %s91 = scalar_select %p88, %s89, %s90
    %p94 = pneg %p88
    %p95 = scmp.eq.s32.totalorder %s11, 1
    %p96 = por %p94, %p95
    %p97 = scmp.ne.s32.totalorder %s89, %s92
    %p98 = scmp.eq.s32.totalorder %s11, 0
    %p99 = por %p97, %p98
    %p100 = scmp.ne.s32.totalorder %s89, %s92
    %p101 = scmp.eq.s32.totalorder %s16, 1
    %p102 = por %p100, %p101
    %p103 = scmp.ne.s32.totalorder %s92, %s93
    %p104 = scmp.eq.s32.totalorder %s16, 0
    %p105 = por %p103, %p104
    %p106 = scmp.ne.s32.totalorder %s92, %s93
    %p107 = scmp.eq.s32.totalorder %s17, 1
    %p108 = por %p106, %p107
    %p110 = scmp.ne.s32.totalorder %s93, %s109
    %p111 = scmp.eq.s32.totalorder %s17, 0
    %p112 = por %p110, %p111
    %p113 = scmp.le.s32.totalorder 1, %s11
    %p114 = scmp.lt.s32.totalorder %s11, 3
    %p115 = pnand %p113, %p114
    %p116 = pneg %p115
    // Predicated region
    $region9: #{mha_forward.13} parent=5 // pred_check
      _
    $region10: #{mha_forward.13} parent=5 // pred_check_branch
      %118 = sbr.rel (%p115) target = $region12
    $region11: #{mha_forward.13} parent=5 // pred_region
      %s119 = ssub.s32 %s11, 1
      // Predicated region
      $region13: #{mha_forward.13} parent=11 // pred_check
        %p120 = pneg %p58
      $region14: #{mha_forward.13} parent=11 // pred_check_branch
        %122 = sbr.rel (%p120) target = $region16
      $region15: #{mha_forward.13} parent=11 // pred_region
        _
      $region16: #{mha_forward.13} parent=11 // pred_fallthru
        _
      // Predicated region
      $region17: #{mha_forward.13} parent=11 // pred_check
        %p123 = pneg %p79
      $region18: #{mha_forward.13} parent=11 // pred_check_branch
        %125 = sbr.rel (%p123) target = $region20
      $region19: #{mha_forward.13} parent=11 // pred_region
        _
      $region20: #{mha_forward.13} parent=11 // pred_fallthru
        _
    $region12: #{mha_forward.13} parent=5 // pred_fallthru
      _
    %p126 = scmp.lt.s32.totalorder %s11, 2
    // Predicated region
    $region21: #{mha_forward.13} parent=5 // pred_check
      %p127 = pneg %p126
    $region22: #{mha_forward.13} parent=5 // pred_check_branch
      %129 = sbr.rel (%p127) target = $region24
    $region23: #{mha_forward.13} parent=5 // pred_region
      // Predicated region
      $region25: #{mha_forward.13} parent=23 // pred_check
        %p130 = pneg %p31
      $region26: #{mha_forward.13} parent=23 // pred_check_branch
        %132 = sbr.rel (%p130) target = $region28
      $region27: #{mha_forward.13} parent=23 // pred_region
        %p133 = scmp.lt.s32.totalorder %s11, 1
        %s134 = scalar_select %p133, %s11, 1
        %s135 = smul.addr %s134, 4
        %s136 = scalar_lea.vmem %s0, %s135
      $region28: #{mha_forward.13} parent=23 // pred_fallthru
        _
    $region24: #{mha_forward.13} parent=5 // pred_fallthru
      _
    %p137 = scmp.le.s32.totalorder 1, %s11
    %p138 = scmp.lt.s32.totalorder %s11, 3
    %p139 = pnand %p137, %p138
    %p140 = pneg %p139
    // Predicated region
    $region29: #{mha_forward.13} parent=5 // pred_check
      _
    $region30: #{mha_forward.13} parent=5 // pred_check_branch
      %142 = sbr.rel (%p139) target = $region32
    $region31: #{mha_forward.13} parent=5 // pred_region
      %s143 = ssub.s32 %s11, 1
      %p144 = scmp.lt.s32.totalorder %s16, 1
      %s145 = scalar_select %p144, %s16, 1
      %s146 = smul.addr %s145, 4
      %s147 = scalar_lea.vmem %s0, %s146
      %p148 = pneg %p37
      %p149 = pneg %p34
      %p150 = pneg %p58
      %p151 = pneg %p55
      %p152 = pneg %p79
      %p153 = pneg %p76
      %p154 = pneg %p105
      %p155 = pneg %p102
      %p156 = scmp.lt.s32.totalorder %s16, 1
      %s157 = scalar_select %p156, %s16, 1
      %s158 = scalar_lea.vmem %s3, %s157
      %p159 = scmp.lt.s32.totalorder %s16, 1
      %s160 = scalar_select %p159, %s16, 1
      %s161 = smul.addr %s160, 4
      %s162 = scalar_lea.vmem %s0, %s161
      %p163 = scmp.lt.s32.totalorder %s16, 1
      %s164 = scalar_select %p163, %s16, 1
      %s165 = scalar_lea.vmem %s3, %s164
      %v166 = vld [vmem:[%s162] sm:$0xf]
      %v167 = vunpack.c.l.bf16 %v166
      %v168 = vld [vmem:[%s1] sm:$0xf]
      %v169 = vld [vmem:[%s1 + $0x4] sm:$0xf]
      %v170 = vld [vmem:[%s1 + $0x8] sm:$0xf]
      %v171 = vld [vmem:[%s1 + $0xc] sm:$0xf]
      %v172 = vld [vmem:[%s1 + $0x10] sm:$0xf]
      %v173 = vld [vmem:[%s1 + $0x14] sm:$0xf]
      %v174 = vld [vmem:[%s1 + $0x18] sm:$0xf]
      %v175 = vld [vmem:[%s1 + $0x1c] sm:$0xf]
      %v176 = vunpack.c.l.bf16 %v168
      %v177 = vunpack.c.l.bf16 %v169
      %v178 = vunpack.c.l.bf16 %v170
      %v179 = vunpack.c.l.bf16 %v171
      %v180 = vunpack.c.l.bf16 %v172
      %v181 = vunpack.c.l.bf16 %v173
      %v182 = vunpack.c.l.bf16 %v174
      %v183 = vunpack.c.l.bf16 %v175
      %v184 = vld [vmem:[#allocation2] sm:$0x1]
      %v186 = vlaneseq
      %v187 = vshrl.u32 %v186, 7
      %v188 = vsub.s32 0, %v187
      %v189 = vrot.slane %v184, %v188
      %vm191 = vcmask 523264
      %v193 = vsel %vm191, %v167, 0
      %195 = vmatprep.subr.mxu0 0.0
      %196 = vmatpush1.msra.mxu0 %v176
      %197 = vmatprep.subr.mxu0 0.0
      %198 = vmatpush1.msra.mxu0 %v177
      %199 = vmatprep.subr.mxu0 0.0
      %200 = vmatpush1.msra.mxu0 %v178
      %201 = vmatprep.subr.mxu0 0.0
      %202 = vmatpush1.msra.mxu0 %v179
      %203 = vmatprep.subr.mxu0 0.0
      %204 = vmatpush1.msra.mxu0 %v180
      %205 = vmatprep.subr.mxu0 0.0
      %206 = vmatpush1.msra.mxu0 %v181
      %207 = vmatprep.subr.mxu0 0.0
      %208 = vmatpush1.msra.mxu0 %v182
      %209 = vmatprep.subr.mxu0 0.0
      %210 = vmatpush1.msra.mxu0 %v183
      %211 = vmatprep.subr.mxu0 0.0
      %212 = vmatpush1.msra.mxu0 0.0
      %213 = vmatprep.subr.mxu0 0.0
      %214 = vmatpush1.msra.mxu0 0.0
      %215 = vmatprep.subr.mxu0 0.0
      %216 = vmatpush1.msra.mxu0 0.0
      %217 = vmatprep.subr.mxu0 0.0
      %218 = vmatpush1.msra.mxu0 0.0
      %219 = vmatprep.subr.mxu0 0.0
      %220 = vmatpush1.msra.mxu0 0.0
      %221 = vmatprep.subr.mxu0 0.0
      %222 = vmatpush1.msra.mxu0 0.0
      %223 = vmatprep.subr.mxu0 0.0
      %224 = vmatpush1.msra.mxu0 0.0
      %225 = vmatprep.subr.mxu0 0.0
      %226 = vmatpush1.msra.mxu0 0.0
      %227 = vmatprep.subr.mxu0 0.0
      %228 = vmatpush1.msra.mxu0 0.0
      %229 = vmatprep.subr.mxu0 0.0
      %230 = vmatpush1.msra.mxu0 0.0
      %231 = vmatprep.subr.mxu0 0.0
      %232 = vmatpush1.msra.mxu0 0.0
      %233 = vmatprep.subr.mxu0 0.0
      %234 = vmatpush1.msra.mxu0 0.0
      %235 = vmatprep.subr.mxu0 0.0
      %236 = vmatpush1.msra.mxu0 0.0
      %237 = vmatprep.subr.mxu0 0.0
      %238 = vmatpush1.msra.mxu0 0.0
      %239 = vmatprep.subr.mxu0 0.0
      %240 = vmatpush1.msra.mxu0 0.0
      %241 = vmatprep.subr.mxu0 0.0
      %242 = vmatpush1.msra.mxu0 0.0
      %243 = vmatprep.subr.mxu0 0.0
      %244 = vmatpush1.msra.mxu0 0.0
      %245 = vmatprep.subr.mxu0 0.0
      %246 = vmatpush1.msra.mxu0 0.0
      %247 = vmatprep.subr.mxu0 0.0
      %248 = vmatpush1.msra.mxu0 0.0
      %249 = vmatprep.subr.mxu0 0.0
      %250 = vmatpush1.msra.mxu0 0.0
      %251 = vmatprep.subr.mxu0 0.0
      %252 = vmatpush1.msra.mxu0 0.0
      %253 = vmatprep.subr.mxu0 0.0
      %254 = vmatpush1.msra.mxu0 0.0
      %255 = vmatprep.subr.mxu0 0.0
      %256 = vmatpush1.msra.mxu0 0.0
      %257 = vmatprep.subr.mxu0 0.0
      %258 = vmatpush1.msra.mxu0 0.0
      %259 = vmatprep.mubr.f32.mxu0 0.0
      %260 = vmatmul.mubr.f32.gmra.mrb[0].mxu0 %v193
      %v261 = vpop.f32.mrb[0].mxu0
      %v262 = vadd.f32 %v189, %v261
      %v263 = vpop.f32.mrb[0].mxu0
      %264 = vdwg.mxu0
      %vm265 = vcmask 7168
      %v266 = vsel %vm265, %v262, -inf
      %v267 = vrot.slane %v266, 4
      %v268 = vmax.f32 %v266, %v267
      %v269 = vrot.slane %v268, 2
      %v270 = vmax.f32 %v268, %v269
      %v271 = vrot.slane %v270, 1
      %v272 = vmax.f32 %v270, %v271
      %v273 = vsub.f32 %v262, %v272
      %v274 = vmul.f32 %v273, 1.442695
      %v275 = vpow.pop %v274
      %v276 = vsel %vm265, %v275, 0.0
      %v277 = vrot.slane %v276, 4
      %v278 = vadd.f32 %v276, %v277
      %v279 = vrot.slane %v278, 2
      %v280 = vadd.f32 %v278, %v279
      %v281 = vrot.slane %v280, 1
      %v282 = vadd.f32 %v280, %v281
      %v283 = vrcp.pop %v282
      %v284 = vmul.f32 %v275, %v283
      %286 = vset.pattern.permute.xlu0 0
      %287 = vperm.xlu0 %286, %v284
      %v288 = vpop.permute.xlu0 %287
      %v290 = vmul.f32 %v288, %v167
      %v291 = vsel %vm191, %v290, 0.0
      %v292 = vrot.slane %v291, 4
      %v293 = vadd.f32 %v291, %v292
      %v294 = vrot.slane %v293, 2
      %v295 = vadd.f32 %v293, %v294
      %v296 = vrot.slane %v295, 1
      %v297 = vadd.f32 %v295, %v296
      %v298 = vpack.c.bf16 %v297, %v297
      %vm299 = vcmask 516096
      %vm300 = vsmask.f32 256
      %vm301 = vmand %vm299, %vm300
      %v302 = vld [vmem:[%s165] sm:$0x1]
      %v303 = vsel %vm301, %v298, %v302
      %304 = vst [vmem:[%s165] sm:$0x1] %v303
      %p305 = scmp.lt.s32.totalorder %s16, 1
      %s306 = scalar_select %p305, %s16, 1
      %s307 = scalar_lea.vmem %s3, %s306
      // Predicated region
      $region33: #{mha_forward.13} parent=31 // pred_check
        %p308 = pneg %p102
      $region34: #{mha_forward.13} parent=31 // pred_check_branch
        %310 = sbr.rel (%p308) target = $region36
      $region35: #{mha_forward.13} parent=31 // pred_region
        _
      $region36: #{mha_forward.13} parent=31 // pred_fallthru
        _
    $region32: #{mha_forward.13} parent=5 // pred_fallthru
      _
    %p311 = scmp.le.s32.totalorder 2, %s11
    // Predicated region
    $region37: #{mha_forward.13} parent=5 // pred_check
      %p312 = pneg %p311
    $region38: #{mha_forward.13} parent=5 // pred_check_branch
      %314 = sbr.rel (%p312) target = $region40
    $region39: #{mha_forward.13} parent=5 // pred_region
      %s315 = ssub.s32 %s11, 2
      // Predicated region
      $region41: #{mha_forward.13} parent=39 // pred_check
        %p316 = pneg %p108
      $region42: #{mha_forward.13} parent=39 // pred_check_branch
        %318 = sbr.rel (%p316) target = $region44
      $region43: #{mha_forward.13} parent=39 // pred_region
        %p319 = scmp.lt.s32.totalorder %s17, 1
        %s320 = scalar_select %p319, %s17, 1
        %s321 = scalar_lea.vmem %s3, %s320
      $region44: #{mha_forward.13} parent=39 // pred_fallthru
        _
    $region40: #{mha_forward.13} parent=5 // pred_fallthru
      _
  $region6: #{mha_forward.13} parent=0 // loop_footer
    %s15 = sadd.s32 1, %s11
  $region7: #{mha_forward.13} parent=0 // loop_footer_branch
    %10 = sbr.rel target = $region3
  $region8: #{mha_forward.13} parent=0 // loop_exit
    _

// kernel: mha_forward.14
$region0: #{mha_forward.14}
  #allocation0 [shape = 'u32[]', space=smem, size = 0x4, offset = 0x4, fixed_abs, tag = 'smem constant byte address 0x4 - core index']
  #allocation1 [shape = 'u32[144,128]{1,0:T(1,128)}', space=vmem, size = 0x12000, scoped, tag = 'internal scratch']
  #allocation2 [shape = 'f32[16,128]{1,0:T(8,128)}', space=vmem, size = 0x2000, scoped, tag = 'scratch operand']
  %s0 = inlined_call_operand.vmem [shape: bf16[16,128], index: 0, kind: input, shape index: {}]
  %s1 = inlined_call_operand.vmem [shape: bf16[128,128], index: 1, kind: input, shape index: {}]
  %s2 = inlined_call_operand.vmem [shape: f32[1,128], index: 2, kind: input, shape index: {}]
  %s3 = inlined_call_operand.vmem [shape: bf16[16,128], index: 3, kind: output, shape index: {}]
  %s4 = sld [smem:[#allocation0]]
  $region30: #{mha_forward.14} parent=0
    _
  %s6 = ssub.s32 1, %s4
  %s7 = scalar_select 0, %s6, %s4
  // Predicated region
  $region2: #{mha_forward.14} parent=0 // pred_check
    _
  $region3: #{mha_forward.14} parent=0 // pred_check_branch
    %9 = sbr.rel (0) target = $region5
  $region4: #{mha_forward.14} parent=0 // pred_region
    _
  $region5: #{mha_forward.14} parent=0 // pred_fallthru
    _
  // Predicated region
  $region6: #{mha_forward.14} parent=0 // pred_check
    _
  $region7: #{mha_forward.14} parent=0 // pred_check_branch
    %11 = sbr.rel (0) target = $region9
  $region8: #{mha_forward.14} parent=0 // pred_region
    _
  $region9: #{mha_forward.14} parent=0 // pred_fallthru
    _
  // Predicated region
  $region10: #{mha_forward.14} parent=0 // pred_check
    _
  $region11: #{mha_forward.14} parent=0 // pred_check_branch
    %13 = sbr.rel (0) target = $region13
  $region12: #{mha_forward.14} parent=0 // pred_region
    _
  $region13: #{mha_forward.14} parent=0 // pred_fallthru
    _
  %p15 = scmp.eq.s32.totalorder 0, 0
  // Predicated region
  $region14: #{mha_forward.14} parent=0 // pred_check
    %p16 = pneg %p15
  $region15: #{mha_forward.14} parent=0 // pred_check_branch
    %18 = sbr.rel (%p16) target = $region17
  $region16: #{mha_forward.14} parent=0 // pred_region
    %19 = vst [vmem:[#allocation2] sm:$0xff] 0.0
    %20 = vst [vmem:[#allocation2 + $0x8] sm:$0xff] 0.0
  $region17: #{mha_forward.14} parent=0 // pred_fallthru
    _
  %v21 = vld [vmem:[#allocation2] sm:$0xff]
  %v22 = vld [vmem:[#allocation2 + $0x8] sm:$0xff]
  %v23 = vld [vmem:[%s0] sm:$0xf]
  %v24 = vld [vmem:[%s0 + $0x4] sm:$0xf]
  %v25 = vld [vmem:[%s1] sm:$0xf]
  %v26 = vld [vmem:[%s1 + $0x4] sm:$0xf]
  %v27 = vld [vmem:[%s1 + $0x8] sm:$0xf]
  %v28 = vld [vmem:[%s1 + $0xc] sm:$0xf]
  %v29 = vld [vmem:[%s1 + $0x10] sm:$0xf]
  %v30 = vld [vmem:[%s1 + $0x14] sm:$0xf]
  %v31 = vld [vmem:[%s1 + $0x18] sm:$0xf]
  %v32 = vld [vmem:[%s1 + $0x1c] sm:$0xf]
  %v33 = vld [vmem:[%s1 + $0x20] sm:$0xf]
  %v34 = vld [vmem:[%s1 + $0x24] sm:$0xf]
  %v35 = vld [vmem:[%s1 + $0x28] sm:$0xf]
  %v36 = vld [vmem:[%s1 + $0x2c] sm:$0xf]
  %v37 = vld [vmem:[%s1 + $0x30] sm:$0xf]
  %v38 = vld [vmem:[%s1 + $0x34] sm:$0xf]
  %v39 = vld [vmem:[%s1 + $0x38] sm:$0xf]
  %v40 = vld [vmem:[%s1 + $0x3c] sm:$0xf]
  %v43 = vunpack.c.l.b16 %v23
  %v44 = vunpack.c.l.b16 %v24
  %v45 = vpack.c.b16 %v44, %v43
  %v63 = vunpack.c.l.b16 %v25
  %v64 = vunpack.c.l.b16 %v26
  %v65 = vunpack.c.l.b16 %v27
  %v66 = vunpack.c.l.b16 %v28
  %v67 = vunpack.c.l.b16 %v29
  %v68 = vunpack.c.l.b16 %v30
  %v69 = vunpack.c.l.b16 %v31
  %v70 = vunpack.c.l.b16 %v32
  %v71 = vunpack.c.l.b16 %v33
  %v72 = vunpack.c.l.b16 %v34
  %v73 = vunpack.c.l.b16 %v35
  %v74 = vunpack.c.l.b16 %v36
  %v75 = vunpack.c.l.b16 %v37
  %v76 = vunpack.c.l.b16 %v38
  %v77 = vunpack.c.l.b16 %v39
  %v78 = vunpack.c.l.b16 %v40
  %v79 = vpack.c.b16 %v64, %v63
  %v80 = vpack.c.b16 %v66, %v65
  %v81 = vpack.c.b16 %v68, %v67
  %v82 = vpack.c.b16 %v70, %v69
  %v83 = vpack.c.b16 %v72, %v71
  %v84 = vpack.c.b16 %v74, %v73
  %v85 = vpack.c.b16 %v76, %v75
  %v86 = vpack.c.b16 %v78, %v77
  %95 = vmatprep.subr.bf16.mxu0 0
  %96 = vmatpush1.bf16.msra.mxu0 %v79
  %97 = vmatprep.subr.bf16.mxu0 0
  %98 = vmatpush1.bf16.msra.mxu0 %v80
  %99 = vmatprep.subr.bf16.mxu0 0
  %100 = vmatpush1.bf16.msra.mxu0 %v81
  %101 = vmatprep.subr.bf16.mxu0 0
  %102 = vmatpush1.bf16.msra.mxu0 %v82
  %103 = vmatprep.subr.bf16.mxu0 0
  %104 = vmatpush1.bf16.msra.mxu0 %v83
  %105 = vmatprep.subr.bf16.mxu0 0
  %106 = vmatpush1.bf16.msra.mxu0 %v84
  %107 = vmatprep.subr.bf16.mxu0 0
  %108 = vmatpush1.bf16.msra.mxu0 %v85
  %109 = vmatprep.subr.bf16.mxu0 0
  %110 = vmatpush1.bf16.msra.mxu0 %v86
  %111 = vmatprep.subr.bf16.mxu0 0
  %112 = vmatpush1.bf16.msra.mxu0 0
  %113 = vmatprep.subr.bf16.mxu0 0
  %114 = vmatpush1.bf16.msra.mxu0 0
  %115 = vmatprep.subr.bf16.mxu0 0
  %116 = vmatpush1.bf16.msra.mxu0 0
  %117 = vmatprep.subr.bf16.mxu0 0
  %118 = vmatpush1.bf16.msra.mxu0 0
  %119 = vmatprep.subr.bf16.mxu0 0
  %120 = vmatpush1.bf16.msra.mxu0 0
  %121 = vmatprep.subr.bf16.mxu0 0
  %122 = vmatpush1.bf16.msra.mxu0 0
  %123 = vmatprep.subr.bf16.mxu0 0
  %124 = vmatpush1.bf16.msra.mxu0 0
  %125 = vmatprep.subr.bf16.mxu0 0
  %126 = vmatpush1.bf16.msra.mxu0 0
  %127 = vmatprep.mubr.bf16.mxu0 0
  %128 = vmatmul.mubr.bf16.gmra.mrb[0].mxu0 %v45
  %v129 = vpop.f32.mrb[0].mxu0
  %v130 = vadd.f32 0.0, %v129
  %v131 = vpop.f32.mrb[0].mxu0
  %v132 = vpop.f32.mrb[0].mxu0
  %v133 = vadd.f32 0.0, %v132
  %v134 = vpop.f32.mrb[0].mxu0
  %135 = vdwg.mxu0
  %v136 = vadd.f32 %v21, %v130
  %v137 = vadd.f32 %v22, %v133
  %138 = vst [vmem:[#allocation2] sm:$0xff] %v136
  %139 = vst [vmem:[#allocation2 + $0x8] sm:$0xff] %v137
  // Predicated region
  $region18: #{mha_forward.14} parent=0 // pred_check
    %p140 = pneg %p15
  $region19: #{mha_forward.14} parent=0 // pred_check_branch
    %142 = sbr.rel (%p140) target = $region21
  $region20: #{mha_forward.14} parent=0 // pred_region
    %v143 = vld [vmem:[#allocation2] sm:$0xff]
    %v144 = vld [vmem:[#allocation2 + $0x8] sm:$0xff]
    %v145 = vld [vmem:[%s2] sm:$0x1]
    %v147 = vlaneseq
    %v148 = vshrl.u32 %v147, 7
    %v149 = vsub.s32 0, %v148
    %v150 = vrot.slane %v145, %v149
    %v152 = vadd.f32 %v143, %v150
    %v153 = vadd.f32 %v144, %v150
    %v154 = vpack.c.bf16 %v153, %v152
    %v156 = vunpack.c.l.b16 %v154
    %v157 = vunpack.c.h.b16 %v154
    %v158 = vpack.c.b16 %v156, %v156
    %v159 = vpack.c.b16 %v157, %v157
    %162 = vst [vmem:[%s3] sm:$0xf] %v158
    %163 = vst [vmem:[%s3 + $0x4] sm:$0xf] %v159
  $region21: #{mha_forward.14} parent=0 // pred_fallthru
    _
  // Predicated region
  $region22: #{mha_forward.14} parent=0 // pred_check
    _
  $region23: #{mha_forward.14} parent=0 // pred_check_branch
    %165 = sbr.rel (0) target = $region25
  $region24: #{mha_forward.14} parent=0 // pred_region
    _
  $region25: #{mha_forward.14} parent=0 // pred_fallthru
    _
  // Predicated region
  $region26: #{mha_forward.14} parent=0 // pred_check
    _
  $region27: #{mha_forward.14} parent=0 // pred_check_branch
    %167 = sbr.rel (0) target = $region29
  $region28: #{mha_forward.14} parent=0 // pred_region
    _
  $region29: #{mha_forward.14} parent=0 // pred_fallthru
    _

// kernel: mha_forward.18
$region0: #{mha_forward.18}
  #allocation0 [shape = 'u32[]', space=smem, size = 0x4, offset = 0x4, fixed_abs, tag = 'smem constant byte address 0x4 - core index']
  #allocation1 [shape = 'u32[144,128]{1,0:T(1,128)}', space=vmem, size = 0x12000, scoped, tag = 'internal scratch']
  #allocation2 [shape = 'f32[16,128]{1,0:T(8,128)}', space=vmem, size = 0x2000, scoped, tag = 'scratch operand']
  %s0 = inlined_call_operand.vmem [shape: bf16[16,128], index: 0, kind: input, shape index: {}]
  %s1 = inlined_call_operand.vmem [shape: bf16[128,128], index: 1, kind: input, shape index: {}]
  %s2 = inlined_call_operand.vmem [shape: f32[1,128], index: 2, kind: input, shape index: {}]
  %s3 = inlined_call_operand.vmem [shape: bf16[16,128], index: 3, kind: input, shape index: {}]
  %s4 = inlined_call_operand.vmem [shape: bf16[128,128], index: 4, kind: input, shape index: {}]
  %s5 = inlined_call_operand.vmem [shape: bf16[16,128], index: 5, kind: output, shape index: {}]
  %s6 = sld [smem:[#allocation0]]
  $region38: #{mha_forward.18} parent=0
    _
  %s8 = ssub.s32 1, %s6
  %s9 = scalar_select 0, %s8, %s6
  // Predicated region
  $region2: #{mha_forward.18} parent=0 // pred_check
    _
  $region3: #{mha_forward.18} parent=0 // pred_check_branch
    %11 = sbr.rel (0) target = $region5
  $region4: #{mha_forward.18} parent=0 // pred_region
    _
  $region5: #{mha_forward.18} parent=0 // pred_fallthru
    _
  // Predicated region
  $region6: #{mha_forward.18} parent=0 // pred_check
    _
  $region7: #{mha_forward.18} parent=0 // pred_check_branch
    %13 = sbr.rel (0) target = $region9
  $region8: #{mha_forward.18} parent=0 // pred_region
    _
  $region9: #{mha_forward.18} parent=0 // pred_fallthru
    _
  // Predicated region
  $region10: #{mha_forward.18} parent=0 // pred_check
    _
  $region11: #{mha_forward.18} parent=0 // pred_check_branch
    %15 = sbr.rel (0) target = $region13
  $region12: #{mha_forward.18} parent=0 // pred_region
    _
  $region13: #{mha_forward.18} parent=0 // pred_fallthru
    _
  // Predicated region
  $region14: #{mha_forward.18} parent=0 // pred_check
    _
  $region15: #{mha_forward.18} parent=0 // pred_check_branch
    %17 = sbr.rel (0) target = $region17
  $region16: #{mha_forward.18} parent=0 // pred_region
    _
  $region17: #{mha_forward.18} parent=0 // pred_fallthru
    _
  // Predicated region
  $region18: #{mha_forward.18} parent=0 // pred_check
    _
  $region19: #{mha_forward.18} parent=0 // pred_check_branch
    %19 = sbr.rel (0) target = $region21
  $region20: #{mha_forward.18} parent=0 // pred_region
    _
  $region21: #{mha_forward.18} parent=0 // pred_fallthru
    _
  %p21 = scmp.eq.s32.totalorder 0, 0
  // Predicated region
  $region22: #{mha_forward.18} parent=0 // pred_check
    %p22 = pneg %p21
  $region23: #{mha_forward.18} parent=0 // pred_check_branch
    %24 = sbr.rel (%p22) target = $region25
  $region24: #{mha_forward.18} parent=0 // pred_region
    %25 = vst [vmem:[#allocation2] sm:$0xff] 0.0
    %26 = vst [vmem:[#allocation2 + $0x8] sm:$0xff] 0.0
  $region25: #{mha_forward.18} parent=0 // pred_fallthru
    _
  %v27 = vld [vmem:[#allocation2] sm:$0xff]
  %v28 = vld [vmem:[#allocation2 + $0x8] sm:$0xff]
  %v29 = vld [vmem:[%s0] sm:$0xf]
  %v30 = vld [vmem:[%s0 + $0x4] sm:$0xf]
  %v31 = vld [vmem:[%s1] sm:$0xf]
  %v32 = vld [vmem:[%s1 + $0x4] sm:$0xf]
  %v33 = vld [vmem:[%s1 + $0x8] sm:$0xf]
  %v34 = vld [vmem:[%s1 + $0xc] sm:$0xf]
  %v35 = vld [vmem:[%s1 + $0x10] sm:$0xf]
  %v36 = vld [vmem:[%s1 + $0x14] sm:$0xf]
  %v37 = vld [vmem:[%s1 + $0x18] sm:$0xf]
  %v38 = vld [vmem:[%s1 + $0x1c] sm:$0xf]
  %v39 = vld [vmem:[%s1 + $0x20] sm:$0xf]
  %v40 = vld [vmem:[%s1 + $0x24] sm:$0xf]
  %v41 = vld [vmem:[%s1 + $0x28] sm:$0xf]
  %v42 = vld [vmem:[%s1 + $0x2c] sm:$0xf]
  %v43 = vld [vmem:[%s1 + $0x30] sm:$0xf]
  %v44 = vld [vmem:[%s1 + $0x34] sm:$0xf]
  %v45 = vld [vmem:[%s1 + $0x38] sm:$0xf]
  %v46 = vld [vmem:[%s1 + $0x3c] sm:$0xf]
  %v49 = vunpack.c.l.b16 %v29
  %v50 = vunpack.c.l.b16 %v30
  %v51 = vpack.c.b16 %v50, %v49
  %v69 = vunpack.c.l.b16 %v31
  %v70 = vunpack.c.l.b16 %v32
  %v71 = vunpack.c.l.b16 %v33
  %v72 = vunpack.c.l.b16 %v34
  %v73 = vunpack.c.l.b16 %v35
  %v74 = vunpack.c.l.b16 %v36
  %v75 = vunpack.c.l.b16 %v37
  %v76 = vunpack.c.l.b16 %v38
  %v77 = vunpack.c.l.b16 %v39
  %v78 = vunpack.c.l.b16 %v40
  %v79 = vunpack.c.l.b16 %v41
  %v80 = vunpack.c.l.b16 %v42
  %v81 = vunpack.c.l.b16 %v43
  %v82 = vunpack.c.l.b16 %v44
  %v83 = vunpack.c.l.b16 %v45
  %v84 = vunpack.c.l.b16 %v46
  %v85 = vpack.c.b16 %v70, %v69
  %v86 = vpack.c.b16 %v72, %v71
  %v87 = vpack.c.b16 %v74, %v73
  %v88 = vpack.c.b16 %v76, %v75
  %v89 = vpack.c.b16 %v78, %v77
  %v90 = vpack.c.b16 %v80, %v79
  %v91 = vpack.c.b16 %v82, %v81
  %v92 = vpack.c.b16 %v84, %v83
  %101 = vmatprep.subr.bf16.mxu0 0
  %102 = vmatpush1.bf16.msra.mxu0 %v85
  %103 = vmatprep.subr.bf16.mxu0 0
  %104 = vmatpush1.bf16.msra.mxu0 %v86
  %105 = vmatprep.subr.bf16.mxu0 0
  %106 = vmatpush1.bf16.msra.mxu0 %v87
  %107 = vmatprep.subr.bf16.mxu0 0
  %108 = vmatpush1.bf16.msra.mxu0 %v88
  %109 = vmatprep.subr.bf16.mxu0 0
  %110 = vmatpush1.bf16.msra.mxu0 %v89
  %111 = vmatprep.subr.bf16.mxu0 0
  %112 = vmatpush1.bf16.msra.mxu0 %v90
  %113 = vmatprep.subr.bf16.mxu0 0
  %114 = vmatpush1.bf16.msra.mxu0 %v91
  %115 = vmatprep.subr.bf16.mxu0 0
  %116 = vmatpush1.bf16.msra.mxu0 %v92
  %117 = vmatprep.subr.bf16.mxu0 0
  %118 = vmatpush1.bf16.msra.mxu0 0
  %119 = vmatprep.subr.bf16.mxu0 0
  %120 = vmatpush1.bf16.msra.mxu0 0
  %121 = vmatprep.subr.bf16.mxu0 0
  %122 = vmatpush1.bf16.msra.mxu0 0
  %123 = vmatprep.subr.bf16.mxu0 0
  %124 = vmatpush1.bf16.msra.mxu0 0
  %125 = vmatprep.subr.bf16.mxu0 0
  %126 = vmatpush1.bf16.msra.mxu0 0
  %127 = vmatprep.subr.bf16.mxu0 0
  %128 = vmatpush1.bf16.msra.mxu0 0
  %129 = vmatprep.subr.bf16.mxu0 0
  %130 = vmatpush1.bf16.msra.mxu0 0
  %131 = vmatprep.subr.bf16.mxu0 0
  %132 = vmatpush1.bf16.msra.mxu0 0
  %133 = vmatprep.mubr.bf16.mxu0 0
  %134 = vmatmul.mubr.bf16.gmra.mrb[0].mxu0 %v51
  %v135 = vpop.f32.mrb[0].mxu0
  %v136 = vadd.f32 0.0, %v135
  %v137 = vpop.f32.mrb[0].mxu0
  %v138 = vpop.f32.mrb[0].mxu0
  %v139 = vadd.f32 0.0, %v138
  %v140 = vpop.f32.mrb[0].mxu0
  %141 = vdwg.mxu0
  %v142 = vadd.f32 %v27, %v136
  %v143 = vadd.f32 %v28, %v139
  %144 = vst [vmem:[#allocation2] sm:$0xff] %v142
  %145 = vst [vmem:[#allocation2 + $0x8] sm:$0xff] %v143
  // Predicated region
  $region26: #{mha_forward.18} parent=0 // pred_check
    %p146 = pneg %p21
  $region27: #{mha_forward.18} parent=0 // pred_check_branch
    %148 = sbr.rel (%p146) target = $region29
  $region28: #{mha_forward.18} parent=0 // pred_region
    %v149 = vld [vmem:[%s3] sm:$0xf]
    %v150 = vld [vmem:[%s3 + $0x4] sm:$0xf]
    %v151 = vld [vmem:[%s4] sm:$0xf]
    %v152 = vld [vmem:[%s4 + $0x4] sm:$0xf]
    %v153 = vld [vmem:[%s4 + $0x8] sm:$0xf]
    %v154 = vld [vmem:[%s4 + $0xc] sm:$0xf]
    %v155 = vld [vmem:[%s4 + $0x10] sm:$0xf]
    %v156 = vld [vmem:[%s4 + $0x14] sm:$0xf]
    %v157 = vld [vmem:[%s4 + $0x18] sm:$0xf]
    %v158 = vld [vmem:[%s4 + $0x1c] sm:$0xf]
    %v159 = vld [vmem:[%s4 + $0x20] sm:$0xf]
    %v160 = vld [vmem:[%s4 + $0x24] sm:$0xf]
    %v161 = vld [vmem:[%s4 + $0x28] sm:$0xf]
    %v162 = vld [vmem:[%s4 + $0x2c] sm:$0xf]
    %v163 = vld [vmem:[%s4 + $0x30] sm:$0xf]
    %v164 = vld [vmem:[%s4 + $0x34] sm:$0xf]
    %v165 = vld [vmem:[%s4 + $0x38] sm:$0xf]
    %v166 = vld [vmem:[%s4 + $0x3c] sm:$0xf]
    %v169 = vunpack.c.l.b16 %v149
    %v170 = vunpack.c.l.b16 %v150
    %v171 = vpack.c.b16 %v170, %v169
    %v189 = vunpack.c.l.b16 %v151
    %v190 = vunpack.c.l.b16 %v152
    %v191 = vunpack.c.l.b16 %v153
    %v192 = vunpack.c.l.b16 %v154
    %v193 = vunpack.c.l.b16 %v155
    %v194 = vunpack.c.l.b16 %v156
    %v195 = vunpack.c.l.b16 %v157
    %v196 = vunpack.c.l.b16 %v158
    %v197 = vunpack.c.l.b16 %v159
    %v198 = vunpack.c.l.b16 %v160
    %v199 = vunpack.c.l.b16 %v161
    %v200 = vunpack.c.l.b16 %v162
    %v201 = vunpack.c.l.b16 %v163
    %v202 = vunpack.c.l.b16 %v164
    %v203 = vunpack.c.l.b16 %v165
    %v204 = vunpack.c.l.b16 %v166
    %v205 = vpack.c.b16 %v190, %v189
    %v206 = vpack.c.b16 %v192, %v191
    %v207 = vpack.c.b16 %v194, %v193
    %v208 = vpack.c.b16 %v196, %v195
    %v209 = vpack.c.b16 %v198, %v197
    %v210 = vpack.c.b16 %v200, %v199
    %v211 = vpack.c.b16 %v202, %v201
    %v212 = vpack.c.b16 %v204, %v203
    %221 = vmatprep.subr.bf16.mxu0 0
    %222 = vmatpush1.bf16.msra.mxu0 %v205
    %223 = vmatprep.subr.bf16.mxu0 0
    %224 = vmatpush1.bf16.msra.mxu0 %v206
    %225 = vmatprep.subr.bf16.mxu0 0
    %226 = vmatpush1.bf16.msra.mxu0 %v207
    %227 = vmatprep.subr.bf16.mxu0 0
    %228 = vmatpush1.bf16.msra.mxu0 %v208
    %229 = vmatprep.subr.bf16.mxu0 0
    %230 = vmatpush1.bf16.msra.mxu0 %v209
    %231 = vmatprep.subr.bf16.mxu0 0
    %232 = vmatpush1.bf16.msra.mxu0 %v210
    %233 = vmatprep.subr.bf16.mxu0 0
    %234 = vmatpush1.bf16.msra.mxu0 %v211
    %235 = vmatprep.subr.bf16.mxu0 0
    %236 = vmatpush1.bf16.msra.mxu0 %v212
    %237 = vmatprep.subr.bf16.mxu0 0
    %238 = vmatpush1.bf16.msra.mxu0 0
    %239 = vmatprep.subr.bf16.mxu0 0
    %240 = vmatpush1.bf16.msra.mxu0 0
    %241 = vmatprep.subr.bf16.mxu0 0
    %242 = vmatpush1.bf16.msra.mxu0 0
    %243 = vmatprep.subr.bf16.mxu0 0
    %244 = vmatpush1.bf16.msra.mxu0 0
    %245 = vmatprep.subr.bf16.mxu0 0
    %246 = vmatpush1.bf16.msra.mxu0 0
    %247 = vmatprep.subr.bf16.mxu0 0
    %248 = vmatpush1.bf16.msra.mxu0 0
    %249 = vmatprep.subr.bf16.mxu0 0
    %250 = vmatpush1.bf16.msra.mxu0 0
    %251 = vmatprep.subr.bf16.mxu0 0
    %252 = vmatpush1.bf16.msra.mxu0 0
    %253 = vmatprep.mubr.bf16.mxu0 0
    %254 = vmatmul.mubr.bf16.gmra.mrb[0].mxu0 %v171
    %v255 = vpop.f32.mrb[0].mxu0
    %v256 = vadd.f32 0.0, %v255
    %v257 = vpop.f32.mrb[0].mxu0
    %v258 = vpop.f32.mrb[0].mxu0
    %v259 = vadd.f32 0.0, %v258
    %v260 = vpop.f32.mrb[0].mxu0
    %261 = vdwg.mxu0
    %v262 = vld [vmem:[#allocation2] sm:$0xff]
    %v263 = vld [vmem:[#allocation2 + $0x8] sm:$0xff]
    %v264 = vld [vmem:[%s2] sm:$0x1]
    %v266 = vlaneseq
    %v267 = vshrl.u32 %v266, 7
    %v268 = vsub.s32 0, %v267
    %v269 = vrot.slane %v264, %v268
    %v271 = vadd.f32 %v262, %v269
    %v272 = vadd.f32 %v263, %v269
    %v273 = vadd.f32 %v271, %v256
    %v274 = vadd.f32 %v272, %v259
    %v275 = vpack.c.bf16 %v274, %v273
    %v277 = vunpack.c.l.b16 %v275
    %v278 = vunpack.c.h.b16 %v275
    %v279 = vpack.c.b16 %v277, %v277
    %v280 = vpack.c.b16 %v278, %v278
    %283 = vst [vmem:[%s5] sm:$0xf] %v279
    %284 = vst [vmem:[%s5 + $0x4] sm:$0xf] %v280
  $region29: #{mha_forward.18} parent=0 // pred_fallthru
    _
  // Predicated region
  $region30: #{mha_forward.18} parent=0 // pred_check
    _
  $region31: #{mha_forward.18} parent=0 // pred_check_branch
    %286 = sbr.rel (0) target = $region33
  $region32: #{mha_forward.18} parent=0 // pred_region
    _
  $region33: #{mha_forward.18} parent=0 // pred_fallthru
    _
  // Predicated region
  $region34: #{mha_forward.18} parent=0 // pred_check
    _
  $region35: #{mha_forward.18} parent=0 // pred_check_branch
    %288 = sbr.rel (0) target = $region37
  $region36: #{mha_forward.18} parent=0 // pred_region
    _
  $region37: #{mha_forward.18} parent=0 // pred_fallthru
    _

// kernel: mha_forward.21
$region0: #{mha_forward.21}
  #allocation0 [shape = 'u32[]', space=smem, size = 0x4, offset = 0x4, fixed_abs, tag = 'smem constant byte address 0x4 - core index']
  #allocation1 [shape = 'u32[144,128]{1,0:T(1,128)}', space=vmem, size = 0x12000, scoped, tag = 'internal scratch']
  #allocation2 [shape = 'f32[4,16,1]{2,1,0:T(8,128)}', space=vmem, size = 0x8000, scoped, tag = 'scratch operand']
  #allocation3 [shape = 'f32[4,16,1]{2,1,0:T(8,128)}', space=vmem, size = 0x8000, scoped, tag = 'scratch operand']
  #allocation4 [shape = 'f32[4,16,16]{2,1,0:T(8,128)}', space=vmem, size = 0x8000, scoped, tag = 'scratch operand']
  %s0 = inlined_call_operand.vmem [shape: bf16[2,16,64], index: 0, kind: input, shape index: {}]
  %s1 = inlined_call_operand.vmem [shape: bf16[2,128,64], index: 1, kind: input, shape index: {}]
  %s2 = inlined_call_operand.vmem [shape: bf16[2,128,64], index: 2, kind: input, shape index: {}]
  %s3 = inlined_call_operand.vmem [shape: bf16[2,16,64], index: 3, kind: output, shape index: {0}]
  %s4 = inlined_call_operand.vmem [shape: f32[2,4,16,128], index: 4, kind: output, shape index: {1}]
  %5 = xla_tuple %s3, %s4
  %s6 = sld [smem:[#allocation0]]
  $region61: #{mha_forward.21} parent=0
    _
  %s8 = ssub.s32 1, %s6
  %s9 = scalar_select 0, %s8, %s6
  loop: start=0, step=1, limit=4
  $region2: #{mha_forward.21} parent=0 // loop_pre_header
    _
  $region3: #{mha_forward.21} parent=0 // loop_header
    %s11 = sphi 0, %s15
    %p12 = scmp.ge.s32.totalorder %s11, 4
    %s18 = sphi 0, %s37
    %s19 = sphi 0, %s33
    %s20 = sphi 0, %s29
    %s21 = sphi 0, %s18
    %s22 = sphi 0, %s19
    %s23 = sphi 0, %s20
    %s24 = sphi 0, %s21
    %s25 = sphi 0, %s22
    %s26 = sphi 0, %s23
    %s42 = sphi 0, %s44
    %s45 = sphi 0, %s42
    %s46 = sphi 0, %s45
    %s62 = sphi 0, %s46
    %s70 = sphi 0, %s72
    %s73 = sphi 0, %s70
    %s74 = sphi 0, %s73
    %s90 = sphi 0, %s74
    %s98 = sphi 0, %s100
    %s101 = sphi 0, %s98
    %s102 = sphi 0, %s101
    %s118 = sphi 0, %s102
    %s126 = sphi 0, %s128
    %s129 = sphi 0, %s126
    %s130 = sphi 0, %s129
    %s146 = sphi 0, %s130
    %s156 = sphi 0, %s158
    %s159 = sphi 0, %s156
    %s160 = sphi 0, %s159
    %s176 = sphi 0, %s160
  $region4: #{mha_forward.21} parent=0 // loop_header_branch
    %14 = sbr.rel (%p12) target = $region8
  $region5: #{mha_forward.21} parent=0 // loop_body
    %s16 = ssub.s32 %s11, 1
    %s17 = ssub.s32 %s11, 2
    %s27 = sadd.s32 1, %s20
    %p28 = scmp.ge.s32.totalorder %s27, 1
    %s29 = scalar_select %p28, 0, %s27
    %s30 = sadd.s32 1, %s19
    %s31 = scalar_select %p28, %s30, %s19
    %p32 = scmp.ge.s32.totalorder %s31, 1
    %s33 = scalar_select %p32, 0, %s31
    %s34 = sadd.s32 1, %s18
    %s35 = scalar_select %p32, %s34, %s18
    %p36 = scmp.ge.s32.totalorder %s35, 2
    %s37 = scalar_select %p36, 0, %s35
    %s38 = ssub.s32 %s18, %s37
    %s39 = ssub.s32 %s19, %s33
    %s40 = sor.u32 %s38, %s39
    %p41 = scmp.eq.s32.totalorder %s40, 0
    %s43 = sadd.s32 %s42, 1
    %s44 = scalar_select %p41, %s42, %s43
    %p47 = pneg %p41
    %p48 = scmp.eq.s32.totalorder %s11, 1
    %p49 = por %p47, %p48
    %p50 = scmp.ne.s32.totalorder %s42, %s45
    %p51 = scmp.eq.s32.totalorder %s11, 0
    %p52 = por %p50, %p51
    %p53 = scmp.ne.s32.totalorder %s42, %s45
    %p54 = scmp.eq.s32.totalorder %s16, 1
    %p55 = por %p53, %p54
    %p56 = scmp.ne.s32.totalorder %s45, %s46
    %p57 = scmp.eq.s32.totalorder %s16, 0
    %p58 = por %p56, %p57
    %p59 = scmp.ne.s32.totalorder %s45, %s46
    %p60 = scmp.eq.s32.totalorder %s17, 1
    %p61 = por %p59, %p60
    %p63 = scmp.ne.s32.totalorder %s46, %s62
    %p64 = scmp.eq.s32.totalorder %s17, 0
    %p65 = por %p63, %p64
    %s66 = ssub.s32 %s18, %s37
    %s67 = ssub.s32 %s20, %s29
    %s68 = sor.u32 %s66, %s67
    %p69 = scmp.eq.s32.totalorder %s68, 0
    %s71 = sadd.s32 %s70, 1
    %s72 = scalar_select %p69, %s70, %s71
    %p75 = pneg %p69
    %p76 = scmp.eq.s32.totalorder %s11, 1
    %p77 = por %p75, %p76
    %p78 = scmp.ne.s32.totalorder %s70, %s73
    %p79 = scmp.eq.s32.totalorder %s11, 0
    %p80 = por %p78, %p79
    %p81 = scmp.ne.s32.totalorder %s70, %s73
    %p82 = scmp.eq.s32.totalorder %s16, 1
    %p83 = por %p81, %p82
    %p84 = scmp.ne.s32.totalorder %s73, %s74
    %p85 = scmp.eq.s32.totalorder %s16, 0
    %p86 = por %p84, %p85
    %p87 = scmp.ne.s32.totalorder %s73, %s74
    %p88 = scmp.eq.s32.totalorder %s17, 1
    %p89 = por %p87, %p88
    %p91 = scmp.ne.s32.totalorder %s74, %s90
    %p92 = scmp.eq.s32.totalorder %s17, 0
    %p93 = por %p91, %p92
    %s94 = ssub.s32 %s18, %s37
    %s95 = ssub.s32 %s20, %s29
    %s96 = sor.u32 %s94, %s95
    %p97 = scmp.eq.s32.totalorder %s96, 0
    %s99 = sadd.s32 %s98, 1
    %s100 = scalar_select %p97, %s98, %s99
    %p103 = pneg %p97
    %p104 = scmp.eq.s32.totalorder %s11, 1
    %p105 = por %p103, %p104
    %p106 = scmp.ne.s32.totalorder %s98, %s101
    %p107 = scmp.eq.s32.totalorder %s11, 0
    %p108 = por %p106, %p107
    %p109 = scmp.ne.s32.totalorder %s98, %s101
    %p110 = scmp.eq.s32.totalorder %s16, 1
    %p111 = por %p109, %p110
    %p112 = scmp.ne.s32.totalorder %s101, %s102
    %p113 = scmp.eq.s32.totalorder %s16, 0
    %p114 = por %p112, %p113
    %p115 = scmp.ne.s32.totalorder %s101, %s102
    %p116 = scmp.eq.s32.totalorder %s17, 1
    %p117 = por %p115, %p116
    %p119 = scmp.ne.s32.totalorder %s102, %s118
    %p120 = scmp.eq.s32.totalorder %s17, 0
    %p121 = por %p119, %p120
    %s122 = ssub.s32 %s18, %s37
    %s123 = ssub.s32 %s19, %s33
    %s124 = sor.u32 %s122, %s123
    %p125 = scmp.eq.s32.totalorder %s124, 0
    %s127 = sadd.s32 %s126, 1
    %s128 = scalar_select %p125, %s126, %s127
    %p131 = pneg %p125
    %p132 = scmp.eq.s32.totalorder %s11, 1
    %p133 = por %p131, %p132
    %p134 = scmp.ne.s32.totalorder %s126, %s129
    %p135 = scmp.eq.s32.totalorder %s11, 0
    %p136 = por %p134, %p135
    %p137 = scmp.ne.s32.totalorder %s126, %s129
    %p138 = scmp.eq.s32.totalorder %s16, 1
    %p139 = por %p137, %p138
    %p140 = scmp.ne.s32.totalorder %s129, %s130
    %p141 = scmp.eq.s32.totalorder %s16, 0
    %p142 = por %p140, %p141
    %p143 = scmp.ne.s32.totalorder %s129, %s130
    %p144 = scmp.eq.s32.totalorder %s17, 1
    %p145 = por %p143, %p144
    %p147 = scmp.ne.s32.totalorder %s130, %s146
    %p148 = scmp.eq.s32.totalorder %s17, 0
    %p149 = por %p147, %p148
    %s150 = ssub.s32 %s18, %s37
    %s151 = ssub.s32 %s19, %s33
    %s152 = sor.u32 %s150, %s151
    %s153 = ssub.s32 %s20, %s29
    %s154 = sor.u32 %s152, %s153
    %p155 = scmp.eq.s32.totalorder %s154, 0
    %s157 = sadd.s32 %s156, 1
    %s158 = scalar_select %p155, %s156, %s157
    %p161 = pneg %p155
    %p162 = scmp.eq.s32.totalorder %s11, 1
    %p163 = por %p161, %p162
    %p164 = scmp.ne.s32.totalorder %s156, %s159
    %p165 = scmp.eq.s32.totalorder %s11, 0
    %p166 = por %p164, %p165
    %p167 = scmp.ne.s32.totalorder %s156, %s159
    %p168 = scmp.eq.s32.totalorder %s16, 1
    %p169 = por %p167, %p168
    %p170 = scmp.ne.s32.totalorder %s159, %s160
    %p171 = scmp.eq.s32.totalorder %s16, 0
    %p172 = por %p170, %p171
    %p173 = scmp.ne.s32.totalorder %s159, %s160
    %p174 = scmp.eq.s32.totalorder %s17, 1
    %p175 = por %p173, %p174
    %p177 = scmp.ne.s32.totalorder %s160, %s176
    %p178 = scmp.eq.s32.totalorder %s17, 0
    %p179 = por %p177, %p178
    %p180 = scmp.le.s32.totalorder 1, %s11
    %p181 = scmp.lt.s32.totalorder %s11, 3
    %p182 = pnand %p180, %p181
    %p183 = pneg %p182
    // Predicated region
    $region9: #{mha_forward.21} parent=5 // pred_check
      _
    $region10: #{mha_forward.21} parent=5 // pred_check_branch
      %185 = sbr.rel (%p182) target = $region12
    $region11: #{mha_forward.21} parent=5 // pred_region
      %s186 = ssub.s32 %s11, 1
    $region12: #{mha_forward.21} parent=5 // pred_fallthru
      _
    %p187 = scmp.lt.s32.totalorder %s11, 2
    // Predicated region
    $region13: #{mha_forward.21} parent=5 // pred_check
      %p188 = pneg %p187
    $region14: #{mha_forward.21} parent=5 // pred_check_branch
      %190 = sbr.rel (%p188) target = $region16
    $region15: #{mha_forward.21} parent=5 // pred_region
      // Predicated region
      $region17: #{mha_forward.21} parent=15 // pred_check
        %p191 = pneg %p52
      $region18: #{mha_forward.21} parent=15 // pred_check_branch
        %193 = sbr.rel (%p191) target = $region20
      $region19: #{mha_forward.21} parent=15 // pred_region
        %s194 = smul.u32 2, %s19
        %p195 = scmp.lt.s32.totalorder %s18, 1
        %s196 = scalar_select %p195, %s18, 1
        %p197 = scmp.lt.s32.totalorder %s194, 1
        %s198 = scalar_select %p197, %s194, 1
        %s199 = smul.addr %s196, 2
        %s200 = sadd.s32 %s198, %s199
        %s201 = smul.addr %s200, 4
        %s202 = scalar_lea.vmem %s0, %s201
        %s203 = smul.u32 2, %s19
      $region20: #{mha_forward.21} parent=15 // pred_fallthru
        _
      // Predicated region
      $region21: #{mha_forward.21} parent=15 // pred_check
        %p204 = pneg %p80
      $region22: #{mha_forward.21} parent=15 // pred_check_branch
        %206 = sbr.rel (%p204) target = $region24
      $region23: #{mha_forward.21} parent=15 // pred_region
        %s207 = smul.u32 16, %s20
        %p208 = scmp.lt.s32.totalorder %s18, 1
        %s209 = scalar_select %p208, %s18, 1
        %p210 = scmp.lt.s32.totalorder %s207, 15
        %s211 = scalar_select %p210, %s207, 15
        %s212 = smul.addr %s209, 16
        %s213 = sadd.s32 %s211, %s212
        %s214 = smul.addr %s213, 4
        %s215 = scalar_lea.vmem %s1, %s214
        %s216 = smul.u32 16, %s20
      $region24: #{mha_forward.21} parent=15 // pred_fallthru
        _
      // Predicated region
      $region25: #{mha_forward.21} parent=15 // pred_check
        %p217 = pneg %p108
      $region26: #{mha_forward.21} parent=15 // pred_check_branch
        %219 = sbr.rel (%p217) target = $region28
      $region27: #{mha_forward.21} parent=15 // pred_region
        %s220 = smul.u32 16, %s20
        %p221 = scmp.lt.s32.totalorder %s18, 1
        %s222 = scalar_select %p221, %s18, 1
        %p223 = scmp.lt.s32.totalorder %s220, 15
        %s224 = scalar_select %p223, %s220, 15
        %s225 = smul.addr %s222, 16
        %s226 = sadd.s32 %s224, %s225
        %s227 = smul.addr %s226, 4
        %s228 = scalar_lea.vmem %s2, %s227
        %s229 = smul.u32 16, %s20
      $region28: #{mha_forward.21} parent=15 // pred_fallthru
        _
    $region16: #{mha_forward.21} parent=5 // pred_fallthru
      _
    %p230 = scmp.le.s32.totalorder 1, %s11
    %p231 = scmp.lt.s32.totalorder %s11, 3
    %p232 = pnand %p230, %p231
    %p233 = pneg %p232
    // Predicated region
    $region29: #{mha_forward.21} parent=5 // pred_check
      _
    $region30: #{mha_forward.21} parent=5 // pred_check_branch
      %235 = sbr.rel (%p232) target = $region32
    $region31: #{mha_forward.21} parent=5 // pred_region
      %s236 = ssub.s32 %s11, 1
      %s237 = smul.u32 2, %s22
      %p238 = scmp.lt.s32.totalorder %s21, 1
      %s239 = scalar_select %p238, %s21, 1
      %p240 = scmp.lt.s32.totalorder %s237, 1
      %s241 = scalar_select %p240, %s237, 1
      %s242 = smul.addr %s239, 2
      %s243 = sadd.s32 %s241, %s242
      %s244 = smul.addr %s243, 4
      %s245 = scalar_lea.vmem %s0, %s244
      %p246 = pneg %p58
      %p247 = pneg %p55
      %s248 = smul.u32 16, %s23
      %p249 = scmp.lt.s32.totalorder %s21, 1
      %s250 = scalar_select %p249, %s21, 1
      %p251 = scmp.lt.s32.totalorder %s248, 15
      %s252 = scalar_select %p251, %s248, 15
      %s253 = smul.addr %s250, 16
      %s254 = sadd.s32 %s252, %s253
      %s255 = smul.addr %s254, 4
      %s256 = scalar_lea.vmem %s1, %s255
      %p257 = pneg %p86
      %p258 = pneg %p83
      %s259 = smul.u32 16, %s23
      %p260 = scmp.lt.s32.totalorder %s21, 1
      %s261 = scalar_select %p260, %s21, 1
      %p262 = scmp.lt.s32.totalorder %s259, 15
      %s263 = scalar_select %p262, %s259, 15
      %s264 = smul.addr %s261, 16
      %s265 = sadd.s32 %s263, %s264
      %s266 = smul.addr %s265, 4
      %s267 = scalar_lea.vmem %s2, %s266
      %p268 = pneg %p114
      %p269 = pneg %p111
      %p270 = pneg %p142
      %p271 = pneg %p139
      %s272 = smul.u32 2, %s22
      %p273 = scmp.lt.s32.totalorder %s21, 1
      %s274 = scalar_select %p273, %s21, 1
      %p275 = scmp.lt.s32.totalorder %s272, 1
      %s276 = scalar_select %p275, %s272, 1
      %s277 = smul.addr %s274, 2
      %s278 = sadd.s32 %s276, %s277
      %s279 = smul.addr %s278, 4
      %s280 = scalar_lea.vmem %s3, %s279
      %p281 = pneg %p172
      %p282 = pneg %p169
      %s283 = smul.u32 2, %s22
      %p284 = scmp.lt.s32.totalorder %s21, 1
      %s285 = scalar_select %p284, %s21, 1
      %p286 = scmp.lt.s32.totalorder %s283, 1
      %s287 = scalar_select %p286, %s283, 1
      %p288 = scmp.lt.s32.totalorder %s23, 0
      %s289 = scalar_select %p288, %s23, 0
      %s290 = sadd.s32 %s289, %s287
      %s291 = smul.addr %s285, 8
      %s292 = sadd.s32 %s290, %s291
      %s293 = smul.addr %s292, 8
      %s294 = scalar_lea.vmem %s4, %s293
      %s295 = smul.u32 2, %s22
      %p296 = scmp.lt.s32.totalorder %s21, 1
      %s297 = scalar_select %p296, %s21, 1
      %p298 = scmp.lt.s32.totalorder %s295, 1
      %s299 = scalar_select %p298, %s295, 1
      %s300 = smul.addr %s297, 2
      %s301 = sadd.s32 %s299, %s300
      %s302 = smul.addr %s301, 4
      %s303 = scalar_lea.vmem %s0, %s302
      %s304 = smul.u32 2, %s22
      %s305 = smul.u32 16, %s23
      %p306 = scmp.lt.s32.totalorder %s21, 1
      %s307 = scalar_select %p306, %s21, 1
      %p308 = scmp.lt.s32.totalorder %s305, 15
      %s309 = scalar_select %p308, %s305, 15
      %s310 = smul.addr %s307, 16
      %s311 = sadd.s32 %s309, %s310
      %s312 = smul.addr %s311, 4
      %s313 = scalar_lea.vmem %s1, %s312
      %s314 = smul.u32 16, %s23
      %s315 = smul.u32 16, %s23
      %p316 = scmp.lt.s32.totalorder %s21, 1
      %s317 = scalar_select %p316, %s21, 1
      %p318 = scmp.lt.s32.totalorder %s315, 15
      %s319 = scalar_select %p318, %s315, 15
      %s320 = smul.addr %s317, 16
      %s321 = sadd.s32 %s319, %s320
      %s322 = smul.addr %s321, 4
      %s323 = scalar_lea.vmem %s2, %s322
      %s324 = smul.u32 16, %s23
      %s325 = smul.u32 2, %s22
      %p326 = scmp.lt.s32.totalorder %s21, 1
      %s327 = scalar_select %p326, %s21, 1
      %p328 = scmp.lt.s32.totalorder %s325, 1
      %s329 = scalar_select %p328, %s325, 1
      %s330 = smul.addr %s327, 2
      %s331 = sadd.s32 %s329, %s330
      %s332 = smul.addr %s331, 4
      %s333 = scalar_lea.vmem %s3, %s332
      %s334 = smul.u32 2, %s22
      %s335 = smul.u32 2, %s22
      %p336 = scmp.lt.s32.totalorder %s21, 1
      %s337 = scalar_select %p336, %s21, 1
      %p338 = scmp.lt.s32.totalorder %s335, 1
      %s339 = scalar_select %p338, %s335, 1
      %p340 = scmp.lt.s32.totalorder %s23, 0
      %s341 = scalar_select %p340, %s23, 0
      %s342 = sadd.s32 %s341, %s339
      %s343 = smul.addr %s337, 8
      %s344 = sadd.s32 %s342, %s343
      %s345 = smul.addr %s344, 8
      %s346 = scalar_lea.vmem %s4, %s345
      %s347 = smul.u32 2, %s22
      %p349 = scmp.eq.s32.totalorder %s23, 0
      // Predicated region
      $region33: #{mha_forward.21} parent=31 // pred_check
        %p350 = pneg %p349
      $region34: #{mha_forward.21} parent=31 // pred_check_branch
        %352 = sbr.rel (%p350) target = $region36
      $region35: #{mha_forward.21} parent=31 // pred_region
        %vm353 = vcmask 7168
        %354 = vst.msk [vmem:[#allocation2] sm:$0xff] %vm353, -inf
        %355 = vst.msk [vmem:[#allocation2 + $0x8] sm:$0xff] %vm353, -inf
        %356 = vst.msk [vmem:[#allocation2 + $0x10] sm:$0xff] %vm353, -inf
        %357 = vst.msk [vmem:[#allocation2 + $0x18] sm:$0xff] %vm353, -inf
        %358 = vst.msk [vmem:[#allocation2 + $0x20] sm:$0xff] %vm353, -inf
        %359 = vst.msk [vmem:[#allocation2 + $0x28] sm:$0xff] %vm353, -inf
        %360 = vst.msk [vmem:[#allocation2 + $0x30] sm:$0xff] %vm353, -inf
        %361 = vst.msk [vmem:[#allocation2 + $0x38] sm:$0xff] %vm353, -inf
        %362 = vst.msk [vmem:[#allocation3] sm:$0xff] %vm353, 0.0
        %363 = vst.msk [vmem:[#allocation3 + $0x8] sm:$0xff] %vm353, 0.0
        %364 = vst.msk [vmem:[#allocation3 + $0x10] sm:$0xff] %vm353, 0.0
        %365 = vst.msk [vmem:[#allocation3 + $0x18] sm:$0xff] %vm353, 0.0
        %366 = vst.msk [vmem:[#allocation3 + $0x20] sm:$0xff] %vm353, 0.0
        %367 = vst.msk [vmem:[#allocation3 + $0x28] sm:$0xff] %vm353, 0.0
        %368 = vst.msk [vmem:[#allocation3 + $0x30] sm:$0xff] %vm353, 0.0
        %369 = vst.msk [vmem:[#allocation3 + $0x38] sm:$0xff] %vm353, 0.0
        %vm370 = vcmask 130048
        %371 = vst.msk [vmem:[#allocation4] sm:$0xff] %vm370, 0.0
        %372 = vst.msk [vmem:[#allocation4 + $0x8] sm:$0xff] %vm370, 0.0
        %373 = vst.msk [vmem:[#allocation4 + $0x10] sm:$0xff] %vm370, 0.0
        %374 = vst.msk [vmem:[#allocation4 + $0x18] sm:$0xff] %vm370, 0.0
        %375 = vst.msk [vmem:[#allocation4 + $0x20] sm:$0xff] %vm370, 0.0
        %376 = vst.msk [vmem:[#allocation4 + $0x28] sm:$0xff] %vm370, 0.0
        %377 = vst.msk [vmem:[#allocation4 + $0x30] sm:$0xff] %vm370, 0.0
        %378 = vst.msk [vmem:[#allocation4 + $0x38] sm:$0xff] %vm370, 0.0
      $region36: #{mha_forward.21} parent=31 // pred_fallthru
        _
      %s379 = smul.u32 %s23, 128
      %v380 = vlaneseq
      %v381 = vand.u32 %v380, 127
      %v382 = vstv %s379
      %v383 = vadd.s32 %v382, %v381
      %v384 = vld [vmem:[%s303] sm:$0xf]
      %v385 = vld [vmem:[%s303 + $0x4] sm:$0xf]
      %v386 = vld [vmem:[%s313] sm:$0xf]
      %v387 = vld [vmem:[%s313 + $0x4] sm:$0xf]
      %v388 = vld [vmem:[%s313 + $0x8] sm:$0xf]
      %v389 = vld [vmem:[%s313 + $0xc] sm:$0xf]
      %v390 = vld [vmem:[%s313 + $0x10] sm:$0xf]
      %v391 = vld [vmem:[%s313 + $0x14] sm:$0xf]
      %v392 = vld [vmem:[%s313 + $0x18] sm:$0xf]
      %v393 = vld [vmem:[%s313 + $0x1c] sm:$0xf]
      %v394 = vld [vmem:[%s313 + $0x20] sm:$0xf]
      %v395 = vld [vmem:[%s313 + $0x24] sm:$0xf]
      %v396 = vld [vmem:[%s313 + $0x28] sm:$0xf]
      %v397 = vld [vmem:[%s313 + $0x2c] sm:$0xf]
      %v398 = vld [vmem:[%s313 + $0x30] sm:$0xf]
      %v399 = vld [vmem:[%s313 + $0x34] sm:$0xf]
      %v400 = vld [vmem:[%s313 + $0x38] sm:$0xf]
      %v401 = vld [vmem:[%s313 + $0x3c] sm:$0xf]
      %v402 = vld [vmem:[%s323] sm:$0xf]
      %v403 = vld [vmem:[%s323 + $0x4] sm:$0xf]
      %v404 = vld [vmem:[%s323 + $0x8] sm:$0xf]
      %v405 = vld [vmem:[%s323 + $0xc] sm:$0xf]
      %v406 = vld [vmem:[%s323 + $0x10] sm:$0xf]
      %v407 = vld [vmem:[%s323 + $0x14] sm:$0xf]
      %v408 = vld [vmem:[%s323 + $0x18] sm:$0xf]
      %v409 = vld [vmem:[%s323 + $0x1c] sm:$0xf]
      %v410 = vld [vmem:[%s323 + $0x20] sm:$0xf]
      %v411 = vld [vmem:[%s323 + $0x24] sm:$0xf]
      %v412 = vld [vmem:[%s323 + $0x28] sm:$0xf]
      %v413 = vld [vmem:[%s323 + $0x2c] sm:$0xf]
      %v414 = vld [vmem:[%s323 + $0x30] sm:$0xf]
      %v415 = vld [vmem:[%s323 + $0x34] sm:$0xf]
      %v416 = vld [vmem:[%s323 + $0x38] sm:$0xf]
      %v417 = vld [vmem:[%s323 + $0x3c] sm:$0xf]
      %v420 = vunpack.c.l.b16 %v384
      %v421 = vunpack.c.l.b16 %v385
      %v422 = vpack.c.b16 %v421, %v420
      %v439 = vunpack.c.l.b16 %v386
      %v440 = vunpack.c.l.b16 %v387
      %v441 = vunpack.c.l.b16 %v388
      %v442 = vunpack.c.l.b16 %v389
      %v443 = vunpack.c.l.b16 %v390
      %v444 = vunpack.c.l.b16 %v391
      %v445 = vunpack.c.l.b16 %v392
      %v446 = vunpack.c.l.b16 %v393
      %v447 = vunpack.c.l.b16 %v394
      %v448 = vunpack.c.l.b16 %v395
      %v449 = vunpack.c.l.b16 %v396
      %v450 = vunpack.c.l.b16 %v397
      %v451 = vunpack.c.l.b16 %v398
      %v452 = vunpack.c.l.b16 %v399
      %v453 = vunpack.c.l.b16 %v400
      %v454 = vunpack.c.l.b16 %v401
      %v455 = vpack.c.b16 %v440, %v439
      %v456 = vpack.c.b16 %v442, %v441
      %v457 = vpack.c.b16 %v444, %v443
      %v458 = vpack.c.b16 %v446, %v445
      %v459 = vpack.c.b16 %v448, %v447
      %v460 = vpack.c.b16 %v450, %v449
      %v461 = vpack.c.b16 %v452, %v451
      %v462 = vpack.c.b16 %v454, %v453
      %vm463 = vcmask 130048
      %v465 = vsel %vm463, %v422, 0
      %v468 = vsel %vm463, %v455, 0
      %v471 = vsel %vm463, %v456, 0
      %v474 = vsel %vm463, %v457, 0
      %v477 = vsel %vm463, %v458, 0
      %v480 = vsel %vm463, %v459, 0
      %v483 = vsel %vm463, %v460, 0
      %v486 = vsel %vm463, %v461, 0
      %v489 = vsel %vm463, %v462, 0
      %491 = vmatprep.subr.bf16.mxu0 0
      %492 = vmatpush1.bf16.xpose.msra.mxu0 %v468
      %493 = vmatprep.subr.bf16.mxu0 0
      %494 = vmatpush1.bf16.xpose.msra.mxu0 %v471
      %495 = vmatprep.subr.bf16.mxu0 0
      %496 = vmatpush1.bf16.xpose.msra.mxu0 %v474
      %497 = vmatprep.subr.bf16.mxu0 0
      %498 = vmatpush1.bf16.xpose.msra.mxu0 %v477
      %499 = vmatprep.subr.bf16.mxu0 0
      %500 = vmatpush1.bf16.xpose.msra.mxu0 %v480
      %501 = vmatprep.subr.bf16.mxu0 0
      %502 = vmatpush1.bf16.xpose.msra.mxu0 %v483
      %503 = vmatprep.subr.bf16.mxu0 0
      %504 = vmatpush1.bf16.xpose.msra.mxu0 %v486
      %505 = vmatprep.subr.bf16.mxu0 0
      %506 = vmatpush1.bf16.xpose.msra.mxu0 %v489
      %507 = vmatprep.subr.bf16.mxu0 0
      %508 = vmatpush1.bf16.xpose.msra.mxu0 0
      %509 = vmatprep.subr.bf16.mxu0 0
      %510 = vmatpush1.bf16.xpose.msra.mxu0 0
      %511 = vmatprep.subr.bf16.mxu0 0
      %512 = vmatpush1.bf16.xpose.msra.mxu0 0
      %513 = vmatprep.subr.bf16.mxu0 0
      %514 = vmatpush1.bf16.xpose.msra.mxu0 0
      %515 = vmatprep.subr.bf16.mxu0 0
      %516 = vmatpush1.bf16.xpose.msra.mxu0 0
      %517 = vmatprep.subr.bf16.mxu0 0
      %518 = vmatpush1.bf16.xpose.msra.mxu0 0
      %519 = vmatprep.subr.bf16.mxu0 0
      %520 = vmatpush1.bf16.xpose.msra.mxu0 0
      %521 = vmatprep.subr.bf16.mxu0 0
      %522 = vmatpush1.bf16.xpose.msra.mxu0 0
      %523 = vmatprep.mubr.bf16.mxu0 0
      %524 = vmatmul.mubr.bf16.gmra.mrb[0].mxu0 %v465
      %v525 = vpop.f32.mrb[0].mxu0
      %v526 = vadd.f32 0.0, %v525
      %v527 = vpop.f32.mrb[0].mxu0
      %v528 = vpop.f32.mrb[0].mxu0
      %v529 = vadd.f32 0.0, %v528
      %v530 = vpop.f32.mrb[0].mxu0
      %531 = vdwg.mxu0
      %v532 = vmul.f32 %v526, 0.25
      %v533 = vmul.f32 %v529, 0.25
      %534 = vst [vmem:[%s346] sm:$0xff] %v532
      %535 = vst [vmem:[%s346 + $0x8] sm:$0xff] %v533
      %vm536 = vcmp.lt.s32.totalorder %v383, 8
      %v537 = vsel %vm536, 1, 0
      %vm538 = vcmp.eq.s32.totalorder %v537, 1
      %v539 = vsel %vm538, %v532, -1e+30
      %v540 = vsel %vm538, %v533, -1e+30
      %v541 = vld [vmem:[#allocation2] sm:$0xff]
      %v542 = vld [vmem:[#allocation2 + $0x8] sm:$0xff]
      %543 = vmax.xlane.f32.xlu0 %v539
      %v544 = vpop.xlane.xlu0 %543
      %545 = vmax.xlane.f32.xlu0 %v540
      %v546 = vpop.xlane.xlu0 %545
      %v547 = vmax.f32 %v541, %v544
      %v548 = vmax.f32 %v542, %v546
      %v549 = vsub.f32 %v541, %v547
      %v550 = vsub.f32 %v542, %v548
      %v551 = vmul.f32 %v549, 1.442695
      %v552 = vpow.pop %v551
      %v553 = vmul.f32 %v550, 1.442695
      %v554 = vpow.pop %v553
      %556 = vset.pattern.permute.xlu0 0
      %557 = vperm.xlu0 %556, %v547
      %v558 = vpop.permute.xlu0 %557
      %561 = vset.pattern.permute.xlu0 0
      %562 = vperm.xlu0 %561, %v548
      %v563 = vpop.permute.xlu0 %562
      %v565 = vsub.f32 %v539, %v558
      %v566 = vsub.f32 %v540, %v563
      %v567 = vmul.f32 %v565, 1.442695
      %v568 = vpow.pop %v567
      %v569 = vmul.f32 %v566, 1.442695
      %v570 = vpow.pop %v569
      %v571 = vld [vmem:[#allocation3] sm:$0xff]
      %v572 = vld [vmem:[#allocation3 + $0x8] sm:$0xff]
      %v573 = vmul.f32 %v552, %v571
      %v574 = vmul.f32 %v554, %v572
      %575 = vadd.xlane.f32.xlu0 %v568
      %v576 = vpop.xlane.xlu0 %575
      %577 = vadd.xlane.f32.xlu0 %v570
      %v578 = vpop.xlane.xlu0 %577
      %v579 = vadd.f32 %v573, %v576
      %v580 = vadd.f32 %v574, %v578
      %vm581 = vcmask 7168
      %582 = vst.msk [vmem:[#allocation3] sm:$0xff] %vm581, %v579
      %583 = vst.msk [vmem:[#allocation3 + $0x8] sm:$0xff] %vm581, %v580
      %v584 = vld [vmem:[#allocation4] sm:$0xff]
      %v585 = vld [vmem:[#allocation4 + $0x8] sm:$0xff]
      %587 = vset.pattern.permute.xlu0 0
      %588 = vperm.xlu0 %587, %v552
      %v589 = vpop.permute.xlu0 %588
      %592 = vset.pattern.permute.xlu0 0
      %593 = vperm.xlu0 %592, %v554
      %v594 = vpop.permute.xlu0 %593
      %v596 = vmul.f32 %v589, %v584
      %v597 = vmul.f32 %v594, %v585
      %v598 = vpack.c.bf16 %v570, %v568
      %v615 = vunpack.c.l.b16 %v402
      %v616 = vunpack.c.l.b16 %v403
      %v617 = vunpack.c.l.b16 %v404
      %v618 = vunpack.c.l.b16 %v405
      %v619 = vunpack.c.l.b16 %v406
      %v620 = vunpack.c.l.b16 %v407
      %v621 = vunpack.c.l.b16 %v408
      %v622 = vunpack.c.l.b16 %v409
      %v623 = vunpack.c.l.b16 %v410
      %v624 = vunpack.c.l.b16 %v411
      %v625 = vunpack.c.l.b16 %v412
      %v626 = vunpack.c.l.b16 %v413
      %v627 = vunpack.c.l.b16 %v414
      %v628 = vunpack.c.l.b16 %v415
      %v629 = vunpack.c.l.b16 %v416
      %v630 = vunpack.c.l.b16 %v417
      %v631 = vpack.c.b16 %v616, %v615
      %v632 = vpack.c.b16 %v618, %v617
      %v633 = vpack.c.b16 %v620, %v619
      %v634 = vpack.c.b16 %v622, %v621
      %v635 = vpack.c.b16 %v624, %v623
      %v636 = vpack.c.b16 %v626, %v625
      %v637 = vpack.c.b16 %v628, %v627
      %v638 = vpack.c.b16 %v630, %v629
      %647 = vmatprep.subr.bf16.mxu0 0
      %648 = vmatpush1.bf16.msra.mxu0 %v631
      %649 = vmatprep.subr.bf16.mxu0 0
      %650 = vmatpush1.bf16.msra.mxu0 %v632
      %651 = vmatprep.subr.bf16.mxu0 0
      %652 = vmatpush1.bf16.msra.mxu0 %v633
      %653 = vmatprep.subr.bf16.mxu0 0
      %654 = vmatpush1.bf16.msra.mxu0 %v634
      %655 = vmatprep.subr.bf16.mxu0 0
      %656 = vmatpush1.bf16.msra.mxu0 %v635
      %657 = vmatprep.subr.bf16.mxu0 0
      %658 = vmatpush1.bf16.msra.mxu0 %v636
      %659 = vmatprep.subr.bf16.mxu0 0
      %660 = vmatpush1.bf16.msra.mxu0 %v637
      %661 = vmatprep.subr.bf16.mxu0 0
      %662 = vmatpush1.bf16.msra.mxu0 %v638
      %663 = vmatprep.subr.bf16.mxu0 0
      %664 = vmatpush1.bf16.msra.mxu0 0
      %665 = vmatprep.subr.bf16.mxu0 0
      %666 = vmatpush1.bf16.msra.mxu0 0
      %667 = vmatprep.subr.bf16.mxu0 0
      %668 = vmatpush1.bf16.msra.mxu0 0
      %669 = vmatprep.subr.bf16.mxu0 0
      %670 = vmatpush1.bf16.msra.mxu0 0
      %671 = vmatprep.subr.bf16.mxu0 0
      %672 = vmatpush1.bf16.msra.mxu0 0
      %673 = vmatprep.subr.bf16.mxu0 0
      %674 = vmatpush1.bf16.msra.mxu0 0
      %675 = vmatprep.subr.bf16.mxu0 0
      %676 = vmatpush1.bf16.msra.mxu0 0
      %677 = vmatprep.subr.bf16.mxu0 0
      %678 = vmatpush1.bf16.msra.mxu0 0
      %679 = vmatprep.mubr.bf16.mxu0 0
      %680 = vmatmul.mubr.bf16.gmra.mrb[0].mxu0 %v598
      %v681 = vpop.f32.mrb[0].mxu0
      %v682 = vadd.f32 0.0, %v681
      %v683 = vpop.f32.mrb[0].mxu0
      %v684 = vpop.f32.mrb[0].mxu0
      %v685 = vadd.f32 0.0, %v684
      %v686 = vpop.f32.mrb[0].mxu0
      %687 = vdwg.mxu0
      %v688 = vadd.f32 %v596, %v682
      %v689 = vadd.f32 %v597, %v685
      %690 = vst.msk [vmem:[#allocation4] sm:$0xff] %vm463, %v688
      %691 = vst.msk [vmem:[#allocation4 + $0x8] sm:$0xff] %vm463, %v689
      %692 = vst.msk [vmem:[#allocation2] sm:$0xff] %vm581, %v547
      %693 = vst.msk [vmem:[#allocation2 + $0x8] sm:$0xff] %vm581, %v548
      %v694 = vld [vmem:[%s303] sm:$0xf]
      %v695 = vld [vmem:[%s303 + $0x4] sm:$0xf]
      %v696 = vld [vmem:[%s313] sm:$0xf]
      %v697 = vld [vmem:[%s313 + $0x4] sm:$0xf]
      %v698 = vld [vmem:[%s313 + $0x8] sm:$0xf]
      %v699 = vld [vmem:[%s313 + $0xc] sm:$0xf]
      %v700 = vld [vmem:[%s313 + $0x10] sm:$0xf]
      %v701 = vld [vmem:[%s313 + $0x14] sm:$0xf]
      %v702 = vld [vmem:[%s313 + $0x18] sm:$0xf]
      %v703 = vld [vmem:[%s313 + $0x1c] sm:$0xf]
      %v704 = vld [vmem:[%s313 + $0x20] sm:$0xf]
      %v705 = vld [vmem:[%s313 + $0x24] sm:$0xf]
      %v706 = vld [vmem:[%s313 + $0x28] sm:$0xf]
      %v707 = vld [vmem:[%s313 + $0x2c] sm:$0xf]
      %v708 = vld [vmem:[%s313 + $0x30] sm:$0xf]
      %v709 = vld [vmem:[%s313 + $0x34] sm:$0xf]
      %v710 = vld [vmem:[%s313 + $0x38] sm:$0xf]
      %v711 = vld [vmem:[%s313 + $0x3c] sm:$0xf]
      %v712 = vld [vmem:[%s323] sm:$0xf]
      %v713 = vld [vmem:[%s323 + $0x4] sm:$0xf]
      %v714 = vld [vmem:[%s323 + $0x8] sm:$0xf]
      %v715 = vld [vmem:[%s323 + $0xc] sm:$0xf]
      %v716 = vld [vmem:[%s323 + $0x10] sm:$0xf]
      %v717 = vld [vmem:[%s323 + $0x14] sm:$0xf]
      %v718 = vld [vmem:[%s323 + $0x18] sm:$0xf]
      %v719 = vld [vmem:[%s323 + $0x1c] sm:$0xf]
      %v720 = vld [vmem:[%s323 + $0x20] sm:$0xf]
      %v721 = vld [vmem:[%s323 + $0x24] sm:$0xf]
      %v722 = vld [vmem:[%s323 + $0x28] sm:$0xf]
      %v723 = vld [vmem:[%s323 + $0x2c] sm:$0xf]
      %v724 = vld [vmem:[%s323 + $0x30] sm:$0xf]
      %v725 = vld [vmem:[%s323 + $0x34] sm:$0xf]
      %v726 = vld [vmem:[%s323 + $0x38] sm:$0xf]
      %v727 = vld [vmem:[%s323 + $0x3c] sm:$0xf]
      %v730 = vunpack.c.l.b16 %v694
      %v731 = vunpack.c.l.b16 %v695
      %v732 = vpack.c.b16 %v731, %v730
      %733 = vrot.lane.b32.xlu0 %v732, 112
      %v734 = vpop.permute.xlu0 %733
      %v751 = vunpack.c.l.b16 %v696
      %v752 = vunpack.c.l.b16 %v697
      %v753 = vunpack.c.l.b16 %v698
      %v754 = vunpack.c.l.b16 %v699
      %v755 = vunpack.c.l.b16 %v700
      %v756 = vunpack.c.l.b16 %v701
      %v757 = vunpack.c.l.b16 %v702
      %v758 = vunpack.c.l.b16 %v703
      %v759 = vunpack.c.l.b16 %v704
      %v760 = vunpack.c.l.b16 %v705
      %v761 = vunpack.c.l.b16 %v706
      %v762 = vunpack.c.l.b16 %v707
      %v763 = vunpack.c.l.b16 %v708
      %v764 = vunpack.c.l.b16 %v709
      %v765 = vunpack.c.l.b16 %v710
      %v766 = vunpack.c.l.b16 %v711
      %v767 = vpack.c.b16 %v752, %v751
      %v768 = vpack.c.b16 %v754, %v753
      %v769 = vpack.c.b16 %v756, %v755
      %v770 = vpack.c.b16 %v758, %v757
      %v771 = vpack.c.b16 %v760, %v759
      %v772 = vpack.c.b16 %v762, %v761
      %v773 = vpack.c.b16 %v764, %v763
      %v774 = vpack.c.b16 %v766, %v765
      %775 = vrot.lane.b32.xlu0 %v767, 112
      %v776 = vpop.permute.xlu0 %775
      %777 = vrot.lane.b32.xlu0 %v768, 112
      %v778 = vpop.permute.xlu0 %777
      %779 = vrot.lane.b32.xlu0 %v769, 112
      %v780 = vpop.permute.xlu0 %779
      %781 = vrot.lane.b32.xlu0 %v770, 112
      %v782 = vpop.permute.xlu0 %781
      %783 = vrot.lane.b32.xlu0 %v771, 112
      %v784 = vpop.permute.xlu0 %783
      %785 = vrot.lane.b32.xlu0 %v772, 112
      %v786 = vpop.permute.xlu0 %785
      %787 = vrot.lane.b32.xlu0 %v773, 112
      %v788 = vpop.permute.xlu0 %787
      %789 = vrot.lane.b32.xlu0 %v774, 112
      %v790 = vpop.permute.xlu0 %789
      %v792 = vsel %vm463, %v734, 0
      %v795 = vsel %vm463, %v776, 0
      %v798 = vsel %vm463, %v778, 0
      %v801 = vsel %vm463, %v780, 0
      %v804 = vsel %vm463, %v782, 0
      %v807 = vsel %vm463, %v784, 0
      %v810 = vsel %vm463, %v786, 0
      %v813 = vsel %vm463, %v788, 0
      %v816 = vsel %vm463, %v790, 0
      %818 = vmatprep.subr.bf16.mxu0 0
      %819 = vmatpush1.bf16.xpose.msra.mxu0 %v795
      %820 = vmatprep.subr.bf16.mxu0 0
      %821 = vmatpush1.bf16.xpose.msra.mxu0 %v798
      %822 = vmatprep.subr.bf16.mxu0 0
      %823 = vmatpush1.bf16.xpose.msra.mxu0 %v801
      %824 = vmatprep.subr.bf16.mxu0 0
      %825 = vmatpush1.bf16.xpose.msra.mxu0 %v804
      %826 = vmatprep.subr.bf16.mxu0 0
      %827 = vmatpush1.bf16.xpose.msra.mxu0 %v807
      %828 = vmatprep.subr.bf16.mxu0 0
      %829 = vmatpush1.bf16.xpose.msra.mxu0 %v810
      %830 = vmatprep.subr.bf16.mxu0 0
      %831 = vmatpush1.bf16.xpose.msra.mxu0 %v813
      %832 = vmatprep.subr.bf16.mxu0 0
      %833 = vmatpush1.bf16.xpose.msra.mxu0 %v816
      %834 = vmatprep.subr.bf16.mxu0 0
      %835 = vmatpush1.bf16.xpose.msra.mxu0 0
      %836 = vmatprep.subr.bf16.mxu0 0
      %837 = vmatpush1.bf16.xpose.msra.mxu0 0
      %838 = vmatprep.subr.bf16.mxu0 0
      %839 = vmatpush1.bf16.xpose.msra.mxu0 0
      %840 = vmatprep.subr.bf16.mxu0 0
      %841 = vmatpush1.bf16.xpose.msra.mxu0 0
      %842 = vmatprep.subr.bf16.mxu0 0
      %843 = vmatpush1.bf16.xpose.msra.mxu0 0
      %844 = vmatprep.subr.bf16.mxu0 0
      %845 = vmatpush1.bf16.xpose.msra.mxu0 0
      %846 = vmatprep.subr.bf16.mxu0 0
      %847 = vmatpush1.bf16.xpose.msra.mxu0 0
      %848 = vmatprep.subr.bf16.mxu0 0
      %849 = vmatpush1.bf16.xpose.msra.mxu0 0
      %850 = vmatprep.mubr.bf16.mxu0 0
      %851 = vmatmul.mubr.bf16.gmra.mrb[0].mxu0 %v792
      %v852 = vpop.f32.mrb[0].mxu0
      %v853 = vadd.f32 0.0, %v852
      %v854 = vpop.f32.mrb[0].mxu0
      %v855 = vpop.f32.mrb[0].mxu0
      %v856 = vadd.f32 0.0, %v855
      %v857 = vpop.f32.mrb[0].mxu0
      %858 = vdwg.mxu0
      %v859 = vmul.f32 %v853, 0.25
      %v860 = vmul.f32 %v856, 0.25
      %s861 = scalar_lea.vmem %s346, 16
      %862 = vst [vmem:[%s861] sm:$0xff] %v859
      %863 = vst [vmem:[%s861 + $0x8] sm:$0xff] %v860
      %v864 = vsel %vm538, %v859, -1e+30
      %v865 = vsel %vm538, %v860, -1e+30
      %s866 = scalar_lea.vmem [#allocation2], 16
      %v867 = vld [vmem:[%s866] sm:$0xff]
      %v868 = vld [vmem:[%s866 + $0x8] sm:$0xff]
      %869 = vmax.xlane.f32.xlu0 %v864
      %v870 = vpop.xlane.xlu0 %869
      %871 = vmax.xlane.f32.xlu0 %v865
      %v872 = vpop.xlane.xlu0 %871
      %v873 = vmax.f32 %v867, %v870
      %v874 = vmax.f32 %v868, %v872
      %v875 = vsub.f32 %v867, %v873
      %v876 = vsub.f32 %v868, %v874
      %v877 = vmul.f32 %v875, 1.442695
      %v878 = vpow.pop %v877
      %v879 = vmul.f32 %v876, 1.442695
      %v880 = vpow.pop %v879
      %882 = vset.pattern.permute.xlu0 0
      %883 = vperm.xlu0 %882, %v873
      %v884 = vpop.permute.xlu0 %883
      %887 = vset.pattern.permute.xlu0 0
      %888 = vperm.xlu0 %887, %v874
      %v889 = vpop.permute.xlu0 %888
      %v891 = vsub.f32 %v864, %v884
      %v892 = vsub.f32 %v865, %v889
      %v893 = vmul.f32 %v891, 1.442695
      %v894 = vpow.pop %v893
      %v895 = vmul.f32 %v892, 1.442695
      %v896 = vpow.pop %v895
      %s897 = scalar_lea.vmem [#allocation3], 16
      %v898 = vld [vmem:[%s897] sm:$0xff]
      %v899 = vld [vmem:[%s897 + $0x8] sm:$0xff]
      %v900 = vmul.f32 %v878, %v898
      %v901 = vmul.f32 %v880, %v899
      %902 = vadd.xlane.f32.xlu0 %v894
      %v903 = vpop.xlane.xlu0 %902
      %904 = vadd.xlane.f32.xlu0 %v896
      %v905 = vpop.xlane.xlu0 %904
      %v906 = vadd.f32 %v900, %v903
      %v907 = vadd.f32 %v901, %v905
      %908 = vst.msk [vmem:[%s897] sm:$0xff] %vm581, %v906
      %909 = vst.msk [vmem:[%s897 + $0x8] sm:$0xff] %vm581, %v907
      %s910 = scalar_lea.vmem [#allocation4], 16
      %v911 = vld [vmem:[%s910] sm:$0xff]
      %v912 = vld [vmem:[%s910 + $0x8] sm:$0xff]
      %914 = vset.pattern.permute.xlu0 0
      %915 = vperm.xlu0 %914, %v878
      %v916 = vpop.permute.xlu0 %915
      %919 = vset.pattern.permute.xlu0 0
      %920 = vperm.xlu0 %919, %v880
      %v921 = vpop.permute.xlu0 %920
      %v923 = vmul.f32 %v916, %v911
      %v924 = vmul.f32 %v921, %v912
      %v925 = vpack.c.bf16 %v896, %v894
      %v942 = vunpack.c.l.b16 %v712
      %v943 = vunpack.c.l.b16 %v713
      %v944 = vunpack.c.l.b16 %v714
      %v945 = vunpack.c.l.b16 %v715
      %v946 = vunpack.c.l.b16 %v716
      %v947 = vunpack.c.l.b16 %v717
      %v948 = vunpack.c.l.b16 %v718
      %v949 = vunpack.c.l.b16 %v719
      %v950 = vunpack.c.l.b16 %v720
      %v951 = vunpack.c.l.b16 %v721
      %v952 = vunpack.c.l.b16 %v722
      %v953 = vunpack.c.l.b16 %v723
      %v954 = vunpack.c.l.b16 %v724
      %v955 = vunpack.c.l.b16 %v725
      %v956 = vunpack.c.l.b16 %v726
      %v957 = vunpack.c.l.b16 %v727
      %v958 = vpack.c.b16 %v943, %v942
      %v959 = vpack.c.b16 %v945, %v944
      %v960 = vpack.c.b16 %v947, %v946
      %v961 = vpack.c.b16 %v949, %v948
      %v962 = vpack.c.b16 %v951, %v950
      %v963 = vpack.c.b16 %v953, %v952
      %v964 = vpack.c.b16 %v955, %v954
      %v965 = vpack.c.b16 %v957, %v956
      %966 = vrot.lane.b32.xlu0 %v958, 112
      %v967 = vpop.permute.xlu0 %966
      %968 = vrot.lane.b32.xlu0 %v959, 112
      %v969 = vpop.permute.xlu0 %968
      %970 = vrot.lane.b32.xlu0 %v960, 112
      %v971 = vpop.permute.xlu0 %970
      %972 = vrot.lane.b32.xlu0 %v961, 112
      %v973 = vpop.permute.xlu0 %972
      %974 = vrot.lane.b32.xlu0 %v962, 112
      %v975 = vpop.permute.xlu0 %974
      %976 = vrot.lane.b32.xlu0 %v963, 112
      %v977 = vpop.permute.xlu0 %976
      %978 = vrot.lane.b32.xlu0 %v964, 112
      %v979 = vpop.permute.xlu0 %978
      %980 = vrot.lane.b32.xlu0 %v965, 112
      %v981 = vpop.permute.xlu0 %980
      %990 = vmatprep.subr.bf16.mxu0 0
      %991 = vmatpush1.bf16.msra.mxu0 %v967
      %992 = vmatprep.subr.bf16.mxu0 0
      %993 = vmatpush1.bf16.msra.mxu0 %v969
      %994 = vmatprep.subr.bf16.mxu0 0
      %995 = vmatpush1.bf16.msra.mxu0 %v971
      %996 = vmatprep.subr.bf16.mxu0 0
      %997 = vmatpush1.bf16.msra.mxu0 %v973
      %998 = vmatprep.subr.bf16.mxu0 0
      %999 = vmatpush1.bf16.msra.mxu0 %v975
      %1000 = vmatprep.subr.bf16.mxu0 0
      %1001 = vmatpush1.bf16.msra.mxu0 %v977
      %1002 = vmatprep.subr.bf16.mxu0 0
      %1003 = vmatpush1.bf16.msra.mxu0 %v979
      %1004 = vmatprep.subr.bf16.mxu0 0
      %1005 = vmatpush1.bf16.msra.mxu0 %v981
      %1006 = vmatprep.subr.bf16.mxu0 0
      %1007 = vmatpush1.bf16.msra.mxu0 0
      %1008 = vmatprep.subr.bf16.mxu0 0
      %1009 = vmatpush1.bf16.msra.mxu0 0
      %1010 = vmatprep.subr.bf16.mxu0 0
      %1011 = vmatpush1.bf16.msra.mxu0 0
      %1012 = vmatprep.subr.bf16.mxu0 0
      %1013 = vmatpush1.bf16.msra.mxu0 0
      %1014 = vmatprep.subr.bf16.mxu0 0
      %1015 = vmatpush1.bf16.msra.mxu0 0
      %1016 = vmatprep.subr.bf16.mxu0 0
      %1017 = vmatpush1.bf16.msra.mxu0 0
      %1018 = vmatprep.subr.bf16.mxu0 0
      %1019 = vmatpush1.bf16.msra.mxu0 0
      %1020 = vmatprep.subr.bf16.mxu0 0
      %1021 = vmatpush1.bf16.msra.mxu0 0
      %1022 = vmatprep.mubr.bf16.mxu0 0
      %1023 = vmatmul.mubr.bf16.gmra.mrb[0].mxu0 %v925
      %v1024 = vpop.f32.mrb[0].mxu0
      %v1025 = vadd.f32 0.0, %v1024
      %v1026 = vpop.f32.mrb[0].mxu0
      %v1027 = vpop.f32.mrb[0].mxu0
      %v1028 = vadd.f32 0.0, %v1027
      %v1029 = vpop.f32.mrb[0].mxu0
      %1030 = vdwg.mxu0
      %v1031 = vadd.f32 %v923, %v1025
      %v1032 = vadd.f32 %v924, %v1028
      %1033 = vst.msk [vmem:[%s910] sm:$0xff] %vm463, %v1031
      %1034 = vst.msk [vmem:[%s910 + $0x8] sm:$0xff] %vm463, %v1032
      %1035 = vst.msk [vmem:[%s866] sm:$0xff] %vm581, %v873
      %1036 = vst.msk [vmem:[%s866 + $0x8] sm:$0xff] %vm581, %v874
      %v1037 = vld [vmem:[%s303] sm:$0xf]
      %v1038 = vld [vmem:[%s303 + $0x4] sm:$0xf]
      %v1039 = vld [vmem:[%s313] sm:$0xf]
      %v1040 = vld [vmem:[%s313 + $0x4] sm:$0xf]
      %v1041 = vld [vmem:[%s313 + $0x8] sm:$0xf]
      %v1042 = vld [vmem:[%s313 + $0xc] sm:$0xf]
      %v1043 = vld [vmem:[%s313 + $0x10] sm:$0xf]
      %v1044 = vld [vmem:[%s313 + $0x14] sm:$0xf]
      %v1045 = vld [vmem:[%s313 + $0x18] sm:$0xf]
      %v1046 = vld [vmem:[%s313 + $0x1c] sm:$0xf]
      %v1047 = vld [vmem:[%s313 + $0x20] sm:$0xf]
      %v1048 = vld [vmem:[%s313 + $0x24] sm:$0xf]
      %v1049 = vld [vmem:[%s313 + $0x28] sm:$0xf]
      %v1050 = vld [vmem:[%s313 + $0x2c] sm:$0xf]
      %v1051 = vld [vmem:[%s313 + $0x30] sm:$0xf]
      %v1052 = vld [vmem:[%s313 + $0x34] sm:$0xf]
      %v1053 = vld [vmem:[%s313 + $0x38] sm:$0xf]
      %v1054 = vld [vmem:[%s313 + $0x3c] sm:$0xf]
      %v1055 = vld [vmem:[%s323] sm:$0xf]
      %v1056 = vld [vmem:[%s323 + $0x4] sm:$0xf]
      %v1057 = vld [vmem:[%s323 + $0x8] sm:$0xf]
      %v1058 = vld [vmem:[%s323 + $0xc] sm:$0xf]
      %v1059 = vld [vmem:[%s323 + $0x10] sm:$0xf]
      %v1060 = vld [vmem:[%s323 + $0x14] sm:$0xf]
      %v1061 = vld [vmem:[%s323 + $0x18] sm:$0xf]
      %v1062 = vld [vmem:[%s323 + $0x1c] sm:$0xf]
      %v1063 = vld [vmem:[%s323 + $0x20] sm:$0xf]
      %v1064 = vld [vmem:[%s323 + $0x24] sm:$0xf]
      %v1065 = vld [vmem:[%s323 + $0x28] sm:$0xf]
      %v1066 = vld [vmem:[%s323 + $0x2c] sm:$0xf]
      %v1067 = vld [vmem:[%s323 + $0x30] sm:$0xf]
      %v1068 = vld [vmem:[%s323 + $0x34] sm:$0xf]
      %v1069 = vld [vmem:[%s323 + $0x38] sm:$0xf]
      %v1070 = vld [vmem:[%s323 + $0x3c] sm:$0xf]
      %v1073 = vunpack.c.l.b16 %v1037
      %v1074 = vunpack.c.l.b16 %v1038
      %v1075 = vpack.c.b16 %v1074, %v1073
      %1076 = vrot.lane.b32.xlu0 %v1075, 96
      %v1077 = vpop.permute.xlu0 %1076
      %v1094 = vunpack.c.l.b16 %v1039
      %v1095 = vunpack.c.l.b16 %v1040
      %v1096 = vunpack.c.l.b16 %v1041
      %v1097 = vunpack.c.l.b16 %v1042
      %v1098 = vunpack.c.l.b16 %v1043
      %v1099 = vunpack.c.l.b16 %v1044
      %v1100 = vunpack.c.l.b16 %v1045
      %v1101 = vunpack.c.l.b16 %v1046
      %v1102 = vunpack.c.l.b16 %v1047
      %v1103 = vunpack.c.l.b16 %v1048
      %v1104 = vunpack.c.l.b16 %v1049
      %v1105 = vunpack.c.l.b16 %v1050
      %v1106 = vunpack.c.l.b16 %v1051
      %v1107 = vunpack.c.l.b16 %v1052
      %v1108 = vunpack.c.l.b16 %v1053
      %v1109 = vunpack.c.l.b16 %v1054
      %v1110 = vpack.c.b16 %v1095, %v1094
      %v1111 = vpack.c.b16 %v1097, %v1096
      %v1112 = vpack.c.b16 %v1099, %v1098
      %v1113 = vpack.c.b16 %v1101, %v1100
      %v1114 = vpack.c.b16 %v1103, %v1102
      %v1115 = vpack.c.b16 %v1105, %v1104
      %v1116 = vpack.c.b16 %v1107, %v1106
      %v1117 = vpack.c.b16 %v1109, %v1108
      %1118 = vrot.lane.b32.xlu0 %v1110, 96
      %v1119 = vpop.permute.xlu0 %1118
      %1120 = vrot.lane.b32.xlu0 %v1111, 96
      %v1121 = vpop.permute.xlu0 %1120
      %1122 = vrot.lane.b32.xlu0 %v1112, 96
      %v1123 = vpop.permute.xlu0 %1122
      %1124 = vrot.lane.b32.xlu0 %v1113, 96
      %v1125 = vpop.permute.xlu0 %1124
      %1126 = vrot.lane.b32.xlu0 %v1114, 96
      %v1127 = vpop.permute.xlu0 %1126
      %1128 = vrot.lane.b32.xlu0 %v1115, 96
      %v1129 = vpop.permute.xlu0 %1128
      %1130 = vrot.lane.b32.xlu0 %v1116, 96
      %v1131 = vpop.permute.xlu0 %1130
      %1132 = vrot.lane.b32.xlu0 %v1117, 96
      %v1133 = vpop.permute.xlu0 %1132
      %v1135 = vsel %vm463, %v1077, 0
      %v1138 = vsel %vm463, %v1119, 0
      %v1141 = vsel %vm463, %v1121, 0
      %v1144 = vsel %vm463, %v1123, 0
      %v1147 = vsel %vm463, %v1125, 0
      %v1150 = vsel %vm463, %v1127, 0
      %v1153 = vsel %vm463, %v1129, 0
      %v1156 = vsel %vm463, %v1131, 0
      %v1159 = vsel %vm463, %v1133, 0
      %1161 = vmatprep.subr.bf16.mxu0 0
      %1162 = vmatpush1.bf16.xpose.msra.mxu0 %v1138
      %1163 = vmatprep.subr.bf16.mxu0 0
      %1164 = vmatpush1.bf16.xpose.msra.mxu0 %v1141
      %1165 = vmatprep.subr.bf16.mxu0 0
      %1166 = vmatpush1.bf16.xpose.msra.mxu0 %v1144
      %1167 = vmatprep.subr.bf16.mxu0 0
      %1168 = vmatpush1.bf16.xpose.msra.mxu0 %v1147
      %1169 = vmatprep.subr.bf16.mxu0 0
      %1170 = vmatpush1.bf16.xpose.msra.mxu0 %v1150
      %1171 = vmatprep.subr.bf16.mxu0 0
      %1172 = vmatpush1.bf16.xpose.msra.mxu0 %v1153
      %1173 = vmatprep.subr.bf16.mxu0 0
      %1174 = vmatpush1.bf16.xpose.msra.mxu0 %v1156
      %1175 = vmatprep.subr.bf16.mxu0 0
      %1176 = vmatpush1.bf16.xpose.msra.mxu0 %v1159
      %1177 = vmatprep.subr.bf16.mxu0 0
      %1178 = vmatpush1.bf16.xpose.msra.mxu0 0
      %1179 = vmatprep.subr.bf16.mxu0 0
      %1180 = vmatpush1.bf16.xpose.msra.mxu0 0
      %1181 = vmatprep.subr.bf16.mxu0 0
      %1182 = vmatpush1.bf16.xpose.msra.mxu0 0
      %1183 = vmatprep.subr.bf16.mxu0 0
      %1184 = vmatpush1.bf16.xpose.msra.mxu0 0
      %1185 = vmatprep.subr.bf16.mxu0 0
      %1186 = vmatpush1.bf16.xpose.msra.mxu0 0
      %1187 = vmatprep.subr.bf16.mxu0 0
      %1188 = vmatpush1.bf16.xpose.msra.mxu0 0
      %1189 = vmatprep.subr.bf16.mxu0 0
      %1190 = vmatpush1.bf16.xpose.msra.mxu0 0
      %1191 = vmatprep.subr.bf16.mxu0 0
      %1192 = vmatpush1.bf16.xpose.msra.mxu0 0
      %1193 = vmatprep.mubr.bf16.mxu0 0
      %1194 = vmatmul.mubr.bf16.gmra.mrb[0].mxu0 %v1135
      %v1195 = vpop.f32.mrb[0].mxu0
      %v1196 = vadd.f32 0.0, %v1195
      %v1197 = vpop.f32.mrb[0].mxu0
      %v1198 = vpop.f32.mrb[0].mxu0
      %v1199 = vadd.f32 0.0, %v1198
      %v1200 = vpop.f32.mrb[0].mxu0
      %1201 = vdwg.mxu0
      %v1202 = vmul.f32 %v1196, 0.25
      %v1203 = vmul.f32 %v1199, 0.25
      %s1204 = scalar_lea.vmem %s346, 32
      %1205 = vst [vmem:[%s1204] sm:$0xff] %v1202
      %1206 = vst [vmem:[%s1204 + $0x8] sm:$0xff] %v1203
      %v1207 = vsel %vm538, %v1202, -1e+30
      %v1208 = vsel %vm538, %v1203, -1e+30
      %s1209 = scalar_lea.vmem [#allocation2], 32
      %v1210 = vld [vmem:[%s1209] sm:$0xff]
      %v1211 = vld [vmem:[%s1209 + $0x8] sm:$0xff]
      %1212 = vmax.xlane.f32.xlu0 %v1207
      %v1213 = vpop.xlane.xlu0 %1212
      %1214 = vmax.xlane.f32.xlu0 %v1208
      %v1215 = vpop.xlane.xlu0 %1214
      %v1216 = vmax.f32 %v1210, %v1213
      %v1217 = vmax.f32 %v1211, %v1215
      %v1218 = vsub.f32 %v1210, %v1216
      %v1219 = vsub.f32 %v1211, %v1217
      %v1220 = vmul.f32 %v1218, 1.442695
      %v1221 = vpow.pop %v1220
      %v1222 = vmul.f32 %v1219, 1.442695
      %v1223 = vpow.pop %v1222
      %1225 = vset.pattern.permute.xlu0 0
      %1226 = vperm.xlu0 %1225, %v1216
      %v1227 = vpop.permute.xlu0 %1226
      %1230 = vset.pattern.permute.xlu0 0
      %1231 = vperm.xlu0 %1230, %v1217
      %v1232 = vpop.permute.xlu0 %1231
      %v1234 = vsub.f32 %v1207, %v1227
      %v1235 = vsub.f32 %v1208, %v1232
      %v1236 = vmul.f32 %v1234, 1.442695
      %v1237 = vpow.pop %v1236
      %v1238 = vmul.f32 %v1235, 1.442695
      %v1239 = vpow.pop %v1238
      %s1240 = scalar_lea.vmem [#allocation3], 32
      %v1241 = vld [vmem:[%s1240] sm:$0xff]
      %v1242 = vld [vmem:[%s1240 + $0x8] sm:$0xff]
      %v1243 = vmul.f32 %v1221, %v1241
      %v1244 = vmul.f32 %v1223, %v1242
      %1245 = vadd.xlane.f32.xlu0 %v1237
      %v1246 = vpop.xlane.xlu0 %1245
      %1247 = vadd.xlane.f32.xlu0 %v1239
      %v1248 = vpop.xlane.xlu0 %1247
      %v1249 = vadd.f32 %v1243, %v1246
      %v1250 = vadd.f32 %v1244, %v1248
      %1251 = vst.msk [vmem:[%s1240] sm:$0xff] %vm581, %v1249
      %1252 = vst.msk [vmem:[%s1240 + $0x8] sm:$0xff] %vm581, %v1250
      %s1253 = scalar_lea.vmem [#allocation4], 32
      %v1254 = vld [vmem:[%s1253] sm:$0xff]
      %v1255 = vld [vmem:[%s1253 + $0x8] sm:$0xff]
      %1257 = vset.pattern.permute.xlu0 0
      %1258 = vperm.xlu0 %1257, %v1221
      %v1259 = vpop.permute.xlu0 %1258
      %1262 = vset.pattern.permute.xlu0 0
      %1263 = vperm.xlu0 %1262, %v1223
      %v1264 = vpop.permute.xlu0 %1263
      %v1266 = vmul.f32 %v1259, %v1254
      %v1267 = vmul.f32 %v1264, %v1255
      %v1268 = vpack.c.bf16 %v1239, %v1237
      %v1285 = vunpack.c.l.b16 %v1055
      %v1286 = vunpack.c.l.b16 %v1056
      %v1287 = vunpack.c.l.b16 %v1057
      %v1288 = vunpack.c.l.b16 %v1058
      %v1289 = vunpack.c.l.b16 %v1059
      %v1290 = vunpack.c.l.b16 %v1060
      %v1291 = vunpack.c.l.b16 %v1061
      %v1292 = vunpack.c.l.b16 %v1062
      %v1293 = vunpack.c.l.b16 %v1063
      %v1294 = vunpack.c.l.b16 %v1064
      %v1295 = vunpack.c.l.b16 %v1065
      %v1296 = vunpack.c.l.b16 %v1066
      %v1297 = vunpack.c.l.b16 %v1067
      %v1298 = vunpack.c.l.b16 %v1068
      %v1299 = vunpack.c.l.b16 %v1069
      %v1300 = vunpack.c.l.b16 %v1070
      %v1301 = vpack.c.b16 %v1286, %v1285
      %v1302 = vpack.c.b16 %v1288, %v1287
      %v1303 = vpack.c.b16 %v1290, %v1289
      %v1304 = vpack.c.b16 %v1292, %v1291
      %v1305 = vpack.c.b16 %v1294, %v1293
      %v1306 = vpack.c.b16 %v1296, %v1295
      %v1307 = vpack.c.b16 %v1298, %v1297
      %v1308 = vpack.c.b16 %v1300, %v1299
      %1309 = vrot.lane.b32.xlu0 %v1301, 96
      %v1310 = vpop.permute.xlu0 %1309
      %1311 = vrot.lane.b32.xlu0 %v1302, 96
      %v1312 = vpop.permute.xlu0 %1311
      %1313 = vrot.lane.b32.xlu0 %v1303, 96
      %v1314 = vpop.permute.xlu0 %1313
      %1315 = vrot.lane.b32.xlu0 %v1304, 96
      %v1316 = vpop.permute.xlu0 %1315
      %1317 = vrot.lane.b32.xlu0 %v1305, 96
      %v1318 = vpop.permute.xlu0 %1317
      %1319 = vrot.lane.b32.xlu0 %v1306, 96
      %v1320 = vpop.permute.xlu0 %1319
      %1321 = vrot.lane.b32.xlu0 %v1307, 96
      %v1322 = vpop.permute.xlu0 %1321
      %1323 = vrot.lane.b32.xlu0 %v1308, 96
      %v1324 = vpop.permute.xlu0 %1323
      %1333 = vmatprep.subr.bf16.mxu0 0
      %1334 = vmatpush1.bf16.msra.mxu0 %v1310
      %1335 = vmatprep.subr.bf16.mxu0 0
      %1336 = vmatpush1.bf16.msra.mxu0 %v1312
      %1337 = vmatprep.subr.bf16.mxu0 0
      %1338 = vmatpush1.bf16.msra.mxu0 %v1314
      %1339 = vmatprep.subr.bf16.mxu0 0
      %1340 = vmatpush1.bf16.msra.mxu0 %v1316
      %1341 = vmatprep.subr.bf16.mxu0 0
      %1342 = vmatpush1.bf16.msra.mxu0 %v1318
      %1343 = vmatprep.subr.bf16.mxu0 0
      %1344 = vmatpush1.bf16.msra.mxu0 %v1320
      %1345 = vmatprep.subr.bf16.mxu0 0
      %1346 = vmatpush1.bf16.msra.mxu0 %v1322
      %1347 = vmatprep.subr.bf16.mxu0 0
      %1348 = vmatpush1.bf16.msra.mxu0 %v1324
      %1349 = vmatprep.subr.bf16.mxu0 0
      %1350 = vmatpush1.bf16.msra.mxu0 0
      %1351 = vmatprep.subr.bf16.mxu0 0
      %1352 = vmatpush1.bf16.msra.mxu0 0
      %1353 = vmatprep.subr.bf16.mxu0 0
      %1354 = vmatpush1.bf16.msra.mxu0 0
      %1355 = vmatprep.subr.bf16.mxu0 0
      %1356 = vmatpush1.bf16.msra.mxu0 0
      %1357 = vmatprep.subr.bf16.mxu0 0
      %1358 = vmatpush1.bf16.msra.mxu0 0
      %1359 = vmatprep.subr.bf16.mxu0 0
      %1360 = vmatpush1.bf16.msra.mxu0 0
      %1361 = vmatprep.subr.bf16.mxu0 0
      %1362 = vmatpush1.bf16.msra.mxu0 0
      %1363 = vmatprep.subr.bf16.mxu0 0
      %1364 = vmatpush1.bf16.msra.mxu0 0
      %1365 = vmatprep.mubr.bf16.mxu0 0
      %1366 = vmatmul.mubr.bf16.gmra.mrb[0].mxu0 %v1268
      %v1367 = vpop.f32.mrb[0].mxu0
      %v1368 = vadd.f32 0.0, %v1367
      %v1369 = vpop.f32.mrb[0].mxu0
      %v1370 = vpop.f32.mrb[0].mxu0
      %v1371 = vadd.f32 0.0, %v1370
      %v1372 = vpop.f32.mrb[0].mxu0
      %1373 = vdwg.mxu0
      %v1374 = vadd.f32 %v1266, %v1368
      %v1375 = vadd.f32 %v1267, %v1371
      %1376 = vst.msk [vmem:[%s1253] sm:$0xff] %vm463, %v1374
      %1377 = vst.msk [vmem:[%s1253 + $0x8] sm:$0xff] %vm463, %v1375
      %1378 = vst.msk [vmem:[%s1209] sm:$0xff] %vm581, %v1216
      %1379 = vst.msk [vmem:[%s1209 + $0x8] sm:$0xff] %vm581, %v1217
      %v1380 = vld [vmem:[%s303] sm:$0xf]
      %v1381 = vld [vmem:[%s303 + $0x4] sm:$0xf]
      %v1382 = vld [vmem:[%s313] sm:$0xf]
      %v1383 = vld [vmem:[%s313 + $0x4] sm:$0xf]
      %v1384 = vld [vmem:[%s313 + $0x8] sm:$0xf]
      %v1385 = vld [vmem:[%s313 + $0xc] sm:$0xf]
      %v1386 = vld [vmem:[%s313 + $0x10] sm:$0xf]
      %v1387 = vld [vmem:[%s313 + $0x14] sm:$0xf]
      %v1388 = vld [vmem:[%s313 + $0x18] sm:$0xf]
      %v1389 = vld [vmem:[%s313 + $0x1c] sm:$0xf]
      %v1390 = vld [vmem:[%s313 + $0x20] sm:$0xf]
      %v1391 = vld [vmem:[%s313 + $0x24] sm:$0xf]
      %v1392 = vld [vmem:[%s313 + $0x28] sm:$0xf]
      %v1393 = vld [vmem:[%s313 + $0x2c] sm:$0xf]
      %v1394 = vld [vmem:[%s313 + $0x30] sm:$0xf]
      %v1395 = vld [vmem:[%s313 + $0x34] sm:$0xf]
      %v1396 = vld [vmem:[%s313 + $0x38] sm:$0xf]
      %v1397 = vld [vmem:[%s313 + $0x3c] sm:$0xf]
      %v1398 = vld [vmem:[%s323] sm:$0xf]
      %v1399 = vld [vmem:[%s323 + $0x4] sm:$0xf]
      %v1400 = vld [vmem:[%s323 + $0x8] sm:$0xf]
      %v1401 = vld [vmem:[%s323 + $0xc] sm:$0xf]
      %v1402 = vld [vmem:[%s323 + $0x10] sm:$0xf]
      %v1403 = vld [vmem:[%s323 + $0x14] sm:$0xf]
      %v1404 = vld [vmem:[%s323 + $0x18] sm:$0xf]
      %v1405 = vld [vmem:[%s323 + $0x1c] sm:$0xf]
      %v1406 = vld [vmem:[%s323 + $0x20] sm:$0xf]
      %v1407 = vld [vmem:[%s323 + $0x24] sm:$0xf]
      %v1408 = vld [vmem:[%s323 + $0x28] sm:$0xf]
      %v1409 = vld [vmem:[%s323 + $0x2c] sm:$0xf]
      %v1410 = vld [vmem:[%s323 + $0x30] sm:$0xf]
      %v1411 = vld [vmem:[%s323 + $0x34] sm:$0xf]
      %v1412 = vld [vmem:[%s323 + $0x38] sm:$0xf]
      %v1413 = vld [vmem:[%s323 + $0x3c] sm:$0xf]
      %v1416 = vunpack.c.l.b16 %v1380
      %v1417 = vunpack.c.l.b16 %v1381
      %v1418 = vpack.c.b16 %v1417, %v1416
      %1419 = vrot.lane.b32.xlu0 %v1418, 80
      %v1420 = vpop.permute.xlu0 %1419
      %v1437 = vunpack.c.l.b16 %v1382
      %v1438 = vunpack.c.l.b16 %v1383
      %v1439 = vunpack.c.l.b16 %v1384
      %v1440 = vunpack.c.l.b16 %v1385
      %v1441 = vunpack.c.l.b16 %v1386
      %v1442 = vunpack.c.l.b16 %v1387
      %v1443 = vunpack.c.l.b16 %v1388
      %v1444 = vunpack.c.l.b16 %v1389
      %v1445 = vunpack.c.l.b16 %v1390
      %v1446 = vunpack.c.l.b16 %v1391
      %v1447 = vunpack.c.l.b16 %v1392
      %v1448 = vunpack.c.l.b16 %v1393
      %v1449 = vunpack.c.l.b16 %v1394
      %v1450 = vunpack.c.l.b16 %v1395
      %v1451 = vunpack.c.l.b16 %v1396
      %v1452 = vunpack.c.l.b16 %v1397
      %v1453 = vpack.c.b16 %v1438, %v1437
      %v1454 = vpack.c.b16 %v1440, %v1439
      %v1455 = vpack.c.b16 %v1442, %v1441
      %v1456 = vpack.c.b16 %v1444, %v1443
      %v1457 = vpack.c.b16 %v1446, %v1445
      %v1458 = vpack.c.b16 %v1448, %v1447
      %v1459 = vpack.c.b16 %v1450, %v1449
      %v1460 = vpack.c.b16 %v1452, %v1451
      %1461 = vrot.lane.b32.xlu0 %v1453, 80
      %v1462 = vpop.permute.xlu0 %1461
      %1463 = vrot.lane.b32.xlu0 %v1454, 80
      %v1464 = vpop.permute.xlu0 %1463
      %1465 = vrot.lane.b32.xlu0 %v1455, 80
      %v1466 = vpop.permute.xlu0 %1465
      %1467 = vrot.lane.b32.xlu0 %v1456, 80
      %v1468 = vpop.permute.xlu0 %1467
      %1469 = vrot.lane.b32.xlu0 %v1457, 80
      %v1470 = vpop.permute.xlu0 %1469
      %1471 = vrot.lane.b32.xlu0 %v1458, 80
      %v1472 = vpop.permute.xlu0 %1471
      %1473 = vrot.lane.b32.xlu0 %v1459, 80
      %v1474 = vpop.permute.xlu0 %1473
      %1475 = vrot.lane.b32.xlu0 %v1460, 80
      %v1476 = vpop.permute.xlu0 %1475
      %v1478 = vsel %vm463, %v1420, 0
      %v1481 = vsel %vm463, %v1462, 0
      %v1484 = vsel %vm463, %v1464, 0
      %v1487 = vsel %vm463, %v1466, 0
      %v1490 = vsel %vm463, %v1468, 0
      %v1493 = vsel %vm463, %v1470, 0
      %v1496 = vsel %vm463, %v1472, 0
      %v1499 = vsel %vm463, %v1474, 0
      %v1502 = vsel %vm463, %v1476, 0
      %1504 = vmatprep.subr.bf16.mxu0 0
      %1505 = vmatpush1.bf16.xpose.msra.mxu0 %v1481
      %1506 = vmatprep.subr.bf16.mxu0 0
      %1507 = vmatpush1.bf16.xpose.msra.mxu0 %v1484
      %1508 = vmatprep.subr.bf16.mxu0 0
      %1509 = vmatpush1.bf16.xpose.msra.mxu0 %v1487
      %1510 = vmatprep.subr.bf16.mxu0 0
      %1511 = vmatpush1.bf16.xpose.msra.mxu0 %v1490
      %1512 = vmatprep.subr.bf16.mxu0 0
      %1513 = vmatpush1.bf16.xpose.msra.mxu0 %v1493
      %1514 = vmatprep.subr.bf16.mxu0 0
      %1515 = vmatpush1.bf16.xpose.msra.mxu0 %v1496
      %1516 = vmatprep.subr.bf16.mxu0 0
      %1517 = vmatpush1.bf16.xpose.msra.mxu0 %v1499
      %1518 = vmatprep.subr.bf16.mxu0 0
      %1519 = vmatpush1.bf16.xpose.msra.mxu0 %v1502
      %1520 = vmatprep.subr.bf16.mxu0 0
      %1521 = vmatpush1.bf16.xpose.msra.mxu0 0
      %1522 = vmatprep.subr.bf16.mxu0 0
      %1523 = vmatpush1.bf16.xpose.msra.mxu0 0
      %1524 = vmatprep.subr.bf16.mxu0 0
      %1525 = vmatpush1.bf16.xpose.msra.mxu0 0
      %1526 = vmatprep.subr.bf16.mxu0 0
      %1527 = vmatpush1.bf16.xpose.msra.mxu0 0
      %1528 = vmatprep.subr.bf16.mxu0 0
      %1529 = vmatpush1.bf16.xpose.msra.mxu0 0
      %1530 = vmatprep.subr.bf16.mxu0 0
      %1531 = vmatpush1.bf16.xpose.msra.mxu0 0
      %1532 = vmatprep.subr.bf16.mxu0 0
      %1533 = vmatpush1.bf16.xpose.msra.mxu0 0
      %1534 = vmatprep.subr.bf16.mxu0 0
      %1535 = vmatpush1.bf16.xpose.msra.mxu0 0
      %1536 = vmatprep.mubr.bf16.mxu0 0
      %1537 = vmatmul.mubr.bf16.gmra.mrb[0].mxu0 %v1478
      %v1538 = vpop.f32.mrb[0].mxu0
      %v1539 = vadd.f32 0.0, %v1538
      %v1540 = vpop.f32.mrb[0].mxu0
      %v1541 = vpop.f32.mrb[0].mxu0
      %v1542 = vadd.f32 0.0, %v1541
      %v1543 = vpop.f32.mrb[0].mxu0
      %1544 = vdwg.mxu0
      %v1545 = vmul.f32 %v1539, 0.25
      %v1546 = vmul.f32 %v1542, 0.25
      %s1547 = scalar_lea.vmem %s346, 48
      %1548 = vst [vmem:[%s1547] sm:$0xff] %v1545
      %1549 = vst [vmem:[%s1547 + $0x8] sm:$0xff] %v1546
      %v1550 = vsel %vm538, %v1545, -1e+30
      %v1551 = vsel %vm538, %v1546, -1e+30
      %s1552 = scalar_lea.vmem [#allocation2], 48
      %v1553 = vld [vmem:[%s1552] sm:$0xff]
      %v1554 = vld [vmem:[%s1552 + $0x8] sm:$0xff]
      %1555 = vmax.xlane.f32.xlu0 %v1550
      %v1556 = vpop.xlane.xlu0 %1555
      %1557 = vmax.xlane.f32.xlu0 %v1551
      %v1558 = vpop.xlane.xlu0 %1557
      %v1559 = vmax.f32 %v1553, %v1556
      %v1560 = vmax.f32 %v1554, %v1558
      %v1561 = vsub.f32 %v1553, %v1559
      %v1562 = vsub.f32 %v1554, %v1560
      %v1563 = vmul.f32 %v1561, 1.442695
      %v1564 = vpow.pop %v1563
      %v1565 = vmul.f32 %v1562, 1.442695
      %v1566 = vpow.pop %v1565
      %1568 = vset.pattern.permute.xlu0 0
      %1569 = vperm.xlu0 %1568, %v1559
      %v1570 = vpop.permute.xlu0 %1569
      %1573 = vset.pattern.permute.xlu0 0
      %1574 = vperm.xlu0 %1573, %v1560
      %v1575 = vpop.permute.xlu0 %1574
      %v1577 = vsub.f32 %v1550, %v1570
      %v1578 = vsub.f32 %v1551, %v1575
      %v1579 = vmul.f32 %v1577, 1.442695
      %v1580 = vpow.pop %v1579
      %v1581 = vmul.f32 %v1578, 1.442695
      %v1582 = vpow.pop %v1581
      %s1583 = scalar_lea.vmem [#allocation3], 48
      %v1584 = vld [vmem:[%s1583] sm:$0xff]
      %v1585 = vld [vmem:[%s1583 + $0x8] sm:$0xff]
      %v1586 = vmul.f32 %v1564, %v1584
      %v1587 = vmul.f32 %v1566, %v1585
      %1588 = vadd.xlane.f32.xlu0 %v1580
      %v1589 = vpop.xlane.xlu0 %1588
      %1590 = vadd.xlane.f32.xlu0 %v1582
      %v1591 = vpop.xlane.xlu0 %1590
      %v1592 = vadd.f32 %v1586, %v1589
      %v1593 = vadd.f32 %v1587, %v1591
      %1594 = vst.msk [vmem:[%s1583] sm:$0xff] %vm581, %v1592
      %1595 = vst.msk [vmem:[%s1583 + $0x8] sm:$0xff] %vm581, %v1593
      %s1596 = scalar_lea.vmem [#allocation4], 48
      %v1597 = vld [vmem:[%s1596] sm:$0xff]
      %v1598 = vld [vmem:[%s1596 + $0x8] sm:$0xff]
      %1600 = vset.pattern.permute.xlu0 0
      %1601 = vperm.xlu0 %1600, %v1564
      %v1602 = vpop.permute.xlu0 %1601
      %1605 = vset.pattern.permute.xlu0 0
      %1606 = vperm.xlu0 %1605, %v1566
      %v1607 = vpop.permute.xlu0 %1606
      %v1609 = vmul.f32 %v1602, %v1597
      %v1610 = vmul.f32 %v1607, %v1598
      %v1611 = vpack.c.bf16 %v1582, %v1580
      %v1628 = vunpack.c.l.b16 %v1398
      %v1629 = vunpack.c.l.b16 %v1399
      %v1630 = vunpack.c.l.b16 %v1400
      %v1631 = vunpack.c.l.b16 %v1401
      %v1632 = vunpack.c.l.b16 %v1402
      %v1633 = vunpack.c.l.b16 %v1403
      %v1634 = vunpack.c.l.b16 %v1404
      %v1635 = vunpack.c.l.b16 %v1405
      %v1636 = vunpack.c.l.b16 %v1406
      %v1637 = vunpack.c.l.b16 %v1407
      %v1638 = vunpack.c.l.b16 %v1408
      %v1639 = vunpack.c.l.b16 %v1409
      %v1640 = vunpack.c.l.b16 %v1410
      %v1641 = vunpack.c.l.b16 %v1411
      %v1642 = vunpack.c.l.b16 %v1412
      %v1643 = vunpack.c.l.b16 %v1413
      %v1644 = vpack.c.b16 %v1629, %v1628
      %v1645 = vpack.c.b16 %v1631, %v1630
      %v1646 = vpack.c.b16 %v1633, %v1632
      %v1647 = vpack.c.b16 %v1635, %v1634
      %v1648 = vpack.c.b16 %v1637, %v1636
      %v1649 = vpack.c.b16 %v1639, %v1638
      %v1650 = vpack.c.b16 %v1641, %v1640
      %v1651 = vpack.c.b16 %v1643, %v1642
      %1652 = vrot.lane.b32.xlu0 %v1644, 80
      %v1653 = vpop.permute.xlu0 %1652
      %1654 = vrot.lane.b32.xlu0 %v1645, 80
      %v1655 = vpop.permute.xlu0 %1654
      %1656 = vrot.lane.b32.xlu0 %v1646, 80
      %v1657 = vpop.permute.xlu0 %1656
      %1658 = vrot.lane.b32.xlu0 %v1647, 80
      %v1659 = vpop.permute.xlu0 %1658
      %1660 = vrot.lane.b32.xlu0 %v1648, 80
      %v1661 = vpop.permute.xlu0 %1660
      %1662 = vrot.lane.b32.xlu0 %v1649, 80
      %v1663 = vpop.permute.xlu0 %1662
      %1664 = vrot.lane.b32.xlu0 %v1650, 80
      %v1665 = vpop.permute.xlu0 %1664
      %1666 = vrot.lane.b32.xlu0 %v1651, 80
      %v1667 = vpop.permute.xlu0 %1666
      %1676 = vmatprep.subr.bf16.mxu0 0
      %1677 = vmatpush1.bf16.msra.mxu0 %v1653
      %1678 = vmatprep.subr.bf16.mxu0 0
      %1679 = vmatpush1.bf16.msra.mxu0 %v1655
      %1680 = vmatprep.subr.bf16.mxu0 0
      %1681 = vmatpush1.bf16.msra.mxu0 %v1657
      %1682 = vmatprep.subr.bf16.mxu0 0
      %1683 = vmatpush1.bf16.msra.mxu0 %v1659
      %1684 = vmatprep.subr.bf16.mxu0 0
      %1685 = vmatpush1.bf16.msra.mxu0 %v1661
      %1686 = vmatprep.subr.bf16.mxu0 0
      %1687 = vmatpush1.bf16.msra.mxu0 %v1663
      %1688 = vmatprep.subr.bf16.mxu0 0
      %1689 = vmatpush1.bf16.msra.mxu0 %v1665
      %1690 = vmatprep.subr.bf16.mxu0 0
      %1691 = vmatpush1.bf16.msra.mxu0 %v1667
      %1692 = vmatprep.subr.bf16.mxu0 0
      %1693 = vmatpush1.bf16.msra.mxu0 0
      %1694 = vmatprep.subr.bf16.mxu0 0
      %1695 = vmatpush1.bf16.msra.mxu0 0
      %1696 = vmatprep.subr.bf16.mxu0 0
      %1697 = vmatpush1.bf16.msra.mxu0 0
      %1698 = vmatprep.subr.bf16.mxu0 0
      %1699 = vmatpush1.bf16.msra.mxu0 0
      %1700 = vmatprep.subr.bf16.mxu0 0
      %1701 = vmatpush1.bf16.msra.mxu0 0
      %1702 = vmatprep.subr.bf16.mxu0 0
      %1703 = vmatpush1.bf16.msra.mxu0 0
      %1704 = vmatprep.subr.bf16.mxu0 0
      %1705 = vmatpush1.bf16.msra.mxu0 0
      %1706 = vmatprep.subr.bf16.mxu0 0
      %1707 = vmatpush1.bf16.msra.mxu0 0
      %1708 = vmatprep.mubr.bf16.mxu0 0
      %1709 = vmatmul.mubr.bf16.gmra.mrb[0].mxu0 %v1611
      %v1710 = vpop.f32.mrb[0].mxu0
      %v1711 = vadd.f32 0.0, %v1710
      %v1712 = vpop.f32.mrb[0].mxu0
      %v1713 = vpop.f32.mrb[0].mxu0
      %v1714 = vadd.f32 0.0, %v1713
      %v1715 = vpop.f32.mrb[0].mxu0
      %1716 = vdwg.mxu0
      %v1717 = vadd.f32 %v1609, %v1711
      %v1718 = vadd.f32 %v1610, %v1714
      %1719 = vst.msk [vmem:[%s1596] sm:$0xff] %vm463, %v1717
      %1720 = vst.msk [vmem:[%s1596 + $0x8] sm:$0xff] %vm463, %v1718
      %1721 = vst.msk [vmem:[%s1552] sm:$0xff] %vm581, %v1559
      %1722 = vst.msk [vmem:[%s1552 + $0x8] sm:$0xff] %vm581, %v1560
      // Predicated region
      $region37: #{mha_forward.21} parent=31 // pred_check
        %p1723 = pneg %p349
      $region38: #{mha_forward.21} parent=31 // pred_check_branch
        %1725 = sbr.rel (%p1723) target = $region40
      $region39: #{mha_forward.21} parent=31 // pred_region
        %v1726 = vld [vmem:[#allocation3] sm:$0xff]
        %v1727 = vld [vmem:[#allocation3 + $0x8] sm:$0xff]
        %v1728 = vrcp.pop %v1726
        %v1729 = vrcp.pop %v1727
        %v1730 = vld [vmem:[#allocation4] sm:$0xff]
        %v1731 = vld [vmem:[#allocation4 + $0x8] sm:$0xff]
        %1733 = vset.pattern.permute.xlu0 0
        %1734 = vperm.xlu0 %1733, %v1728
        %v1735 = vpop.permute.xlu0 %1734
        %1738 = vset.pattern.permute.xlu0 0
        %1739 = vperm.xlu0 %1738, %v1729
        %v1740 = vpop.permute.xlu0 %1739
        %v1742 = vmul.f32 %v1730, %v1735
        %v1743 = vmul.f32 %v1731, %v1740
        %v1744 = vpack.c.bf16 %v1743, %v1742
        %v1746 = vunpack.c.l.b16 %v1744
        %v1747 = vunpack.c.h.b16 %v1744
        %v1748 = vpack.c.b16 %v1746, %v1746
        %v1749 = vpack.c.b16 %v1747, %v1747
        %vm1752 = vcmask 125952
        %1753 = vst.msk [vmem:[%s333] sm:$0xf] %vm1752, %v1748
        %1754 = vst.msk [vmem:[%s333 + $0x4] sm:$0xf] %vm1752, %v1749
        %v1755 = vld [vmem:[%s897] sm:$0xff]
        %v1756 = vld [vmem:[%s897 + $0x8] sm:$0xff]
        %v1757 = vrcp.pop %v1755
        %v1758 = vrcp.pop %v1756
        %v1759 = vld [vmem:[%s910] sm:$0xff]
        %v1760 = vld [vmem:[%s910 + $0x8] sm:$0xff]
        %1762 = vset.pattern.permute.xlu0 0
        %1763 = vperm.xlu0 %1762, %v1757
        %v1764 = vpop.permute.xlu0 %1763
        %1767 = vset.pattern.permute.xlu0 0
        %1768 = vperm.xlu0 %1767, %v1758
        %v1769 = vpop.permute.xlu0 %1768
        %v1771 = vmul.f32 %v1759, %v1764
        %v1772 = vmul.f32 %v1760, %v1769
        %v1773 = vpack.c.bf16 %v1772, %v1771
        %v1775 = vunpack.c.l.b16 %v1773
        %v1776 = vunpack.c.h.b16 %v1773
        %v1777 = vpack.c.b16 %v1775, %v1775
        %v1778 = vpack.c.b16 %v1776, %v1776
        %1779 = vrot.lane.b32.xlu0 %v1777, 16
        %v1780 = vpop.permute.xlu0 %1779
        %1781 = vrot.lane.b32.xlu0 %v1778, 16
        %v1782 = vpop.permute.xlu0 %1781
        %vm1785 = vcmask 257152
        %1786 = vst.msk [vmem:[%s333] sm:$0xf] %vm1785, %v1780
        %1787 = vst.msk [vmem:[%s333 + $0x4] sm:$0xf] %vm1785, %v1782
        %v1788 = vld [vmem:[%s1240] sm:$0xff]
        %v1789 = vld [vmem:[%s1240 + $0x8] sm:$0xff]
        %v1790 = vrcp.pop %v1788
        %v1791 = vrcp.pop %v1789
        %v1792 = vld [vmem:[%s1253] sm:$0xff]
        %v1793 = vld [vmem:[%s1253 + $0x8] sm:$0xff]
        %1795 = vset.pattern.permute.xlu0 0
        %1796 = vperm.xlu0 %1795, %v1790
        %v1797 = vpop.permute.xlu0 %1796
        %1800 = vset.pattern.permute.xlu0 0
        %1801 = vperm.xlu0 %1800, %v1791
        %v1802 = vpop.permute.xlu0 %1801
        %v1804 = vmul.f32 %v1792, %v1797
        %v1805 = vmul.f32 %v1793, %v1802
        %v1806 = vpack.c.bf16 %v1805, %v1804
        %v1808 = vunpack.c.l.b16 %v1806
        %v1809 = vunpack.c.h.b16 %v1806
        %v1810 = vpack.c.b16 %v1808, %v1808
        %v1811 = vpack.c.b16 %v1809, %v1809
        %1812 = vrot.lane.b32.xlu0 %v1810, 32
        %v1813 = vpop.permute.xlu0 %1812
        %1814 = vrot.lane.b32.xlu0 %v1811, 32
        %v1815 = vpop.permute.xlu0 %1814
        %vm1818 = vcmask 388352
        %1819 = vst.msk [vmem:[%s333] sm:$0xf] %vm1818, %v1813
        %1820 = vst.msk [vmem:[%s333 + $0x4] sm:$0xf] %vm1818, %v1815
        %v1821 = vld [vmem:[%s1583] sm:$0xff]
        %v1822 = vld [vmem:[%s1583 + $0x8] sm:$0xff]
        %v1823 = vrcp.pop %v1821
        %v1824 = vrcp.pop %v1822
        %v1825 = vld [vmem:[%s1596] sm:$0xff]
        %v1826 = vld [vmem:[%s1596 + $0x8] sm:$0xff]
        %1828 = vset.pattern.permute.xlu0 0
        %1829 = vperm.xlu0 %1828, %v1823
        %v1830 = vpop.permute.xlu0 %1829
        %1833 = vset.pattern.permute.xlu0 0
        %1834 = vperm.xlu0 %1833, %v1824
        %v1835 = vpop.permute.xlu0 %1834
        %v1837 = vmul.f32 %v1825, %v1830
        %v1838 = vmul.f32 %v1826, %v1835
        %v1839 = vpack.c.bf16 %v1838, %v1837
        %v1841 = vunpack.c.l.b16 %v1839
        %v1842 = vunpack.c.h.b16 %v1839
        %v1843 = vpack.c.b16 %v1841, %v1841
        %v1844 = vpack.c.b16 %v1842, %v1842
        %1845 = vrot.lane.b32.xlu0 %v1843, 48
        %v1846 = vpop.permute.xlu0 %1845
        %1847 = vrot.lane.b32.xlu0 %v1844, 48
        %v1848 = vpop.permute.xlu0 %1847
        %vm1851 = vcmask 519552
        %1852 = vst.msk [vmem:[%s333] sm:$0xf] %vm1851, %v1846
        %1853 = vst.msk [vmem:[%s333 + $0x4] sm:$0xf] %vm1851, %v1848
      $region40: #{mha_forward.21} parent=31 // pred_fallthru
        _
      %s1854 = smul.u32 2, %s22
      %p1855 = scmp.lt.s32.totalorder %s21, 1
      %s1856 = scalar_select %p1855, %s21, 1
      %p1857 = scmp.lt.s32.totalorder %s1854, 1
      %s1858 = scalar_select %p1857, %s1854, 1
      %s1859 = smul.addr %s1856, 2
      %s1860 = sadd.s32 %s1858, %s1859
      %s1861 = smul.addr %s1860, 4
      %s1862 = scalar_lea.vmem %s3, %s1861
      %s1863 = smul.u32 2, %s22
      %p1864 = scmp.lt.s32.totalorder %s21, 1
      %s1865 = scalar_select %p1864, %s21, 1
      %p1866 = scmp.lt.s32.totalorder %s1863, 1
      %s1867 = scalar_select %p1866, %s1863, 1
      %p1868 = scmp.lt.s32.totalorder %s23, 0
      %s1869 = scalar_select %p1868, %s23, 0
      %s1870 = sadd.s32 %s1869, %s1867
      %s1871 = smul.addr %s1865, 8
      %s1872 = sadd.s32 %s1870, %s1871
      %s1873 = smul.addr %s1872, 8
      %s1874 = scalar_lea.vmem %s4, %s1873
      // Predicated region
      $region41: #{mha_forward.21} parent=31 // pred_check
        %p1875 = pneg %p139
      $region42: #{mha_forward.21} parent=31 // pred_check_branch
        %1877 = sbr.rel (%p1875) target = $region44
      $region43: #{mha_forward.21} parent=31 // pred_region
        %s1878 = smul.u32 2, %s22
      $region44: #{mha_forward.21} parent=31 // pred_fallthru
        _
      // Predicated region
      $region45: #{mha_forward.21} parent=31 // pred_check
        %p1879 = pneg %p169
      $region46: #{mha_forward.21} parent=31 // pred_check_branch
        %1881 = sbr.rel (%p1879) target = $region48
      $region47: #{mha_forward.21} parent=31 // pred_region
        %s1882 = smul.u32 2, %s22
      $region48: #{mha_forward.21} parent=31 // pred_fallthru
        _
    $region32: #{mha_forward.21} parent=5 // pred_fallthru
      _
    %p1883 = scmp.le.s32.totalorder 2, %s11
    // Predicated region
    $region49: #{mha_forward.21} parent=5 // pred_check
      %p1884 = pneg %p1883
    $region50: #{mha_forward.21} parent=5 // pred_check_branch
      %1886 = sbr.rel (%p1884) target = $region52
    $region51: #{mha_forward.21} parent=5 // pred_region
      %s1887 = ssub.s32 %s11, 2
      // Predicated region
      $region53: #{mha_forward.21} parent=51 // pred_check
        %p1888 = pneg %p145
      $region54: #{mha_forward.21} parent=51 // pred_check_branch
        %1890 = sbr.rel (%p1888) target = $region56
      $region55: #{mha_forward.21} parent=51 // pred_region
        %s1891 = smul.u32 2, %s25
        %p1892 = scmp.lt.s32.totalorder %s24, 1
        %s1893 = scalar_select %p1892, %s24, 1
        %p1894 = scmp.lt.s32.totalorder %s1891, 1
        %s1895 = scalar_select %p1894, %s1891, 1
        %s1896 = smul.addr %s1893, 2
        %s1897 = sadd.s32 %s1895, %s1896
        %s1898 = smul.addr %s1897, 4
        %s1899 = scalar_lea.vmem %s3, %s1898
      $region56: #{mha_forward.21} parent=51 // pred_fallthru
        _
      // Predicated region
      $region57: #{mha_forward.21} parent=51 // pred_check
        %p1900 = pneg %p175
      $region58: #{mha_forward.21} parent=51 // pred_check_branch
        %1902 = sbr.rel (%p1900) target = $region60
      $region59: #{mha_forward.21} parent=51 // pred_region
        %s1903 = smul.u32 2, %s25
        %p1904 = scmp.lt.s32.totalorder %s24, 1
        %s1905 = scalar_select %p1904, %s24, 1
        %p1906 = scmp.lt.s32.totalorder %s1903, 1
        %s1907 = scalar_select %p1906, %s1903, 1
        %p1908 = scmp.lt.s32.totalorder %s26, 0
        %s1909 = scalar_select %p1908, %s26, 0
        %s1910 = sadd.s32 %s1909, %s1907
        %s1911 = smul.addr %s1905, 8
        %s1912 = sadd.s32 %s1910, %s1911
        %s1913 = smul.addr %s1912, 8
        %s1914 = scalar_lea.vmem %s4, %s1913
      $region60: #{mha_forward.21} parent=51 // pred_fallthru
        _
    $region52: #{mha_forward.21} parent=5 // pred_fallthru
      _
  $region6: #{mha_forward.21} parent=0 // loop_footer
    %s15 = sadd.s32 1, %s11
  $region7: #{mha_forward.21} parent=0 // loop_footer_branch
    %10 = sbr.rel target = $region3
  $region8: #{mha_forward.21} parent=0 // loop_exit
    _

</llo_original>
